<compile_context>
chip_gen: v6e
topology: v6e:2x2x1
jax: 0.10.0
libtpu: 0.0.40
codegen_flags: <defaults>
</compile_context>

<pallas_src>
import functools

import numpy as np
import jax
import jax.numpy as jnp
from jax.experimental import pallas as pl
from jax.experimental.pallas import tpu as pltpu


MXU_DTYPE = jnp.bfloat16          # matmul operand dtype (f32 accumulation kept)
_INV_SQRT2 = 0.7071067811865476


def _default_vmem_limit():
    """~5/8 of physical VMEM (80 MiB on v5e/v6e, 40 MiB on v7x), capped at 96 MiB."""
    try:
        cap = int(pltpu.get_tpu_info().vmem_capacity_bytes)
    except Exception:
        cap = 64 * 1024 * 1024
    return max(32 * 1024 * 1024, min(cap * 5 // 8, 96 * 1024 * 1024))


VMEM_LIMIT = _default_vmem_limit()
MLP_VMEM_BUDGET = VMEM_LIMIT * 3 // 4      # leave headroom for compiler scratch


def _const_block_spec(shape):
    """BlockSpec for an operand whose block never changes across the grid.

    Single-buffered (pl.Buffered(1)) so constant weights/biases/tables do not get a
    second VMEM copy; silently falls back if pipeline_mode is unavailable.
    """
    ndim = len(shape)

    def idx(*_):
        return (0,) * ndim

    try:
        return pl.BlockSpec(shape, idx, pipeline_mode=pl.Buffered(1))
    except Exception:
        return pl.BlockSpec(shape, idx)


# ----------------------------- Pallas kernels ------------------------------


def _swin_attn_kernel(xw_ref, bias_ref, mask_ref, g_ref, b_ref,
                      wqkv_ref, bqkv_ref, wp_ref, bp_ref, o_ref, *,
                      num_heads, win_tile, win_n, eps):
    """Fused LN1 + window multi-head attention + proj + residual.

    Block = WT windows (of one batch element), flattened to (M = WT*N, C) rows.
    """
    H, WT, N = num_heads, win_tile, win_n
    x = xw_ref[0].reshape(WT * N, -1).astype(jnp.float32)          # (M, C)
    M, C = x.shape
    hd = C // H

    # --- LayerNorm (norm1), f32 stats ---
    mean = jnp.mean(x, axis=-1, keepdims=True)
    var = jnp.mean((x - mean) ** 2, axis=-1, keepdims=True)
    xn = (x - mean) * jax.lax.rsqrt(var + eps) * g_ref[...] + b_ref[...]

    # --- Fused QKV: one lane-dense (M, C) @ (C, 3C) MXU matmul (scale pre-folded). ---
    qkv = jnp.dot(xn.astype(MXU_DTYPE), wqkv_ref[...],
                  preferred_element_type=jnp.float32) + bqkv_ref[...]      # (M, 3C)

    # Split into per-(head, window) batches: (M, 3C) -> (3H, M, hd).
    qkv = jnp.swapaxes(qkv.reshape(M, 3 * H, hd), 0, 1)                    # (3H, M, hd)
    qb = qkv[:H].reshape(H * WT, N, hd).astype(MXU_DTYPE)
    kb = qkv[H:2 * H].reshape(H * WT, N, hd).astype(MXU_DTYPE)
    vb = qkv[2 * H:].reshape(H * WT, N, hd).astype(MXU_DTYPE)

    # --- Scores + rel-pos bias + shift mask, f32 softmax. ---
    s = jnp.einsum('bqd,bkd->bqk', qb, kb,
                   preferred_element_type=jnp.float32)                      # (H*WT, N, N)
    s = (s.reshape(H, WT, N, N)
         + bias_ref[...][:, None]                                           # (H, 1, N, N)
         + mask_ref[...][None]).reshape(H * WT, N, N)                       # (1, WT, N, N)
    s = s - jnp.max(s, axis=-1, keepdims=True)
    p = jnp.exp(s)
    p = p * pl.reciprocal(jnp.sum(p, axis=-1, keepdims=True), approx=True)

    ctx = jnp.einsum('bqk,bkd->bqd', p.astype(MXU_DTYPE), vb,
                     preferred_element_type=jnp.float32)                    # (H*WT, N, hd)

    # Re-concatenate heads: (H, M, hd) -> (M, C); one (M, C) @ (C, C) projection.
    ctx = jnp.swapaxes(ctx.reshape(H, M, hd), 0, 1).reshape(M, C)
    y = jnp.dot(ctx.astype(MXU_DTYPE), wp_ref[...],
                preferred_element_type=jnp.float32) + bp_ref[...]

    # Fused residual; one contiguous (WT, N, C) store per block.
    o_ref[0] = (x + y).reshape(WT, N, C).astype(o_ref.dtype)


def _ln_mlp_kernel(x_ref, g_ref, b_ref, w1_ref, b1_ref, w2_ref, b2_ref, o_ref, *, eps):
    """Fused LN2 + MLP (fc1 -> exact GELU -> fc2) + residual on a (tm, C) row tile."""
    x = x_ref[...].astype(jnp.float32)                              # (tm, C)
    mean = jnp.mean(x, axis=-1, keepdims=True)
    var = jnp.mean((x - mean) ** 2, axis=-1, keepdims=True)
    xn = (x - mean) * jax.lax.rsqrt(var + eps) * g_ref[...] + b_ref[...]

    h = jnp.dot(xn.astype(MXU_DTYPE), w1_ref[...],
                preferred_element_type=jnp.float32) + b1_ref[...]
    h = 0.5 * h * (1.0 + jax.lax.erf(h * _INV_SQRT2))               # exact GELU (torch default)
    y = jnp.dot(h.astype(MXU_DTYPE), w2_ref[...],
                preferred_element_type=jnp.float32) + b2_ref[...]

    o_ref[...] = (x + y).astype(o_ref.dtype)                        # fused residual


# ----------------------------- pallas_call wrappers -------------------------


def _pick_window_tile(nW, N):
    """Largest divisor of nW keeping <=512 rows per step, preferring >=2 window tiles."""
    divisors = [d for d in range(1, nW + 1) if nW % d == 0]
    fitting = [d for d in divisors if d * N <= 512]
    if not fitting:
        return 1
    multi = [d for d in fitting if nW // d >= 2]
    return max(multi) if multi else max(fitting)


def swin_window_attention(xw, bias, mask, ln_g, ln_b, wqkv, bqkv, wproj, bproj,
                          *, num_heads, win_tile):
    B, nW, N, C = xw.shape
    WT = win_tile
    kernel = functools.partial(_swin_attn_kernel, num_heads=num_heads,
                               win_tile=WT, win_n=N, eps=1e-5)
    return pl.pallas_call(
        kernel,
        out_shape=jax.ShapeDtypeStruct((B, nW, N, C), xw.dtype),
        grid=(B, nW // WT),
        in_specs=[
            pl.BlockSpec((1, WT, N, C), lambda b, w: (b, w, 0, 0)),   # x windows
            _const_block_spec((num_heads, N, N)),                      # rel-pos bias (resident)
            pl.BlockSpec((WT, N, N), lambda b, w: (w, 0, 0)),          # shift mask (per window)
            _const_block_spec((1, C)),                                 # ln1 gamma
            _const_block_spec((1, C)),                                 # ln1 beta
            _const_block_spec((C, 3 * C)),                             # fused qkv weight (q scaled)
            _const_block_spec((1, 3 * C)),                             # fused qkv bias (q scaled)
            _const_block_spec((C, C)),                                 # proj weight
            _const_block_spec((1, C)),                                 # proj bias
        ],
        out_specs=pl.BlockSpec((1, WT, N, C), lambda b, w: (b, w, 0, 0)),
        compiler_params=pltpu.CompilerParams(
            dimension_semantics=("parallel", "parallel"),
            vmem_limit_bytes=VMEM_LIMIT),
    )(xw, bias, mask, ln_g, ln_b, wqkv, bqkv, wproj, bproj)


def _pick_block_rows(T, C, hidden, budget_bytes):
    """Largest row tile whose estimated VMEM footprint fits the budget (multiple of 8)."""
    per_row = (2 * 2 * C + (3 * C + hidden)) * 4           # dbl-buffered io tiles + f32 intermediates
    fixed = (C * hidden + hidden * C) * 2 + (hidden + 3 * C) * 4   # bf16 weights (single buffer) + biases
    tm = 8
    for cand in (512, 256, 128, 64, 32, 16, 8):
        if fixed + cand * per_row <= budget_bytes:
            tm = cand
            break
    t_pad8 = ((T + 7) // 8) * 8
    return min(tm, t_pad8)


def ln_mlp(x2d, gamma, beta, w1, b1, w2, b2, *, eps=1e-5):
    T, C = x2d.shape
    hidden = w1.shape[1]
    tm = _pick_block_rows(T, C, hidden, MLP_VMEM_BUDGET)
    T_pad = ((T + tm - 1) // tm) * tm
    assert tm % 8 == 0 and T_pad % tm == 0
    x_in = jnp.pad(x2d, ((0, T_pad - T), (0, 0))) if T_pad != T else x2d

    out = pl.pallas_call(
        functools.partial(_ln_mlp_kernel, eps=eps),
        out_shape=jax.ShapeDtypeStruct((T_pad, C), x2d.dtype),
        grid=(T_pad // tm,),
        in_specs=[
            pl.BlockSpec((tm, C), lambda i: (i, 0)),
            _const_block_spec((1, C)),
            _const_block_spec((1, C)),
            _const_block_spec((C, hidden)),
            _const_block_spec((1, hidden)),
            _const_block_spec((hidden, C)),
            _const_block_spec((1, C)),
        ],
        out_specs=pl.BlockSpec((tm, C), lambda i: (i, 0)),
        compiler_params=pltpu.CompilerParams(
            dimension_semantics=("parallel",),
            vmem_limit_bytes=VMEM_LIMIT),
    )(x_in, gamma, beta, w1, b1, w2, b2)
    return out[:T] if T_pad != T else out


# ------------------------------- JAX glue -----------------------------------
# TODO(synk): fold roll / window_partition / window_reverse into the attention
# BlockSpec index_maps (grid over window rows/cols) to remove the remaining XLA
# data-movement passes for shifted blocks.


def window_partition(x, ws):
    B, H, W, C = x.shape
    x = x.reshape(B, H // ws, ws, W // ws, ws, C)
    x = jnp.transpose(x, (0, 1, 3, 2, 4, 5))
    return x.reshape(-1, ws, ws, C)


def window_reverse(windows, ws, H, W, C):
    x = windows.reshape(-1, H // ws, W // ws, ws, ws, C)
    x = jnp.transpose(x, (0, 1, 3, 2, 4, 5))
    return x.reshape(-1, H, W, C)


def make_rel_pos_index(ws):
    coords = np.stack(np.meshgrid(np.arange(ws), np.arange(ws), indexing='ij'))
    coords_flat = coords.reshape(2, -1)
    rel = coords_flat[:, :, None] - coords_flat[:, None, :]
    rel = rel.transpose(1, 2, 0)
    rel[:, :, 0] += ws - 1
    rel[:, :, 1] += ws - 1
    rel[:, :, 0] *= 2 * ws - 1
    return rel.sum(-1).astype(np.int32)            # (N, N)


def make_attn_mask(H, W, ws, shift):
    img_mask = np.zeros((1, H, W, 1), dtype=np.float32)
    slices = (slice(0, -ws), slice(-ws, -shift), slice(-shift, None))
    cnt = 0
    for h in slices:
        for w in slices:
            img_mask[:, h, w, :] = cnt
            cnt += 1
    mw = img_mask.reshape(1, H // ws, ws, W // ws, ws, 1)
    mw = mw.transpose(0, 1, 3, 2, 4, 5).reshape(-1, ws * ws)
    am = mw[:, None, :] - mw[:, :, None]
    am = np.where(am != 0, -100.0, 0.0).astype(np.float32)
    return jnp.asarray(am)                          # (nW, N, N)


def swin_block(x, p, Hres, Wres, ws, shift, num_heads, rel_index, attn_mask):
    B, L, C = x.shape
    assert L == Hres * Wres
    N = ws * ws
    nW = (Hres // ws) * (Wres // ws)
    hd = C // num_heads
    scale = hd ** (-0.5)

    # ---- one-time (traced once under jit) repack of attention params ----
    scale_vec = jnp.concatenate([jnp.full((C,), scale, jnp.float32),
                                 jnp.ones((2 * C,), jnp.float32)])
    wqkv = (p["wqkv"] * scale_vec[None, :]).astype(MXU_DTYPE)            # (C, 3C), q scaled
    bqkv = (p["bqkv"] * scale_vec).reshape(1, 3 * C)                     # f32
    wproj = p["wproj"].astype(MXU_DTYPE)                                 # (C, C)
    bproj = p["bproj"].reshape(1, C)

    bias = p["rel_table"][rel_index.reshape(-1)].reshape(N, N, num_heads)
    bias = jnp.transpose(bias, (2, 0, 1)).astype(jnp.float32)            # (H, N, N)
    mask = attn_mask if attn_mask is not None else jnp.zeros((nW, N, N), jnp.float32)

    # ---- LN1 + window attention + residual (single fused Pallas call) ----
    x_img = x.reshape(B, Hres, Wres, C)
    if shift > 0:
        x_img = jnp.roll(x_img, shift=(-shift, -shift), axis=(1, 2))
    xw = window_partition(x_img, ws).reshape(B, nW, N, C)

    WT = _pick_window_tile(nW, N)
    attn_out = swin_window_attention(
        xw, bias, mask,
        p["ln1_g"].reshape(1, C), p["ln1_b"].reshape(1, C),
        wqkv, bqkv, wproj, bproj,
        num_heads=num_heads, win_tile=WT)

    x_img = window_reverse(attn_out.reshape(B * nW, ws, ws, C), ws, Hres, Wres, C)
    if shift > 0:
        x_img = jnp.roll(x_img, shift=(shift, shift), axis=(1, 2))
    x = x_img.reshape(B, L, C)

    # ---- LN2 + MLP + residual (single fused Pallas call, row-tiled) ----
    y = ln_mlp(x.reshape(B * L, C),
               p["ln2_g"].reshape(1, C), p["ln2_b"].reshape(1, C),
               p["w1"].astype(MXU_DTYPE), p["b1"].reshape(1, -1),
               p["w2"].astype(MXU_DTYPE), p["b2"].reshape(1, C))
    return y.reshape(B, L, C)


def basic_layer(x, block_params, input_resolution, num_heads, window_size):
    Hres, Wres = input_resolution
    ws = window_size
    shift_base = window_size // 2
    if min(input_resolution) <= window_size:      # mirror the torch block's adjustment
        ws = min(input_resolution)
        shift_base = 0
    rel_index = jnp.asarray(make_rel_pos_index(ws))
    attn_mask = make_attn_mask(Hres, Wres, ws, shift_base) if shift_base > 0 else None

    for i, p in enumerate(block_params):
        shift = 0 if i % 2 == 0 else shift_base
        mask = attn_mask if shift > 0 else None
        x = swin_block(x, p, Hres, Wres, ws, shift, num_heads, rel_index, mask)
    # downsample=None -> return (x, x) like the torch module
    return x, x


def init_block_params(key, dim, num_heads, window_size, mlp_ratio):
    hidden = int(dim * mlp_ratio)
    ks = jax.random.split(key, 6)
    s = 0.02
    return {
        "ln1_g": jnp.ones((dim,), jnp.float32),
        "ln1_b": jnp.zeros((dim,), jnp.float32),
        "wqkv": s * jax.random.normal(ks[0], (dim, 3 * dim), jnp.float32),
        "bqkv": jnp.zeros((3 * dim,), jnp.float32),
        "wproj": s * jax.random.normal(ks[1], (dim, dim), jnp.float32),
        "bproj": jnp.zeros((dim,), jnp.float32),
        "rel_table": s * jax.random.normal(
            ks[2], ((2 * window_size - 1) ** 2, num_heads), jnp.float32),
        "ln2_g": jnp.ones((dim,), jnp.float32),
        "ln2_b": jnp.zeros((dim,), jnp.float32),
        "w1": s * jax.random.normal(ks[3], (dim, hidden), jnp.float32),
        "b1": jnp.zeros((hidden,), jnp.float32),
        "w2": s * jax.random.normal(ks[4], (hidden, dim), jnp.float32),
        "b2": jnp.zeros((dim,), jnp.float32),
    }


if __name__ == "__main__":
    dim = 32
    input_resolution = (8, 8)
    depth = 2
    num_heads = 4
    window_size = 4
    mlp_ratio = 4.0
    B = 2
    Hres, Wres = input_resolution
    L = Hres * Wres

    # effective window size used by the blocks (matches torch's adjustment)
    ws_eff = window_size if min(input_resolution) > window_size else min(input_resolution)

    key = jax.random.PRNGKey(0)
    kx, kp = jax.random.split(key)
    x = jax.random.normal(kx, (B, L, dim), dtype=jnp.float32)

    block_keys = jax.random.split(kp, depth)
    block_params = [init_block_params(block_keys[i], dim, num_heads, ws_eff, mlp_ratio)
                    for i in range(depth)]

    fwd = jax.jit(functools.partial(basic_layer,
                                    input_resolution=input_resolution,
                                    num_heads=num_heads,
                                    window_size=window_size))
    out, res = fwd(x, block_params)
    jax.block_until_ready(out)
    jax.block_until_ready(res)
    assert out.shape == (B, L, dim) and res.shape == (B, L, dim)
    assert bool(jnp.all(jnp.isfinite(out)))
    print("KERNEL_OK")
</pallas_src>

<mosaic_0001>
module attributes {stable_mosaic.version = 11 : i64} {
  func.func @_swin_attn_kernel(%arg0: i32, %arg1: i32, %arg2: memref<1x2x16x32xf32, #tpu.memory_space<vmem>>, %arg3: memref<4x16x16xf32, #tpu.memory_space<vmem>>, %arg4: memref<2x16x16xf32, #tpu.memory_space<vmem>>, %arg5: memref<1x32xf32, #tpu.memory_space<vmem>>, %arg6: memref<1x32xf32, #tpu.memory_space<vmem>>, %arg7: memref<32x96xbf16, #tpu.memory_space<vmem>>, %arg8: memref<1x96xf32, #tpu.memory_space<vmem>>, %arg9: memref<32x32xbf16, #tpu.memory_space<vmem>>, %arg10: memref<1x32xf32, #tpu.memory_space<vmem>>, %arg11: memref<1x2x16x32xf32, #tpu.memory_space<vmem>>) attributes {dimension_semantics = [#tpu.dimension_semantics<parallel>, #tpu.dimension_semantics<parallel>], iteration_bounds = array<i64: 2, 2>, scalar_prefetch = 0 : i64, scratch_operands = 0 : i64, tpu.core_type = #tpu.core_type<tc>, window_params = [{transform_indices = @transform_0, window_bounds = array<i64: 1, 2, 16, 32>}, {pipeline_mode = #tpu.pipeline_mode<synchronous>, transform_indices = @transform_1, window_bounds = array<i64: 4, 16, 16>}, {transform_indices = @transform_2, window_bounds = array<i64: 2, 16, 16>}, {pipeline_mode = #tpu.pipeline_mode<synchronous>, transform_indices = @transform_3, window_bounds = array<i64: 1, 32>}, {pipeline_mode = #tpu.pipeline_mode<synchronous>, transform_indices = @transform_4, window_bounds = array<i64: 1, 32>}, {pipeline_mode = #tpu.pipeline_mode<synchronous>, transform_indices = @transform_5, window_bounds = array<i64: 32, 96>}, {pipeline_mode = #tpu.pipeline_mode<synchronous>, transform_indices = @transform_6, window_bounds = array<i64: 1, 96>}, {pipeline_mode = #tpu.pipeline_mode<synchronous>, transform_indices = @transform_7, window_bounds = array<i64: 32, 32>}, {pipeline_mode = #tpu.pipeline_mode<synchronous>, transform_indices = @transform_8, window_bounds = array<i64: 1, 32>}, {transform_indices = @transform_9, window_bounds = array<i64: 1, 2, 16, 32>}]} {
    %c0 = arith.constant 0 : index
    %c0_0 = arith.constant 0 : index
    %c0_1 = arith.constant 0 : index
    %c0_2 = arith.constant 0 : index
    %0 = vector.load %arg2[%c0, %c0_0, %c0_1, %c0_2] : memref<1x2x16x32xf32, #tpu.memory_space<vmem>>, vector<1x2x16x32xf32>
    %1 = vector.shape_cast %0 : vector<1x2x16x32xf32> to vector<2x16x32xf32>
    %2 = vector.shape_cast %1 : vector<2x16x32xf32> to vector<32x32xf32>
    %cst = arith.constant dense<0.000000e+00> : vector<32xf32>
    %3 = vector.multi_reduction <add>, %2, %cst [1] : vector<32x32xf32> to vector<32xf32>
    %4 = vector.shape_cast %3 : vector<32xf32> to vector<32x1xf32>
    %cst_3 = arith.constant 3.200000e+01 : f32
    %5 = vector.broadcast %cst_3 : f32 to vector<32x1xf32>
    %6 = arith.divf %4, %5 : vector<32x1xf32>
    %7 = vector.broadcast %6 : vector<32x1xf32> to vector<32x32xf32>
    %8 = arith.subf %2, %7 : vector<32x32xf32>
    %9 = arith.mulf %8, %8 : vector<32x32xf32>
    %cst_4 = arith.constant dense<0.000000e+00> : vector<32xf32>
    %10 = vector.multi_reduction <add>, %9, %cst_4 [1] : vector<32x32xf32> to vector<32xf32>
    %11 = vector.shape_cast %10 : vector<32xf32> to vector<32x1xf32>
    %cst_5 = arith.constant 3.200000e+01 : f32
    %12 = vector.broadcast %cst_5 : f32 to vector<32x1xf32>
    %13 = arith.divf %11, %12 : vector<32x1xf32>
    %14 = vector.broadcast %6 : vector<32x1xf32> to vector<32x32xf32>
    %15 = arith.subf %2, %14 : vector<32x32xf32>
    %cst_6 = arith.constant 9.99999974E-6 : f32
    %16 = vector.broadcast %cst_6 : f32 to vector<32x1xf32>
    %17 = arith.addf %13, %16 : vector<32x1xf32>
    %18 = math.rsqrt %17 : vector<32x1xf32>
    %19 = vector.broadcast %18 : vector<32x1xf32> to vector<32x32xf32>
    %20 = arith.mulf %15, %19 : vector<32x32xf32>
    %c0_7 = arith.constant 0 : index
    %c0_8 = arith.constant 0 : index
    %21 = vector.load %arg5[%c0_7, %c0_8] : memref<1x32xf32, #tpu.memory_space<vmem>>, vector<1x32xf32>
    %22 = vector.broadcast %21 : vector<1x32xf32> to vector<32x32xf32>
    %23 = arith.mulf %20, %22 : vector<32x32xf32>
    %c0_9 = arith.constant 0 : index
    %c0_10 = arith.constant 0 : index
    %24 = vector.load %arg6[%c0_9, %c0_10] : memref<1x32xf32, #tpu.memory_space<vmem>>, vector<1x32xf32>
    %25 = vector.broadcast %24 : vector<1x32xf32> to vector<32x32xf32>
    %26 = arith.addf %23, %25 : vector<32x32xf32>
    %27 = arith.truncf %26 : vector<32x32xf32> to vector<32x32xbf16>
    %c0_11 = arith.constant 0 : index
    %c0_12 = arith.constant 0 : index
    %28 = vector.load %arg7[%c0_11, %c0_12] : memref<32x96xbf16, #tpu.memory_space<vmem>>, vector<32x96xbf16>
    %cst_13 = arith.constant dense<0.000000e+00> : vector<32x96xf32>
    %29 = tpu.matmul %27, %28, %cst_13 {dimension_numbers = #tpu.dot_dimension_numbers<[1], [0], [0], [1], [0, 0, 1, 1], [], []>} : vector<32x32xbf16>, vector<32x96xbf16>, vector<32x96xf32> -> vector<32x96xf32>
    %c0_14 = arith.constant 0 : index
    %c0_15 = arith.constant 0 : index
    %30 = vector.load %arg8[%c0_14, %c0_15] : memref<1x96xf32, #tpu.memory_space<vmem>>, vector<1x96xf32>
    %31 = vector.broadcast %30 : vector<1x96xf32> to vector<32x96xf32>
    %32 = arith.addf %29, %31 : vector<32x96xf32>
    %33 = vector.shape_cast %32 : vector<32x96xf32> to vector<32x12x8xf32>
    %34 = tpu.transpose %33, [1, 0, 2] : vector<32x12x8xf32> -> vector<12x32x8xf32>
    %35 = vector.extract_strided_slice %34 {offsets = [0, 0, 0], sizes = [4, 32, 8], strides = [1, 1, 1]} : vector<12x32x8xf32> to vector<4x32x8xf32>
    %36 = vector.shape_cast %35 : vector<4x32x8xf32> to vector<8x16x8xf32>
    %37 = arith.truncf %36 : vector<8x16x8xf32> to vector<8x16x8xbf16>
    %38 = vector.extract_strided_slice %34 {offsets = [4, 0, 0], sizes = [4, 32, 8], strides = [1, 1, 1]} : vector<12x32x8xf32> to vector<4x32x8xf32>
    %39 = vector.shape_cast %38 : vector<4x32x8xf32> to vector<8x16x8xf32>
    %40 = arith.truncf %39 : vector<8x16x8xf32> to vector<8x16x8xbf16>
    %41 = vector.extract_strided_slice %34 {offsets = [8, 0, 0], sizes = [4, 32, 8], strides = [1, 1, 1]} : vector<12x32x8xf32> to vector<4x32x8xf32>
    %42 = vector.shape_cast %41 : vector<4x32x8xf32> to vector<8x16x8xf32>
    %43 = arith.truncf %42 : vector<8x16x8xf32> to vector<8x16x8xbf16>
    "tpu.trace_start"() <{level = 10 : i32, message = "bqd,bkd->bqk"}> : () -> ()
    %cst_16 = arith.constant dense<0.000000e+00> : vector<8x16x16xf32>
    %44 = tpu.matmul %37, %40, %cst_16 {dimension_numbers = #tpu.dot_dimension_numbers<[2], [2], [1], [1], [0, 0, 0, 1, 1, 1], [0], [0]>} : vector<8x16x8xbf16>, vector<8x16x8xbf16>, vector<8x16x16xf32> -> vector<8x16x16xf32>
    "tpu.trace_stop"() : () -> ()
    %45 = vector.shape_cast %44 : vector<8x16x16xf32> to vector<4x2x16x16xf32>
    %c0_17 = arith.constant 0 : index
    %c0_18 = arith.constant 0 : index
    %c0_19 = arith.constant 0 : index
    %46 = vector.load %arg3[%c0_17, %c0_18, %c0_19] : memref<4x16x16xf32, #tpu.memory_space<vmem>>, vector<4x16x16xf32>
    %47 = vector.shape_cast %46 : vector<4x16x16xf32> to vector<4x1x16x16xf32>
    %48 = vector.broadcast %47 : vector<4x1x16x16xf32> to vector<4x2x16x16xf32>
    %49 = arith.addf %45, %48 : vector<4x2x16x16xf32>
    %c0_20 = arith.constant 0 : index
    %c0_21 = arith.constant 0 : index
    %c0_22 = arith.constant 0 : index
    %50 = vector.load %arg4[%c0_20, %c0_21, %c0_22] : memref<2x16x16xf32, #tpu.memory_space<vmem>>, vector<2x16x16xf32>
    %51 = vector.shape_cast %50 : vector<2x16x16xf32> to vector<1x2x16x16xf32>
    %52 = vector.broadcast %51 : vector<1x2x16x16xf32> to vector<4x2x16x16xf32>
    %53 = arith.addf %49, %52 : vector<4x2x16x16xf32>
    %54 = vector.shape_cast %53 : vector<4x2x16x16xf32> to vector<8x16x16xf32>
    %cst_23 = arith.constant dense<0xFF800000> : vector<8x16xf32>
    %55 = vector.multi_reduction <maximumf>, %54, %cst_23 [2] : vector<8x16x16xf32> to vector<8x16xf32>
    %56 = vector.shape_cast %55 : vector<8x16xf32> to vector<8x16x1xf32>
    %57 = vector.broadcast %56 : vector<8x16x1xf32> to vector<8x16x16xf32>
    %58 = arith.subf %54, %57 : vector<8x16x16xf32>
    %59 = math.exp %58 : vector<8x16x16xf32>
    %cst_24 = arith.constant dense<0.000000e+00> : vector<8x16xf32>
    %60 = vector.multi_reduction <add>, %59, %cst_24 [2] : vector<8x16x16xf32> to vector<8x16xf32>
    %61 = vector.shape_cast %60 : vector<8x16xf32> to vector<8x16x1xf32>
    %62 = tpu.reciprocal %61 {approx = true} : vector<8x16x1xf32> -> vector<8x16x1xf32>
    %63 = vector.broadcast %62 : vector<8x16x1xf32> to vector<8x16x16xf32>
    %64 = arith.mulf %59, %63 : vector<8x16x16xf32>
    %65 = arith.truncf %64 : vector<8x16x16xf32> to vector<8x16x16xbf16>
    "tpu.trace_start"() <{level = 10 : i32, message = "bqk,bkd->bqd"}> : () -> ()
    %cst_25 = arith.constant dense<0.000000e+00> : vector<8x16x8xf32>
    %66 = tpu.matmul %65, %43, %cst_25 {dimension_numbers = #tpu.dot_dimension_numbers<[2], [1], [1], [2], [0, 0, 0, 1, 1, 2], [0], [0]>} : vector<8x16x16xbf16>, vector<8x16x8xbf16>, vector<8x16x8xf32> -> vector<8x16x8xf32>
    "tpu.trace_stop"() : () -> ()
    %67 = vector.shape_cast %66 : vector<8x16x8xf32> to vector<4x32x8xf32>
    %68 = tpu.transpose %67, [1, 0, 2] : vector<4x32x8xf32> -> vector<32x4x8xf32>
    %69 = vector.shape_cast %68 : vector<32x4x8xf32> to vector<32x32xf32>
    %70 = arith.truncf %69 : vector<32x32xf32> to vector<32x32xbf16>
    %c0_26 = arith.constant 0 : index
    %c0_27 = arith.constant 0 : index
    %71 = vector.load %arg9[%c0_26, %c0_27] : memref<32x32xbf16, #tpu.memory_space<vmem>>, vector<32x32xbf16>
    %cst_28 = arith.constant dense<0.000000e+00> : vector<32x32xf32>
    %72 = tpu.matmul %70, %71, %cst_28 {dimension_numbers = #tpu.dot_dimension_numbers<[1], [0], [0], [1], [0, 0, 1, 1], [], []>} : vector<32x32xbf16>, vector<32x32xbf16>, vector<32x32xf32> -> vector<32x32xf32>
    %c0_29 = arith.constant 0 : index
    %c0_30 = arith.constant 0 : index
    %73 = vector.load %arg10[%c0_29, %c0_30] : memref<1x32xf32, #tpu.memory_space<vmem>>, vector<1x32xf32>
    %74 = vector.broadcast %73 : vector<1x32xf32> to vector<32x32xf32>
    %75 = arith.addf %72, %74 : vector<32x32xf32>
    %76 = arith.addf %2, %75 : vector<32x32xf32>
    %77 = vector.shape_cast %76 : vector<32x32xf32> to vector<2x16x32xf32>
    %c0_31 = arith.constant 0 : index
    %c0_32 = arith.constant 0 : index
    %c0_33 = arith.constant 0 : index
    %c0_34 = arith.constant 0 : index
    %78 = vector.load %arg11[%c0_31, %c0_32, %c0_33, %c0_34] : memref<1x2x16x32xf32, #tpu.memory_space<vmem>>, vector<1x2x16x32xf32>
    %79 = vector.shape_cast %78 : vector<1x2x16x32xf32> to vector<2x16x32xf32>
    %80 = vector.shape_cast %77 : vector<2x16x32xf32> to vector<1x2x16x32xf32>
    tpu.vector_store %arg11[%c0_31, %c0_32, %c0_33, %c0_34], %80 {strides = array<i32>} : memref<1x2x16x32xf32, #tpu.memory_space<vmem>>, vector<1x2x16x32xf32>,
    return
  }
  func.func @transform_0(%arg0: i32, %arg1: i32) -> (i32, i32, i32, i32) {
    %c0_i32 = arith.constant 0 : i32
    %c0_i32_0 = arith.constant 0 : i32
    %c0_i32_1 = arith.constant 0 : i32
    return %arg0, %arg1, %c0_i32, %c0_i32_0 : i32, i32, i32, i32
  }
  func.func @transform_1(%arg0: i32, %arg1: i32) -> (i32, i32, i32) {
    %c0_i32 = arith.constant 0 : i32
    %c0_i32_0 = arith.constant 0 : i32
    %c0_i32_1 = arith.constant 0 : i32
    %c0_i32_2 = arith.constant 0 : i32
    return %c0_i32, %c0_i32_0, %c0_i32_1 : i32, i32, i32
  }
  func.func @transform_2(%arg0: i32, %arg1: i32) -> (i32, i32, i32) {
    %c0_i32 = arith.constant 0 : i32
    %c0_i32_0 = arith.constant 0 : i32
    %c0_i32_1 = arith.constant 0 : i32
    return %arg1, %c0_i32, %c0_i32_0 : i32, i32, i32
  }
  func.func @transform_3(%arg0: i32, %arg1: i32) -> (i32, i32) {
    %c0_i32 = arith.constant 0 : i32
    %c0_i32_0 = arith.constant 0 : i32
    %c0_i32_1 = arith.constant 0 : i32
    return %c0_i32, %c0_i32_0 : i32, i32
  }
  func.func @transform_4(%arg0: i32, %arg1: i32) -> (i32, i32) {
    %c0_i32 = arith.constant 0 : i32
    %c0_i32_0 = arith.constant 0 : i32
    %c0_i32_1 = arith.constant 0 : i32
    return %c0_i32, %c0_i32_0 : i32, i32
  }
  func.func @transform_5(%arg0: i32, %arg1: i32) -> (i32, i32) {
    %c0_i32 = arith.constant 0 : i32
    %c0_i32_0 = arith.constant 0 : i32
    %c0_i32_1 = arith.constant 0 : i32
    return %c0_i32, %c0_i32_0 : i32, i32
  }
  func.func @transform_6(%arg0: i32, %arg1: i32) -> (i32, i32) {
    %c0_i32 = arith.constant 0 : i32
    %c0_i32_0 = arith.constant 0 : i32
    %c0_i32_1 = arith.constant 0 : i32
    return %c0_i32, %c0_i32_0 : i32, i32
  }
  func.func @transform_7(%arg0: i32, %arg1: i32) -> (i32, i32) {
    %c0_i32 = arith.constant 0 : i32
    %c0_i32_0 = arith.constant 0 : i32
    %c0_i32_1 = arith.constant 0 : i32
    return %c0_i32, %c0_i32_0 : i32, i32
  }
  func.func @transform_8(%arg0: i32, %arg1: i32) -> (i32, i32) {
    %c0_i32 = arith.constant 0 : i32
    %c0_i32_0 = arith.constant 0 : i32
    %c0_i32_1 = arith.constant 0 : i32
    return %c0_i32, %c0_i32_0 : i32, i32
  }
  func.func @transform_9(%arg0: i32, %arg1: i32) -> (i32, i32, i32, i32) {
    %c0_i32 = arith.constant 0 : i32
    %c0_i32_0 = arith.constant 0 : i32
    %c0_i32_1 = arith.constant 0 : i32
    return %arg0, %arg1, %c0_i32, %c0_i32_0 : i32, i32, i32, i32
  }
}

module attributes {stable_mosaic.version = 11 : i64} {
  func.func @_ln_mlp_kernel(%arg0: i32, %arg1: memref<128x32xf32, #tpu.memory_space<vmem>>, %arg2: memref<1x32xf32, #tpu.memory_space<vmem>>, %arg3: memref<1x32xf32, #tpu.memory_space<vmem>>, %arg4: memref<32x128xbf16, #tpu.memory_space<vmem>>, %arg5: memref<1x128xf32, #tpu.memory_space<vmem>>, %arg6: memref<128x32xbf16, #tpu.memory_space<vmem>>, %arg7: memref<1x32xf32, #tpu.memory_space<vmem>>, %arg8: memref<128x32xf32, #tpu.memory_space<vmem>>) attributes {dimension_semantics = [#tpu.dimension_semantics<parallel>], iteration_bounds = array<i64: 1>, scalar_prefetch = 0 : i64, scratch_operands = 0 : i64, tpu.core_type = #tpu.core_type<tc>, window_params = [{transform_indices = @transform_0, window_bounds = array<i64: 128, 32>}, {pipeline_mode = #tpu.pipeline_mode<synchronous>, transform_indices = @transform_1, window_bounds = array<i64: 1, 32>}, {pipeline_mode = #tpu.pipeline_mode<synchronous>, transform_indices = @transform_2, window_bounds = array<i64: 1, 32>}, {pipeline_mode = #tpu.pipeline_mode<synchronous>, transform_indices = @transform_3, window_bounds = array<i64: 32, 128>}, {pipeline_mode = #tpu.pipeline_mode<synchronous>, transform_indices = @transform_4, window_bounds = array<i64: 1, 128>}, {pipeline_mode = #tpu.pipeline_mode<synchronous>, transform_indices = @transform_5, window_bounds = array<i64: 128, 32>}, {pipeline_mode = #tpu.pipeline_mode<synchronous>, transform_indices = @transform_6, window_bounds = array<i64: 1, 32>}, {transform_indices = @transform_7, window_bounds = array<i64: 128, 32>}]} {
    %c0 = arith.constant 0 : index
    %c0_0 = arith.constant 0 : index
    %0 = vector.load %arg1[%c0, %c0_0] : memref<128x32xf32, #tpu.memory_space<vmem>>, vector<128x32xf32>
    %cst = arith.constant dense<0.000000e+00> : vector<128xf32>
    %1 = vector.multi_reduction <add>, %0, %cst [1] : vector<128x32xf32> to vector<128xf32>
    %2 = vector.shape_cast %1 : vector<128xf32> to vector<128x1xf32>
    %cst_1 = arith.constant 3.200000e+01 : f32
    %3 = vector.broadcast %cst_1 : f32 to vector<128x1xf32>
    %4 = arith.divf %2, %3 : vector<128x1xf32>
    %5 = vector.broadcast %4 : vector<128x1xf32> to vector<128x32xf32>
    %6 = arith.subf %0, %5 : vector<128x32xf32>
    %7 = arith.mulf %6, %6 : vector<128x32xf32>
    %cst_2 = arith.constant dense<0.000000e+00> : vector<128xf32>
    %8 = vector.multi_reduction <add>, %7, %cst_2 [1] : vector<128x32xf32> to vector<128xf32>
    %9 = vector.shape_cast %8 : vector<128xf32> to vector<128x1xf32>
    %cst_3 = arith.constant 3.200000e+01 : f32
    %10 = vector.broadcast %cst_3 : f32 to vector<128x1xf32>
    %11 = arith.divf %9, %10 : vector<128x1xf32>
    %12 = vector.broadcast %4 : vector<128x1xf32> to vector<128x32xf32>
    %13 = arith.subf %0, %12 : vector<128x32xf32>
    %cst_4 = arith.constant 9.99999974E-6 : f32
    %14 = vector.broadcast %cst_4 : f32 to vector<128x1xf32>
    %15 = arith.addf %11, %14 : vector<128x1xf32>
    %16 = math.rsqrt %15 : vector<128x1xf32>
    %17 = vector.broadcast %16 : vector<128x1xf32> to vector<128x32xf32>
    %18 = arith.mulf %13, %17 : vector<128x32xf32>
    %c0_5 = arith.constant 0 : index
    %c0_6 = arith.constant 0 : index
    %19 = vector.load %arg2[%c0_5, %c0_6] : memref<1x32xf32, #tpu.memory_space<vmem>>, vector<1x32xf32>
    %20 = vector.broadcast %19 : vector<1x32xf32> to vector<128x32xf32>
    %21 = arith.mulf %18, %20 : vector<128x32xf32>
    %c0_7 = arith.constant 0 : index
    %c0_8 = arith.constant 0 : index
    %22 = vector.load %arg3[%c0_7, %c0_8] : memref<1x32xf32, #tpu.memory_space<vmem>>, vector<1x32xf32>
    %23 = vector.broadcast %22 : vector<1x32xf32> to vector<128x32xf32>
    %24 = arith.addf %21, %23 : vector<128x32xf32>
    %25 = arith.truncf %24 : vector<128x32xf32> to vector<128x32xbf16>
    %c0_9 = arith.constant 0 : index
    %c0_10 = arith.constant 0 : index
    %26 = vector.load %arg4[%c0_9, %c0_10] : memref<32x128xbf16, #tpu.memory_space<vmem>>, vector<32x128xbf16>
    %cst_11 = arith.constant dense<0.000000e+00> : vector<128x128xf32>
    %27 = tpu.matmul %25, %26, %cst_11 {dimension_numbers = #tpu.dot_dimension_numbers<[1], [0], [0], [1], [0, 0, 1, 1], [], []>} : vector<128x32xbf16>, vector<32x128xbf16>, vector<128x128xf32> -> vector<128x128xf32>
    %c0_12 = arith.constant 0 : index
    %c0_13 = arith.constant 0 : index
    %28 = vector.load %arg5[%c0_12, %c0_13] : memref<1x128xf32, #tpu.memory_space<vmem>>, vector<1x128xf32>
    %29 = vector.broadcast %28 : vector<1x128xf32> to vector<128x128xf32>
    %30 = arith.addf %27, %29 : vector<128x128xf32>
    %cst_14 = arith.constant 5.000000e-01 : f32
    %31 = vector.broadcast %cst_14 : f32 to vector<128x128xf32>
    %32 = arith.mulf %31, %30 : vector<128x128xf32>
    %cst_15 = arith.constant 0.707106769 : f32
    %33 = vector.broadcast %cst_15 : f32 to vector<128x128xf32>
    %34 = arith.mulf %30, %33 : vector<128x128xf32>
    %35 = math.erf %34 : vector<128x128xf32>
    %cst_16 = arith.constant 1.000000e+00 : f32
    %36 = vector.broadcast %cst_16 : f32 to vector<128x128xf32>
    %37 = arith.addf %36, %35 : vector<128x128xf32>
    %38 = arith.mulf %32, %37 : vector<128x128xf32>
    %39 = arith.truncf %38 : vector<128x128xf32> to vector<128x128xbf16>
    %c0_17 = arith.constant 0 : index
    %c0_18 = arith.constant 0 : index
    %40 = vector.load %arg6[%c0_17, %c0_18] : memref<128x32xbf16, #tpu.memory_space<vmem>>, vector<128x32xbf16>
    %cst_19 = arith.constant dense<0.000000e+00> : vector<128x32xf32>
    %41 = tpu.matmul %39, %40, %cst_19 {dimension_numbers = #tpu.dot_dimension_numbers<[1], [0], [0], [1], [0, 0, 1, 1], [], []>} : vector<128x128xbf16>, vector<128x32xbf16>, vector<128x32xf32> -> vector<128x32xf32>
    %c0_20 = arith.constant 0 : index
    %c0_21 = arith.constant 0 : index
    %42 = vector.load %arg7[%c0_20, %c0_21] : memref<1x32xf32, #tpu.memory_space<vmem>>, vector<1x32xf32>
    %43 = vector.broadcast %42 : vector<1x32xf32> to vector<128x32xf32>
    %44 = arith.addf %41, %43 : vector<128x32xf32>
    %45 = arith.addf %0, %44 : vector<128x32xf32>
    %c0_22 = arith.constant 0 : index
    %c0_23 = arith.constant 0 : index
    %46 = vector.load %arg8[%c0_22, %c0_23] : memref<128x32xf32, #tpu.memory_space<vmem>>, vector<128x32xf32>
    tpu.vector_store %arg8[%c0_22, %c0_23], %45 {strides = array<i32>} : memref<128x32xf32, #tpu.memory_space<vmem>>, vector<128x32xf32>,
    return
  }
  func.func @transform_0(%arg0: i32) -> (i32, i32) {
    %c0_i32 = arith.constant 0 : i32
    %c0_i32_0 = arith.constant 0 : i32
    return %arg0, %c0_i32 : i32, i32
  }
  func.func @transform_1(%arg0: i32) -> (i32, i32) {
    %c0_i32 = arith.constant 0 : i32
    %c0_i32_0 = arith.constant 0 : i32
    %c0_i32_1 = arith.constant 0 : i32
    return %c0_i32, %c0_i32_0 : i32, i32
  }
  func.func @transform_2(%arg0: i32) -> (i32, i32) {
    %c0_i32 = arith.constant 0 : i32
    %c0_i32_0 = arith.constant 0 : i32
    %c0_i32_1 = arith.constant 0 : i32
    return %c0_i32, %c0_i32_0 : i32, i32
  }
  func.func @transform_3(%arg0: i32) -> (i32, i32) {
    %c0_i32 = arith.constant 0 : i32
    %c0_i32_0 = arith.constant 0 : i32
    %c0_i32_1 = arith.constant 0 : i32
    return %c0_i32, %c0_i32_0 : i32, i32
  }
  func.func @transform_4(%arg0: i32) -> (i32, i32) {
    %c0_i32 = arith.constant 0 : i32
    %c0_i32_0 = arith.constant 0 : i32
    %c0_i32_1 = arith.constant 0 : i32
    return %c0_i32, %c0_i32_0 : i32, i32
  }
  func.func @transform_5(%arg0: i32) -> (i32, i32) {
    %c0_i32 = arith.constant 0 : i32
    %c0_i32_0 = arith.constant 0 : i32
    %c0_i32_1 = arith.constant 0 : i32
    return %c0_i32, %c0_i32_0 : i32, i32
  }
  func.func @transform_6(%arg0: i32) -> (i32, i32) {
    %c0_i32 = arith.constant 0 : i32
    %c0_i32_0 = arith.constant 0 : i32
    %c0_i32_1 = arith.constant 0 : i32
    return %c0_i32, %c0_i32_0 : i32, i32
  }
  func.func @transform_7(%arg0: i32) -> (i32, i32) {
    %c0_i32 = arith.constant 0 : i32
    %c0_i32_0 = arith.constant 0 : i32
    return %arg0, %c0_i32 : i32, i32
  }
}

</mosaic_0001>

<llo_original>
// kernel: basic_layer.5
$region0: #{basic_layer.5}
  #allocation0 [shape = 'u32[]', space=smem, size = 0x4, offset = 0x4, fixed_abs, tag = 'smem constant byte address 0x4 - core index']
  #allocation1 [shape = 'u32[144,128]{1,0:T(1,128)}', space=vmem, size = 0x12000, scoped, tag = 'internal scratch']
  %s0 = inlined_call_operand.vmem [shape: f32[128,32], index: 0, kind: input, shape index: {}]
  %s1 = inlined_call_operand.vmem [shape: f32[1,32], index: 1, kind: input, shape index: {}]
  %s2 = inlined_call_operand.vmem [shape: f32[1,32], index: 2, kind: input, shape index: {}]
  %s3 = inlined_call_operand.vmem [shape: bf16[32,128], index: 3, kind: input, shape index: {}]
  %s4 = inlined_call_operand.vmem [shape: f32[1,128], index: 4, kind: input, shape index: {}]
  %s5 = inlined_call_operand.vmem [shape: bf16[128,32], index: 5, kind: input, shape index: {}]
  %s6 = inlined_call_operand.vmem [shape: f32[1,32], index: 6, kind: input, shape index: {}]
  %s7 = inlined_call_operand.vmem [shape: f32[128,32], index: 7, kind: output, shape index: {}]
  %s8 = sld [smem:[#allocation0]]
  $region38: #{basic_layer.5} parent=0
    _
  %s10 = ssub.s32 1, %s8
  %s11 = scalar_select 0, %s10, %s8
  // Predicated region
  $region2: #{basic_layer.5} parent=0 // pred_check
    _
  $region3: #{basic_layer.5} parent=0 // pred_check_branch
    %13 = sbr.rel (0) target = $region5
  $region4: #{basic_layer.5} parent=0 // pred_region
    _
  $region5: #{basic_layer.5} parent=0 // pred_fallthru
    _
  // Predicated region
  $region6: #{basic_layer.5} parent=0 // pred_check
    _
  $region7: #{basic_layer.5} parent=0 // pred_check_branch
    %15 = sbr.rel (0) target = $region9
  $region8: #{basic_layer.5} parent=0 // pred_region
    _
  $region9: #{basic_layer.5} parent=0 // pred_fallthru
    _
  // Predicated region
  $region10: #{basic_layer.5} parent=0 // pred_check
    _
  $region11: #{basic_layer.5} parent=0 // pred_check_branch
    %17 = sbr.rel (0) target = $region13
  $region12: #{basic_layer.5} parent=0 // pred_region
    _
  $region13: #{basic_layer.5} parent=0 // pred_fallthru
    _
  // Predicated region
  $region14: #{basic_layer.5} parent=0 // pred_check
    _
  $region15: #{basic_layer.5} parent=0 // pred_check_branch
    %19 = sbr.rel (0) target = $region17
  $region16: #{basic_layer.5} parent=0 // pred_region
    _
  $region17: #{basic_layer.5} parent=0 // pred_fallthru
    _
  // Predicated region
  $region18: #{basic_layer.5} parent=0 // pred_check
    _
  $region19: #{basic_layer.5} parent=0 // pred_check_branch
    %21 = sbr.rel (0) target = $region21
  $region20: #{basic_layer.5} parent=0 // pred_region
    _
  $region21: #{basic_layer.5} parent=0 // pred_fallthru
    _
  // Predicated region
  $region22: #{basic_layer.5} parent=0 // pred_check
    _
  $region23: #{basic_layer.5} parent=0 // pred_check_branch
    %23 = sbr.rel (0) target = $region25
  $region24: #{basic_layer.5} parent=0 // pred_region
    _
  $region25: #{basic_layer.5} parent=0 // pred_fallthru
    _
  // Predicated region
  $region26: #{basic_layer.5} parent=0 // pred_check
    _
  $region27: #{basic_layer.5} parent=0 // pred_check_branch
    %25 = sbr.rel (0) target = $region29
  $region28: #{basic_layer.5} parent=0 // pred_region
    _
  $region29: #{basic_layer.5} parent=0 // pred_fallthru
    _
  %v27 = vld [vmem:[%s0] sm:$0xff]
  %v28 = vld [vmem:[%s0 + $0x8] sm:$0xff]
  %v29 = vld [vmem:[%s0 + $0x10] sm:$0xff]
  %v30 = vld [vmem:[%s0 + $0x18] sm:$0xff]
  %v31 = vld [vmem:[%s0 + $0x20] sm:$0xff]
  %v32 = vld [vmem:[%s0 + $0x28] sm:$0xff]
  %v33 = vld [vmem:[%s0 + $0x30] sm:$0xff]
  %v34 = vld [vmem:[%s0 + $0x38] sm:$0xff]
  %v35 = vld [vmem:[%s0 + $0x40] sm:$0xff]
  %v36 = vld [vmem:[%s0 + $0x48] sm:$0xff]
  %v37 = vld [vmem:[%s0 + $0x50] sm:$0xff]
  %v38 = vld [vmem:[%s0 + $0x58] sm:$0xff]
  %v39 = vld [vmem:[%s0 + $0x60] sm:$0xff]
  %v40 = vld [vmem:[%s0 + $0x68] sm:$0xff]
  %v41 = vld [vmem:[%s0 + $0x70] sm:$0xff]
  %v42 = vld [vmem:[%s0 + $0x78] sm:$0xff]
  %vm43 = vcmask 261120
  %v44 = vsel %vm43, %v27, 0.0
  %45 = vadd.xlane.f32.xlu0 %v44
  %v46 = vpop.xlane.xlu0 %45
  %v47 = vsel %vm43, %v28, 0.0
  %48 = vadd.xlane.f32.xlu0 %v47
  %v49 = vpop.xlane.xlu0 %48
  %v50 = vsel %vm43, %v29, 0.0
  %51 = vadd.xlane.f32.xlu0 %v50
  %v52 = vpop.xlane.xlu0 %51
  %v53 = vsel %vm43, %v30, 0.0
  %54 = vadd.xlane.f32.xlu0 %v53
  %v55 = vpop.xlane.xlu0 %54
  %v56 = vsel %vm43, %v31, 0.0
  %57 = vadd.xlane.f32.xlu0 %v56
  %v58 = vpop.xlane.xlu0 %57
  %v59 = vsel %vm43, %v32, 0.0
  %60 = vadd.xlane.f32.xlu0 %v59
  %v61 = vpop.xlane.xlu0 %60
  %v62 = vsel %vm43, %v33, 0.0
  %63 = vadd.xlane.f32.xlu0 %v62
  %v64 = vpop.xlane.xlu0 %63
  %v65 = vsel %vm43, %v34, 0.0
  %66 = vadd.xlane.f32.xlu0 %v65
  %v67 = vpop.xlane.xlu0 %66
  %v68 = vsel %vm43, %v35, 0.0
  %69 = vadd.xlane.f32.xlu0 %v68
  %v70 = vpop.xlane.xlu0 %69
  %v71 = vsel %vm43, %v36, 0.0
  %72 = vadd.xlane.f32.xlu0 %v71
  %v73 = vpop.xlane.xlu0 %72
  %v74 = vsel %vm43, %v37, 0.0
  %75 = vadd.xlane.f32.xlu0 %v74
  %v76 = vpop.xlane.xlu0 %75
  %v77 = vsel %vm43, %v38, 0.0
  %78 = vadd.xlane.f32.xlu0 %v77
  %v79 = vpop.xlane.xlu0 %78
  %v80 = vsel %vm43, %v39, 0.0
  %81 = vadd.xlane.f32.xlu0 %v80
  %v82 = vpop.xlane.xlu0 %81
  %v83 = vsel %vm43, %v40, 0.0
  %84 = vadd.xlane.f32.xlu0 %v83
  %v85 = vpop.xlane.xlu0 %84
  %v86 = vsel %vm43, %v41, 0.0
  %87 = vadd.xlane.f32.xlu0 %v86
  %v88 = vpop.xlane.xlu0 %87
  %v89 = vsel %vm43, %v42, 0.0
  %90 = vadd.xlane.f32.xlu0 %v89
  %v91 = vpop.xlane.xlu0 %90
  %v92 = vrcp.pop 32.0
  %v93 = vmul.f32 %v46, %v92
  %v94 = vmul.f32 %v49, %v92
  %v95 = vmul.f32 %v52, %v92
  %v96 = vmul.f32 %v55, %v92
  %v97 = vmul.f32 %v58, %v92
  %v98 = vmul.f32 %v61, %v92
  %v99 = vmul.f32 %v64, %v92
  %v100 = vmul.f32 %v67, %v92
  %v101 = vmul.f32 %v70, %v92
  %v102 = vmul.f32 %v73, %v92
  %v103 = vmul.f32 %v76, %v92
  %v104 = vmul.f32 %v79, %v92
  %v105 = vmul.f32 %v82, %v92
  %v106 = vmul.f32 %v85, %v92
  %v107 = vmul.f32 %v88, %v92
  %v108 = vmul.f32 %v91, %v92
  %v109 = vsub.f32 %v27, %v93
  %v110 = vsub.f32 %v28, %v94
  %v111 = vsub.f32 %v29, %v95
  %v112 = vsub.f32 %v30, %v96
  %v113 = vsub.f32 %v31, %v97
  %v114 = vsub.f32 %v32, %v98
  %v115 = vsub.f32 %v33, %v99
  %v116 = vsub.f32 %v34, %v100
  %v117 = vsub.f32 %v35, %v101
  %v118 = vsub.f32 %v36, %v102
  %v119 = vsub.f32 %v37, %v103
  %v120 = vsub.f32 %v38, %v104
  %v121 = vsub.f32 %v39, %v105
  %v122 = vsub.f32 %v40, %v106
  %v123 = vsub.f32 %v41, %v107
  %v124 = vsub.f32 %v42, %v108
  %v125 = vmul.f32 %v109, %v109
  %v126 = vmul.f32 %v110, %v110
  %v127 = vmul.f32 %v111, %v111
  %v128 = vmul.f32 %v112, %v112
  %v129 = vmul.f32 %v113, %v113
  %v130 = vmul.f32 %v114, %v114
  %v131 = vmul.f32 %v115, %v115
  %v132 = vmul.f32 %v116, %v116
  %v133 = vmul.f32 %v117, %v117
  %v134 = vmul.f32 %v118, %v118
  %v135 = vmul.f32 %v119, %v119
  %v136 = vmul.f32 %v120, %v120
  %v137 = vmul.f32 %v121, %v121
  %v138 = vmul.f32 %v122, %v122
  %v139 = vmul.f32 %v123, %v123
  %v140 = vmul.f32 %v124, %v124
  %v141 = vsel %vm43, %v125, 0.0
  %142 = vadd.xlane.f32.xlu0 %v141
  %v143 = vpop.xlane.xlu0 %142
  %v144 = vsel %vm43, %v126, 0.0
  %145 = vadd.xlane.f32.xlu0 %v144
  %v146 = vpop.xlane.xlu0 %145
  %v147 = vsel %vm43, %v127, 0.0
  %148 = vadd.xlane.f32.xlu0 %v147
  %v149 = vpop.xlane.xlu0 %148
  %v150 = vsel %vm43, %v128, 0.0
  %151 = vadd.xlane.f32.xlu0 %v150
  %v152 = vpop.xlane.xlu0 %151
  %v153 = vsel %vm43, %v129, 0.0
  %154 = vadd.xlane.f32.xlu0 %v153
  %v155 = vpop.xlane.xlu0 %154
  %v156 = vsel %vm43, %v130, 0.0
  %157 = vadd.xlane.f32.xlu0 %v156
  %v158 = vpop.xlane.xlu0 %157
  %v159 = vsel %vm43, %v131, 0.0
  %160 = vadd.xlane.f32.xlu0 %v159
  %v161 = vpop.xlane.xlu0 %160
  %v162 = vsel %vm43, %v132, 0.0
  %163 = vadd.xlane.f32.xlu0 %v162
  %v164 = vpop.xlane.xlu0 %163
  %v165 = vsel %vm43, %v133, 0.0
  %166 = vadd.xlane.f32.xlu0 %v165
  %v167 = vpop.xlane.xlu0 %166
  %v168 = vsel %vm43, %v134, 0.0
  %169 = vadd.xlane.f32.xlu0 %v168
  %v170 = vpop.xlane.xlu0 %169
  %v171 = vsel %vm43, %v135, 0.0
  %172 = vadd.xlane.f32.xlu0 %v171
  %v173 = vpop.xlane.xlu0 %172
  %v174 = vsel %vm43, %v136, 0.0
  %175 = vadd.xlane.f32.xlu0 %v174
  %v176 = vpop.xlane.xlu0 %175
  %v177 = vsel %vm43, %v137, 0.0
  %178 = vadd.xlane.f32.xlu0 %v177
  %v179 = vpop.xlane.xlu0 %178
  %v180 = vsel %vm43, %v138, 0.0
  %181 = vadd.xlane.f32.xlu0 %v180
  %v182 = vpop.xlane.xlu0 %181
  %v183 = vsel %vm43, %v139, 0.0
  %184 = vadd.xlane.f32.xlu0 %v183
  %v185 = vpop.xlane.xlu0 %184
  %v186 = vsel %vm43, %v140, 0.0
  %187 = vadd.xlane.f32.xlu0 %v186
  %v188 = vpop.xlane.xlu0 %187
  %v189 = vmul.f32 %v143, %v92
  %v190 = vmul.f32 %v146, %v92
  %v191 = vmul.f32 %v149, %v92
  %v192 = vmul.f32 %v152, %v92
  %v193 = vmul.f32 %v155, %v92
  %v194 = vmul.f32 %v158, %v92
  %v195 = vmul.f32 %v161, %v92
  %v196 = vmul.f32 %v164, %v92
  %v197 = vmul.f32 %v167, %v92
  %v198 = vmul.f32 %v170, %v92
  %v199 = vmul.f32 %v173, %v92
  %v200 = vmul.f32 %v176, %v92
  %v201 = vmul.f32 %v179, %v92
  %v202 = vmul.f32 %v182, %v92
  %v203 = vmul.f32 %v185, %v92
  %v204 = vmul.f32 %v188, %v92
  %v205 = vadd.f32 %v189, 1e-05
  %v206 = vadd.f32 %v190, 1e-05
  %v207 = vadd.f32 %v191, 1e-05
  %v208 = vadd.f32 %v192, 1e-05
  %v209 = vadd.f32 %v193, 1e-05
  %v210 = vadd.f32 %v194, 1e-05
  %v211 = vadd.f32 %v195, 1e-05
  %v212 = vadd.f32 %v196, 1e-05
  %v213 = vadd.f32 %v197, 1e-05
  %v214 = vadd.f32 %v198, 1e-05
  %v215 = vadd.f32 %v199, 1e-05
  %v216 = vadd.f32 %v200, 1e-05
  %v217 = vadd.f32 %v201, 1e-05
  %v218 = vadd.f32 %v202, 1e-05
  %v219 = vadd.f32 %v203, 1e-05
  %v220 = vadd.f32 %v204, 1e-05
  %v221 = vrsqrt.pop %v205
  %v222 = vrsqrt.pop %v206
  %v223 = vrsqrt.pop %v207
  %v224 = vrsqrt.pop %v208
  %v225 = vrsqrt.pop %v209
  %v226 = vrsqrt.pop %v210
  %v227 = vrsqrt.pop %v211
  %v228 = vrsqrt.pop %v212
  %v229 = vrsqrt.pop %v213
  %v230 = vrsqrt.pop %v214
  %v231 = vrsqrt.pop %v215
  %v232 = vrsqrt.pop %v216
  %v233 = vrsqrt.pop %v217
  %v234 = vrsqrt.pop %v218
  %v235 = vrsqrt.pop %v219
  %v236 = vrsqrt.pop %v220
  %v237 = vmul.f32 %v109, %v221
  %v238 = vmul.f32 %v110, %v222
  %v239 = vmul.f32 %v111, %v223
  %v240 = vmul.f32 %v112, %v224
  %v241 = vmul.f32 %v113, %v225
  %v242 = vmul.f32 %v114, %v226
  %v243 = vmul.f32 %v115, %v227
  %v244 = vmul.f32 %v116, %v228
  %v245 = vmul.f32 %v117, %v229
  %v246 = vmul.f32 %v118, %v230
  %v247 = vmul.f32 %v119, %v231
  %v248 = vmul.f32 %v120, %v232
  %v249 = vmul.f32 %v121, %v233
  %v250 = vmul.f32 %v122, %v234
  %v251 = vmul.f32 %v123, %v235
  %v252 = vmul.f32 %v124, %v236
  %v253 = vld [vmem:[%s1] sm:$0x1]
  %v255 = vlaneseq
  %v256 = vshrl.u32 %v255, 7
  %v257 = vsub.s32 0, %v256
  %v258 = vrot.slane %v253, %v257
  %v260 = vmul.f32 %v237, %v258
  %v261 = vmul.f32 %v238, %v258
  %v262 = vmul.f32 %v239, %v258
  %v263 = vmul.f32 %v240, %v258
  %v264 = vmul.f32 %v241, %v258
  %v265 = vmul.f32 %v242, %v258
  %v266 = vmul.f32 %v243, %v258
  %v267 = vmul.f32 %v244, %v258
  %v268 = vmul.f32 %v245, %v258
  %v269 = vmul.f32 %v246, %v258
  %v270 = vmul.f32 %v247, %v258
  %v271 = vmul.f32 %v248, %v258
  %v272 = vmul.f32 %v249, %v258
  %v273 = vmul.f32 %v250, %v258
  %v274 = vmul.f32 %v251, %v258
  %v275 = vmul.f32 %v252, %v258
  %v276 = vld [vmem:[%s2] sm:$0x1]
  %v278 = vlaneseq
  %v279 = vshrl.u32 %v278, 7
  %v280 = vsub.s32 0, %v279
  %v281 = vrot.slane %v276, %v280
  %v283 = vadd.f32 %v260, %v281
  %v284 = vadd.f32 %v261, %v281
  %v285 = vadd.f32 %v262, %v281
  %v286 = vadd.f32 %v263, %v281
  %v287 = vadd.f32 %v264, %v281
  %v288 = vadd.f32 %v265, %v281
  %v289 = vadd.f32 %v266, %v281
  %v290 = vadd.f32 %v267, %v281
  %v291 = vadd.f32 %v268, %v281
  %v292 = vadd.f32 %v269, %v281
  %v293 = vadd.f32 %v270, %v281
  %v294 = vadd.f32 %v271, %v281
  %v295 = vadd.f32 %v272, %v281
  %v296 = vadd.f32 %v273, %v281
  %v297 = vadd.f32 %v274, %v281
  %v298 = vadd.f32 %v275, %v281
  %v299 = vpack.c.bf16 %v284, %v283
  %v300 = vpack.c.bf16 %v286, %v285
  %v301 = vpack.c.bf16 %v288, %v287
  %v302 = vpack.c.bf16 %v290, %v289
  %v303 = vpack.c.bf16 %v292, %v291
  %v304 = vpack.c.bf16 %v294, %v293
  %v305 = vpack.c.bf16 %v296, %v295
  %v306 = vpack.c.bf16 %v298, %v297
  %v307 = vld [vmem:[%s3] sm:$0xf]
  %v308 = vld [vmem:[%s3 + $0x4] sm:$0xf]
  %v309 = vld [vmem:[%s3 + $0x8] sm:$0xf]
  %v310 = vld [vmem:[%s3 + $0xc] sm:$0xf]
  %v311 = vld [vmem:[%s4] sm:$0x1]
  %v313 = vlaneseq
  %v314 = vshrl.u32 %v313, 7
  %v315 = vsub.s32 0, %v314
  %v316 = vrot.slane %v311, %v315
  %v322 = vunpack.c.l.b16 %v307
  %v323 = vunpack.c.l.b16 %v308
  %v324 = vunpack.c.l.b16 %v309
  %v325 = vunpack.c.l.b16 %v310
  %v326 = vpack.c.b16 %v323, %v322
  %v327 = vpack.c.b16 %v325, %v324
  %v331 = vsel %vm43, %v299, 0
  %v334 = vsel %vm43, %v300, 0
  %v337 = vsel %vm43, %v301, 0
  %v340 = vsel %vm43, %v302, 0
  %v343 = vsel %vm43, %v303, 0
  %v346 = vsel %vm43, %v304, 0
  %v349 = vsel %vm43, %v305, 0
  %v352 = vsel %vm43, %v306, 0
  %354 = vmatprep.subr.bf16.mxu0 0
  %355 = vmatpush1.bf16.msra.mxu0 0
  %356 = vmatprep.subr.bf16.mxu0 0
  %357 = vmatpush1.bf16.msra.mxu0 0
  %358 = vmatprep.subr.bf16.mxu0 0
  %359 = vmatpush1.bf16.msra.mxu0 0
  %360 = vmatprep.subr.bf16.mxu0 0
  %361 = vmatpush1.bf16.msra.mxu0 0
  %362 = vmatprep.subr.bf16.mxu0 0
  %363 = vmatpush1.bf16.msra.mxu0 0
  %364 = vmatprep.subr.bf16.mxu0 0
  %365 = vmatpush1.bf16.msra.mxu0 0
  %366 = vmatprep.subr.bf16.mxu0 0
  %367 = vmatpush1.bf16.msra.mxu0 %v327
  %368 = vmatprep.subr.bf16.mxu0 0
  %369 = vmatpush1.bf16.msra.mxu0 %v326
  %370 = vmatprep.subr.bf16.mxu0 0
  %371 = vmatpush2.bf16.msra.mxu0 0
  %372 = vmatprep.subr.bf16.mxu0 0
  %373 = vmatpush2.bf16.msra.mxu0 0
  %374 = vmatprep.subr.bf16.mxu0 0
  %375 = vmatpush2.bf16.msra.mxu0 0
  %376 = vmatprep.subr.bf16.mxu0 0
  %377 = vmatpush2.bf16.msra.mxu0 0
  %378 = vmatprep.subr.bf16.mxu0 0
  %379 = vmatpush2.bf16.msra.mxu0 0
  %380 = vmatprep.subr.bf16.mxu0 0
  %381 = vmatpush2.bf16.msra.mxu0 0
  %382 = vmatprep.subr.bf16.mxu0 0
  %383 = vmatpush2.bf16.msra.mxu0 0
  %384 = vmatprep.subr.bf16.mxu0 0
  %385 = vmatpush2.bf16.msra.mxu0 0
  %386 = vmatprep.mubr.bf16.mxu0 0
  %387 = vmatmul.mubr.bf16.gmra.mxu0 %v331
  %v388 = vpop.f32.mrf.mxu0
  %v389 = vadd.f32 %v316, %v388
  %v390 = vpop.f32.mrf.mxu0
  %v391 = vpop.f32.mrf.mxu0
  %v392 = vadd.f32 %v316, %v391
  %v393 = vpop.f32.mrf.mxu0
  %394 = vmatprep.mubr.bf16.mxu0 0
  %395 = vmatmul.mubr.bf16.gmra.mxu0 %v334
  %v396 = vpop.f32.mrf.mxu0
  %v397 = vadd.f32 %v316, %v396
  %v398 = vpop.f32.mrf.mxu0
  %v399 = vpop.f32.mrf.mxu0
  %v400 = vadd.f32 %v316, %v399
  %v401 = vpop.f32.mrf.mxu0
  %402 = vmatprep.mubr.bf16.mxu0 0
  %403 = vmatmul.mubr.bf16.gmra.mxu0 %v337
  %v404 = vpop.f32.mrf.mxu0
  %v405 = vadd.f32 %v316, %v404
  %v406 = vpop.f32.mrf.mxu0
  %v407 = vpop.f32.mrf.mxu0
  %v408 = vadd.f32 %v316, %v407
  %v409 = vpop.f32.mrf.mxu0
  %410 = vmatprep.mubr.bf16.mxu0 0
  %411 = vmatmul.mubr.bf16.gmra.mxu0 %v340
  %v412 = vpop.f32.mrf.mxu0
  %v413 = vadd.f32 %v316, %v412
  %v414 = vpop.f32.mrf.mxu0
  %v415 = vpop.f32.mrf.mxu0
  %v416 = vadd.f32 %v316, %v415
  %v417 = vpop.f32.mrf.mxu0
  %418 = vmatprep.mubr.bf16.mxu0 0
  %419 = vmatmul.mubr.bf16.gmra.mxu0 %v343
  %v420 = vpop.f32.mrf.mxu0
  %v421 = vadd.f32 %v316, %v420
  %v422 = vpop.f32.mrf.mxu0
  %v423 = vpop.f32.mrf.mxu0
  %v424 = vadd.f32 %v316, %v423
  %v425 = vpop.f32.mrf.mxu0
  %426 = vmatprep.mubr.bf16.mxu0 0
  %427 = vmatmul.mubr.bf16.gmra.mxu0 %v346
  %v428 = vpop.f32.mrf.mxu0
  %v429 = vadd.f32 %v316, %v428
  %v430 = vpop.f32.mrf.mxu0
  %v431 = vpop.f32.mrf.mxu0
  %v432 = vadd.f32 %v316, %v431
  %v433 = vpop.f32.mrf.mxu0
  %434 = vmatprep.mubr.bf16.mxu0 0
  %435 = vmatmul.mubr.bf16.gmra.mxu0 %v349
  %v436 = vpop.f32.mrf.mxu0
  %v437 = vadd.f32 %v316, %v436
  %v438 = vpop.f32.mrf.mxu0
  %v439 = vpop.f32.mrf.mxu0
  %v440 = vadd.f32 %v316, %v439
  %v441 = vpop.f32.mrf.mxu0
  %442 = vmatprep.mubr.bf16.mxu0 0
  %443 = vmatmul.mubr.bf16.gmra.mxu0 %v352
  %v444 = vpop.f32.mrf.mxu0
  %v445 = vadd.f32 %v316, %v444
  %v446 = vpop.f32.mrf.mxu0
  %v447 = vpop.f32.mrf.mxu0
  %v448 = vadd.f32 %v316, %v447
  %v449 = vpop.f32.mrf.mxu0
  %450 = vdwg.mxu0
  %v451 = vmul.f32 %v389, 0.5
  %v452 = vmul.f32 %v392, 0.5
  %v453 = vmul.f32 %v397, 0.5
  %v454 = vmul.f32 %v400, 0.5
  %v455 = vmul.f32 %v405, 0.5
  %v456 = vmul.f32 %v408, 0.5
  %v457 = vmul.f32 %v413, 0.5
  %v458 = vmul.f32 %v416, 0.5
  %v459 = vmul.f32 %v421, 0.5
  %v460 = vmul.f32 %v424, 0.5
  %v461 = vmul.f32 %v429, 0.5
  %v462 = vmul.f32 %v432, 0.5
  %v463 = vmul.f32 %v437, 0.5
  %v464 = vmul.f32 %v440, 0.5
  %v465 = vmul.f32 %v445, 0.5
  %v466 = vmul.f32 %v448, 0.5
  %v467 = vmul.f32 %v389, 0.70710677
  %v468 = vmul.f32 %v392, 0.70710677
  %v469 = vmul.f32 %v397, 0.70710677
  %v470 = vmul.f32 %v400, 0.70710677
  %v471 = vmul.f32 %v405, 0.70710677
  %v472 = vmul.f32 %v408, 0.70710677
  %v473 = vmul.f32 %v413, 0.70710677
  %v474 = vmul.f32 %v416, 0.70710677
  %v475 = vmul.f32 %v421, 0.70710677
  %v476 = vmul.f32 %v424, 0.70710677
  %v477 = vmul.f32 %v429, 0.70710677
  %v478 = vmul.f32 %v432, 0.70710677
  %v479 = vmul.f32 %v437, 0.70710677
  %v480 = vmul.f32 %v440, 0.70710677
  %v481 = vmul.f32 %v445, 0.70710677
  %v482 = vmul.f32 %v448, 0.70710677
  %v483 = verf.f32.pop %v467
  %v484 = verf.f32.pop %v468
  %v485 = verf.f32.pop %v469
  %v486 = verf.f32.pop %v470
  %v487 = verf.f32.pop %v471
  %v488 = verf.f32.pop %v472
  %v489 = verf.f32.pop %v473
  %v490 = verf.f32.pop %v474
  %v491 = verf.f32.pop %v475
  %v492 = verf.f32.pop %v476
  %v493 = verf.f32.pop %v477
  %v494 = verf.f32.pop %v478
  %v495 = verf.f32.pop %v479
  %v496 = verf.f32.pop %v480
  %v497 = verf.f32.pop %v481
  %v498 = verf.f32.pop %v482
  %v499 = vadd.f32 %v483, 1.0
  %v500 = vadd.f32 %v484, 1.0
  %v501 = vadd.f32 %v485, 1.0
  %v502 = vadd.f32 %v486, 1.0
  %v503 = vadd.f32 %v487, 1.0
  %v504 = vadd.f32 %v488, 1.0
  %v505 = vadd.f32 %v489, 1.0
  %v506 = vadd.f32 %v490, 1.0
  %v507 = vadd.f32 %v491, 1.0
  %v508 = vadd.f32 %v492, 1.0
  %v509 = vadd.f32 %v493, 1.0
  %v510 = vadd.f32 %v494, 1.0
  %v511 = vadd.f32 %v495, 1.0
  %v512 = vadd.f32 %v496, 1.0
  %v513 = vadd.f32 %v497, 1.0
  %v514 = vadd.f32 %v498, 1.0
  %v515 = vmul.f32 %v451, %v499
  %v516 = vmul.f32 %v452, %v500
  %v517 = vmul.f32 %v453, %v501
  %v518 = vmul.f32 %v454, %v502
  %v519 = vmul.f32 %v455, %v503
  %v520 = vmul.f32 %v456, %v504
  %v521 = vmul.f32 %v457, %v505
  %v522 = vmul.f32 %v458, %v506
  %v523 = vmul.f32 %v459, %v507
  %v524 = vmul.f32 %v460, %v508
  %v525 = vmul.f32 %v461, %v509
  %v526 = vmul.f32 %v462, %v510
  %v527 = vmul.f32 %v463, %v511
  %v528 = vmul.f32 %v464, %v512
  %v529 = vmul.f32 %v465, %v513
  %v530 = vmul.f32 %v466, %v514
  %v531 = vpack.c.bf16 %v516, %v515
  %v532 = vpack.c.bf16 %v518, %v517
  %v533 = vpack.c.bf16 %v520, %v519
  %v534 = vpack.c.bf16 %v522, %v521
  %v535 = vpack.c.bf16 %v524, %v523
  %v536 = vpack.c.bf16 %v526, %v525
  %v537 = vpack.c.bf16 %v528, %v527
  %v538 = vpack.c.bf16 %v530, %v529
  %v539 = vld [vmem:[%s5] sm:$0xf]
  %v540 = vld [vmem:[%s5 + $0x4] sm:$0xf]
  %v541 = vld [vmem:[%s5 + $0x8] sm:$0xf]
  %v542 = vld [vmem:[%s5 + $0xc] sm:$0xf]
  %v543 = vld [vmem:[%s5 + $0x10] sm:$0xf]
  %v544 = vld [vmem:[%s5 + $0x14] sm:$0xf]
  %v545 = vld [vmem:[%s5 + $0x18] sm:$0xf]
  %v546 = vld [vmem:[%s5 + $0x1c] sm:$0xf]
  %v547 = vld [vmem:[%s5 + $0x20] sm:$0xf]
  %v548 = vld [vmem:[%s5 + $0x24] sm:$0xf]
  %v549 = vld [vmem:[%s5 + $0x28] sm:$0xf]
  %v550 = vld [vmem:[%s5 + $0x2c] sm:$0xf]
  %v551 = vld [vmem:[%s5 + $0x30] sm:$0xf]
  %v552 = vld [vmem:[%s5 + $0x34] sm:$0xf]
  %v553 = vld [vmem:[%s5 + $0x38] sm:$0xf]
  %v554 = vld [vmem:[%s5 + $0x3c] sm:$0xf]
  %v555 = vld [vmem:[%s6] sm:$0x1]
  %v557 = vlaneseq
  %v558 = vshrl.u32 %v557, 7
  %v559 = vsub.s32 0, %v558
  %v560 = vrot.slane %v555, %v559
  %v578 = vunpack.c.l.b16 %v539
  %v579 = vunpack.c.l.b16 %v540
  %v580 = vunpack.c.l.b16 %v541
  %v581 = vunpack.c.l.b16 %v542
  %v582 = vunpack.c.l.b16 %v543
  %v583 = vunpack.c.l.b16 %v544
  %v584 = vunpack.c.l.b16 %v545
  %v585 = vunpack.c.l.b16 %v546
  %v586 = vunpack.c.l.b16 %v547
  %v587 = vunpack.c.l.b16 %v548
  %v588 = vunpack.c.l.b16 %v549
  %v589 = vunpack.c.l.b16 %v550
  %v590 = vunpack.c.l.b16 %v551
  %v591 = vunpack.c.l.b16 %v552
  %v592 = vunpack.c.l.b16 %v553
  %v593 = vunpack.c.l.b16 %v554
  %v594 = vpack.c.b16 %v579, %v578
  %v595 = vpack.c.b16 %v581, %v580
  %v596 = vpack.c.b16 %v583, %v582
  %v597 = vpack.c.b16 %v585, %v584
  %v598 = vpack.c.b16 %v587, %v586
  %v599 = vpack.c.b16 %v589, %v588
  %v600 = vpack.c.b16 %v591, %v590
  %v601 = vpack.c.b16 %v593, %v592
  %610 = vmatprep.subr.bf16.mxu0 0
  %611 = vmatpush1.bf16.msra.mxu0 %v601
  %612 = vmatprep.subr.bf16.mxu0 0
  %613 = vmatpush1.bf16.msra.mxu0 %v600
  %614 = vmatprep.subr.bf16.mxu0 0
  %615 = vmatpush1.bf16.msra.mxu0 %v599
  %616 = vmatprep.subr.bf16.mxu0 0
  %617 = vmatpush1.bf16.msra.mxu0 %v598
  %618 = vmatprep.subr.bf16.mxu0 0
  %619 = vmatpush1.bf16.msra.mxu0 %v597
  %620 = vmatprep.subr.bf16.mxu0 0
  %621 = vmatpush1.bf16.msra.mxu0 %v596
  %622 = vmatprep.subr.bf16.mxu0 0
  %623 = vmatpush1.bf16.msra.mxu0 %v595
  %624 = vmatprep.subr.bf16.mxu0 0
  %625 = vmatpush1.bf16.msra.mxu0 %v594
  %626 = vmatprep.subr.bf16.mxu0 0
  %627 = vmatpush2.bf16.msra.mxu0 0
  %628 = vmatprep.subr.bf16.mxu0 0
  %629 = vmatpush2.bf16.msra.mxu0 0
  %630 = vmatprep.subr.bf16.mxu0 0
  %631 = vmatpush2.bf16.msra.mxu0 0
  %632 = vmatprep.subr.bf16.mxu0 0
  %633 = vmatpush2.bf16.msra.mxu0 0
  %634 = vmatprep.subr.bf16.mxu0 0
  %635 = vmatpush2.bf16.msra.mxu0 0
  %636 = vmatprep.subr.bf16.mxu0 0
  %637 = vmatpush2.bf16.msra.mxu0 0
  %638 = vmatprep.subr.bf16.mxu0 0
  %639 = vmatpush2.bf16.msra.mxu0 0
  %640 = vmatprep.subr.bf16.mxu0 0
  %641 = vmatpush2.bf16.msra.mxu0 0
  %642 = vmatprep.mubr.bf16.mxu0 0
  %643 = vmatmul.mubr.bf16.gmra.mxu0 %v531
  %v644 = vpop.f32.mrf.mxu0
  %v645 = vadd.f32 %v560, %v644
  %v646 = vpop.f32.mrf.mxu0
  %v647 = vpop.f32.mrf.mxu0
  %v648 = vadd.f32 %v560, %v647
  %v649 = vpop.f32.mrf.mxu0
  %650 = vmatprep.mubr.bf16.mxu0 0
  %651 = vmatmul.mubr.bf16.gmra.mxu0 %v532
  %v652 = vpop.f32.mrf.mxu0
  %v653 = vadd.f32 %v560, %v652
  %v654 = vpop.f32.mrf.mxu0
  %v655 = vpop.f32.mrf.mxu0
  %v656 = vadd.f32 %v560, %v655
  %v657 = vpop.f32.mrf.mxu0
  %658 = vmatprep.mubr.bf16.mxu0 0
  %659 = vmatmul.mubr.bf16.gmra.mxu0 %v533
  %v660 = vpop.f32.mrf.mxu0
  %v661 = vadd.f32 %v560, %v660
  %v662 = vpop.f32.mrf.mxu0
  %v663 = vpop.f32.mrf.mxu0
  %v664 = vadd.f32 %v560, %v663
  %v665 = vpop.f32.mrf.mxu0
  %666 = vmatprep.mubr.bf16.mxu0 0
  %667 = vmatmul.mubr.bf16.gmra.mxu0 %v534
  %v668 = vpop.f32.mrf.mxu0
  %v669 = vadd.f32 %v560, %v668
  %v670 = vpop.f32.mrf.mxu0
  %v671 = vpop.f32.mrf.mxu0
  %v672 = vadd.f32 %v560, %v671
  %v673 = vpop.f32.mrf.mxu0
  %674 = vmatprep.mubr.bf16.mxu0 0
  %675 = vmatmul.mubr.bf16.gmra.mxu0 %v535
  %v676 = vpop.f32.mrf.mxu0
  %v677 = vadd.f32 %v560, %v676
  %v678 = vpop.f32.mrf.mxu0
  %v679 = vpop.f32.mrf.mxu0
  %v680 = vadd.f32 %v560, %v679
  %v681 = vpop.f32.mrf.mxu0
  %682 = vmatprep.mubr.bf16.mxu0 0
  %683 = vmatmul.mubr.bf16.gmra.mxu0 %v536
  %v684 = vpop.f32.mrf.mxu0
  %v685 = vadd.f32 %v560, %v684
  %v686 = vpop.f32.mrf.mxu0
  %v687 = vpop.f32.mrf.mxu0
  %v688 = vadd.f32 %v560, %v687
  %v689 = vpop.f32.mrf.mxu0
  %690 = vmatprep.mubr.bf16.mxu0 0
  %691 = vmatmul.mubr.bf16.gmra.mxu0 %v537
  %v692 = vpop.f32.mrf.mxu0
  %v693 = vadd.f32 %v560, %v692
  %v694 = vpop.f32.mrf.mxu0
  %v695 = vpop.f32.mrf.mxu0
  %v696 = vadd.f32 %v560, %v695
  %v697 = vpop.f32.mrf.mxu0
  %698 = vmatprep.mubr.bf16.mxu0 0
  %699 = vmatmul.mubr.bf16.gmra.mxu0 %v538
  %v700 = vpop.f32.mrf.mxu0
  %v701 = vadd.f32 %v560, %v700
  %v702 = vpop.f32.mrf.mxu0
  %v703 = vpop.f32.mrf.mxu0
  %v704 = vadd.f32 %v560, %v703
  %v705 = vpop.f32.mrf.mxu0
  %706 = vdwg.mxu0
  %v707 = vadd.f32 %v27, %v645
  %v708 = vadd.f32 %v28, %v648
  %v709 = vadd.f32 %v29, %v653
  %v710 = vadd.f32 %v30, %v656
  %v711 = vadd.f32 %v31, %v661
  %v712 = vadd.f32 %v32, %v664
  %v713 = vadd.f32 %v33, %v669
  %v714 = vadd.f32 %v34, %v672
  %v715 = vadd.f32 %v35, %v677
  %v716 = vadd.f32 %v36, %v680
  %v717 = vadd.f32 %v37, %v685
  %v718 = vadd.f32 %v38, %v688
  %v719 = vadd.f32 %v39, %v693
  %v720 = vadd.f32 %v40, %v696
  %v721 = vadd.f32 %v41, %v701
  %v722 = vadd.f32 %v42, %v704
  %723 = vst.msk [vmem:[%s7] sm:$0xff] %vm43, %v707
  %724 = vst.msk [vmem:[%s7 + $0x8] sm:$0xff] %vm43, %v708
  %725 = vst.msk [vmem:[%s7 + $0x10] sm:$0xff] %vm43, %v709
  %726 = vst.msk [vmem:[%s7 + $0x18] sm:$0xff] %vm43, %v710
  %727 = vst.msk [vmem:[%s7 + $0x20] sm:$0xff] %vm43, %v711
  %728 = vst.msk [vmem:[%s7 + $0x28] sm:$0xff] %vm43, %v712
  %729 = vst.msk [vmem:[%s7 + $0x30] sm:$0xff] %vm43, %v713
  %730 = vst.msk [vmem:[%s7 + $0x38] sm:$0xff] %vm43, %v714
  %731 = vst.msk [vmem:[%s7 + $0x40] sm:$0xff] %vm43, %v715
  %732 = vst.msk [vmem:[%s7 + $0x48] sm:$0xff] %vm43, %v716
  %733 = vst.msk [vmem:[%s7 + $0x50] sm:$0xff] %vm43, %v717
  %734 = vst.msk [vmem:[%s7 + $0x58] sm:$0xff] %vm43, %v718
  %735 = vst.msk [vmem:[%s7 + $0x60] sm:$0xff] %vm43, %v719
  %736 = vst.msk [vmem:[%s7 + $0x68] sm:$0xff] %vm43, %v720
  %737 = vst.msk [vmem:[%s7 + $0x70] sm:$0xff] %vm43, %v721
  %738 = vst.msk [vmem:[%s7 + $0x78] sm:$0xff] %vm43, %v722
  // Predicated region
  $region30: #{basic_layer.5} parent=0 // pred_check
    _
  $region31: #{basic_layer.5} parent=0 // pred_check_branch
    %740 = sbr.rel (0) target = $region33
  $region32: #{basic_layer.5} parent=0 // pred_region
    _
  $region33: #{basic_layer.5} parent=0 // pred_fallthru
    _
  // Predicated region
  $region34: #{basic_layer.5} parent=0 // pred_check
    _
  $region35: #{basic_layer.5} parent=0 // pred_check_branch
    %742 = sbr.rel (0) target = $region37
  $region36: #{basic_layer.5} parent=0 // pred_region
    _
  $region37: #{basic_layer.5} parent=0 // pred_fallthru
    _

// kernel: basic_layer.4
$region0: #{basic_layer.4}
  #allocation0 [shape = 'u32[]', space=smem, size = 0x4, offset = 0x4, fixed_abs, tag = 'smem constant byte address 0x4 - core index']
  #allocation1 [shape = 'u32[144,128]{1,0:T(1,128)}', space=vmem, size = 0x12000, scoped, tag = 'internal scratch']
  %s0 = inlined_call_operand.vmem [shape: f32[2,4,16,32], index: 0, kind: input, shape index: {}]
  %s1 = inlined_call_operand.vmem [shape: f32[4,16,16], index: 1, kind: input, shape index: {}]
  %s2 = inlined_call_operand.vmem [shape: f32[4,16,16], index: 2, kind: input, shape index: {}]
  %s3 = inlined_call_operand.vmem [shape: f32[1,32], index: 3, kind: input, shape index: {}]
  %s4 = inlined_call_operand.vmem [shape: f32[1,32], index: 4, kind: input, shape index: {}]
  %s5 = inlined_call_operand.vmem [shape: bf16[32,96], index: 5, kind: input, shape index: {}]
  %s6 = inlined_call_operand.vmem [shape: f32[1,96], index: 6, kind: input, shape index: {}]
  %s7 = inlined_call_operand.vmem [shape: bf16[32,32], index: 7, kind: input, shape index: {}]
  %s8 = inlined_call_operand.vmem [shape: f32[1,32], index: 8, kind: input, shape index: {}]
  %s9 = inlined_call_operand.vmem [shape: f32[2,4,16,32], index: 9, kind: output, shape index: {}]
  %s10 = sld [smem:[#allocation0]]
  $region69: #{basic_layer.4} parent=0
    _
  %s12 = ssub.s32 1, %s10
  %s13 = scalar_select 0, %s12, %s10
  loop: start=0, step=1, limit=6
  $region2: #{basic_layer.4} parent=0 // loop_pre_header
    _
  $region3: #{basic_layer.4} parent=0 // loop_header
    %s15 = sphi 0, %s19
    %p16 = scmp.ge.s32.totalorder %s15, 6
    %s22 = sphi 0, %s34
    %s23 = sphi 0, %s30
    %s24 = sphi 0, %s22
    %s25 = sphi 0, %s23
    %s26 = sphi 0, %s24
    %s27 = sphi 0, %s25
    %s39 = sphi 0, %s41
    %s42 = sphi 0, %s39
    %s43 = sphi 0, %s42
    %s59 = sphi 0, %s43
    %s63 = sphi 0, %s63
    %s65 = sphi 0, %s63
    %s66 = sphi 0, %s65
    %s80 = sphi 0, %s66
    %s86 = sphi 0, %s88
    %s89 = sphi 0, %s86
    %s90 = sphi 0, %s89
    %s106 = sphi 0, %s90
    %s110 = sphi 0, %s110
    %s112 = sphi 0, %s110
    %s113 = sphi 0, %s112
    %s127 = sphi 0, %s113
    %s131 = sphi 0, %s131
    %s133 = sphi 0, %s131
    %s134 = sphi 0, %s133
    %s148 = sphi 0, %s134
    %s152 = sphi 0, %s152
    %s154 = sphi 0, %s152
    %s155 = sphi 0, %s154
    %s169 = sphi 0, %s155
    %s173 = sphi 0, %s173
    %s175 = sphi 0, %s173
    %s176 = sphi 0, %s175
    %s190 = sphi 0, %s176
    %s194 = sphi 0, %s194
    %s196 = sphi 0, %s194
    %s197 = sphi 0, %s196
    %s211 = sphi 0, %s197
    %s215 = sphi 0, %s215
    %s217 = sphi 0, %s215
    %s218 = sphi 0, %s217
    %s232 = sphi 0, %s218
    %s240 = sphi 0, %s242
    %s243 = sphi 0, %s240
    %s244 = sphi 0, %s243
    %s260 = sphi 0, %s244
  $region4: #{basic_layer.4} parent=0 // loop_header_branch
    %18 = sbr.rel (%p16) target = $region8
  $region5: #{basic_layer.4} parent=0 // loop_body
    %s20 = ssub.s32 %s15, 1
    %s21 = ssub.s32 %s15, 2
    %s28 = sadd.s32 1, %s23
    %p29 = scmp.ge.s32.totalorder %s28, 2
    %s30 = scalar_select %p29, 0, %s28
    %s31 = sadd.s32 1, %s22
    %s32 = scalar_select %p29, %s31, %s22
    %p33 = scmp.ge.s32.totalorder %s32, 2
    %s34 = scalar_select %p33, 0, %s32
    %s35 = ssub.s32 %s22, %s34
    %s36 = ssub.s32 %s23, %s30
    %s37 = sor.u32 %s35, %s36
    %p38 = scmp.eq.s32.totalorder %s37, 0
    %s40 = sadd.s32 %s39, 1
    %s41 = scalar_select %p38, %s39, %s40
    %p44 = pneg %p38
    %p45 = scmp.eq.s32.totalorder %s15, 3
    %p46 = por %p44, %p45
    %p47 = scmp.ne.s32.totalorder %s39, %s42
    %p48 = scmp.eq.s32.totalorder %s15, 0
    %p49 = por %p47, %p48
    %p50 = scmp.ne.s32.totalorder %s39, %s42
    %p51 = scmp.eq.s32.totalorder %s20, 3
    %p52 = por %p50, %p51
    %p53 = scmp.ne.s32.totalorder %s42, %s43
    %p54 = scmp.eq.s32.totalorder %s20, 0
    %p55 = por %p53, %p54
    %p56 = scmp.ne.s32.totalorder %s42, %s43
    %p57 = scmp.eq.s32.totalorder %s21, 3
    %p58 = por %p56, %p57
    %p60 = scmp.ne.s32.totalorder %s43, %s59
    %p61 = scmp.eq.s32.totalorder %s21, 0
    %p62 = por %p60, %p61
    %s64 = sadd.s32 %s63, 1
    %p67 = scmp.eq.s32.totalorder %s15, 3
    %p68 = scmp.ne.s32.totalorder %s63, %s65
    %p69 = scmp.eq.s32.totalorder %s15, 0
    %p70 = por %p68, %p69
    %p71 = scmp.ne.s32.totalorder %s63, %s65
    %p72 = scmp.eq.s32.totalorder %s20, 3
    %p73 = por %p71, %p72
    %p74 = scmp.ne.s32.totalorder %s65, %s66
    %p75 = scmp.eq.s32.totalorder %s20, 0
    %p76 = por %p74, %p75
    %p77 = scmp.ne.s32.totalorder %s65, %s66
    %p78 = scmp.eq.s32.totalorder %s21, 3
    %p79 = por %p77, %p78
    %p81 = scmp.ne.s32.totalorder %s66, %s80
    %p82 = scmp.eq.s32.totalorder %s21, 0
    %p83 = por %p81, %p82
    %s84 = ssub.s32 %s23, %s30
    %p85 = scmp.eq.s32.totalorder %s84, 0
    %s87 = sadd.s32 %s86, 1
    %s88 = scalar_select %p85, %s86, %s87
    %p91 = pneg %p85
    %p92 = scmp.eq.s32.totalorder %s15, 3
    %p93 = por %p91, %p92
    %p94 = scmp.ne.s32.totalorder %s86, %s89
    %p95 = scmp.eq.s32.totalorder %s15, 0
    %p96 = por %p94, %p95
    %p97 = scmp.ne.s32.totalorder %s86, %s89
    %p98 = scmp.eq.s32.totalorder %s20, 3
    %p99 = por %p97, %p98
    %p100 = scmp.ne.s32.totalorder %s89, %s90
    %p101 = scmp.eq.s32.totalorder %s20, 0
    %p102 = por %p100, %p101
    %p103 = scmp.ne.s32.totalorder %s89, %s90
    %p104 = scmp.eq.s32.totalorder %s21, 3
    %p105 = por %p103, %p104
    %p107 = scmp.ne.s32.totalorder %s90, %s106
    %p108 = scmp.eq.s32.totalorder %s21, 0
    %p109 = por %p107, %p108
    %s111 = sadd.s32 %s110, 1
    %p114 = scmp.eq.s32.totalorder %s15, 3
    %p115 = scmp.ne.s32.totalorder %s110, %s112
    %p116 = scmp.eq.s32.totalorder %s15, 0
    %p117 = por %p115, %p116
    %p118 = scmp.ne.s32.totalorder %s110, %s112
    %p119 = scmp.eq.s32.totalorder %s20, 3
    %p120 = por %p118, %p119
    %p121 = scmp.ne.s32.totalorder %s112, %s113
    %p122 = scmp.eq.s32.totalorder %s20, 0
    %p123 = por %p121, %p122
    %p124 = scmp.ne.s32.totalorder %s112, %s113
    %p125 = scmp.eq.s32.totalorder %s21, 3
    %p126 = por %p124, %p125
    %p128 = scmp.ne.s32.totalorder %s113, %s127
    %p129 = scmp.eq.s32.totalorder %s21, 0
    %p130 = por %p128, %p129
    %s132 = sadd.s32 %s131, 1
    %p135 = scmp.eq.s32.totalorder %s15, 3
    %p136 = scmp.ne.s32.totalorder %s131, %s133
    %p137 = scmp.eq.s32.totalorder %s15, 0
    %p138 = por %p136, %p137
    %p139 = scmp.ne.s32.totalorder %s131, %s133
    %p140 = scmp.eq.s32.totalorder %s20, 3
    %p141 = por %p139, %p140
    %p142 = scmp.ne.s32.totalorder %s133, %s134
    %p143 = scmp.eq.s32.totalorder %s20, 0
    %p144 = por %p142, %p143
    %p145 = scmp.ne.s32.totalorder %s133, %s134
    %p146 = scmp.eq.s32.totalorder %s21, 3
    %p147 = por %p145, %p146
    %p149 = scmp.ne.s32.totalorder %s134, %s148
    %p150 = scmp.eq.s32.totalorder %s21, 0
    %p151 = por %p149, %p150
    %s153 = sadd.s32 %s152, 1
    %p156 = scmp.eq.s32.totalorder %s15, 3
    %p157 = scmp.ne.s32.totalorder %s152, %s154
    %p158 = scmp.eq.s32.totalorder %s15, 0
    %p159 = por %p157, %p158
    %p160 = scmp.ne.s32.totalorder %s152, %s154
    %p161 = scmp.eq.s32.totalorder %s20, 3
    %p162 = por %p160, %p161
    %p163 = scmp.ne.s32.totalorder %s154, %s155
    %p164 = scmp.eq.s32.totalorder %s20, 0
    %p165 = por %p163, %p164
    %p166 = scmp.ne.s32.totalorder %s154, %s155
    %p167 = scmp.eq.s32.totalorder %s21, 3
    %p168 = por %p166, %p167
    %p170 = scmp.ne.s32.totalorder %s155, %s169
    %p171 = scmp.eq.s32.totalorder %s21, 0
    %p172 = por %p170, %p171
    %s174 = sadd.s32 %s173, 1
    %p177 = scmp.eq.s32.totalorder %s15, 3
    %p178 = scmp.ne.s32.totalorder %s173, %s175
    %p179 = scmp.eq.s32.totalorder %s15, 0
    %p180 = por %p178, %p179
    %p181 = scmp.ne.s32.totalorder %s173, %s175
    %p182 = scmp.eq.s32.totalorder %s20, 3
    %p183 = por %p181, %p182
    %p184 = scmp.ne.s32.totalorder %s175, %s176
    %p185 = scmp.eq.s32.totalorder %s20, 0
    %p186 = por %p184, %p185
    %p187 = scmp.ne.s32.totalorder %s175, %s176
    %p188 = scmp.eq.s32.totalorder %s21, 3
    %p189 = por %p187, %p188
    %p191 = scmp.ne.s32.totalorder %s176, %s190
    %p192 = scmp.eq.s32.totalorder %s21, 0
    %p193 = por %p191, %p192
    %s195 = sadd.s32 %s194, 1
    %p198 = scmp.eq.s32.totalorder %s15, 3
    %p199 = scmp.ne.s32.totalorder %s194, %s196
    %p200 = scmp.eq.s32.totalorder %s15, 0
    %p201 = por %p199, %p200
    %p202 = scmp.ne.s32.totalorder %s194, %s196
    %p203 = scmp.eq.s32.totalorder %s20, 3
    %p204 = por %p202, %p203
    %p205 = scmp.ne.s32.totalorder %s196, %s197
    %p206 = scmp.eq.s32.totalorder %s20, 0
    %p207 = por %p205, %p206
    %p208 = scmp.ne.s32.totalorder %s196, %s197
    %p209 = scmp.eq.s32.totalorder %s21, 3
    %p210 = por %p208, %p209
    %p212 = scmp.ne.s32.totalorder %s197, %s211
    %p213 = scmp.eq.s32.totalorder %s21, 0
    %p214 = por %p212, %p213
    %s216 = sadd.s32 %s215, 1
    %p219 = scmp.eq.s32.totalorder %s15, 3
    %p220 = scmp.ne.s32.totalorder %s215, %s217
    %p221 = scmp.eq.s32.totalorder %s15, 0
    %p222 = por %p220, %p221
    %p223 = scmp.ne.s32.totalorder %s215, %s217
    %p224 = scmp.eq.s32.totalorder %s20, 3
    %p225 = por %p223, %p224
    %p226 = scmp.ne.s32.totalorder %s217, %s218
    %p227 = scmp.eq.s32.totalorder %s20, 0
    %p228 = por %p226, %p227
    %p229 = scmp.ne.s32.totalorder %s217, %s218
    %p230 = scmp.eq.s32.totalorder %s21, 3
    %p231 = por %p229, %p230
    %p233 = scmp.ne.s32.totalorder %s218, %s232
    %p234 = scmp.eq.s32.totalorder %s21, 0
    %p235 = por %p233, %p234
    %s236 = ssub.s32 %s22, %s34
    %s237 = ssub.s32 %s23, %s30
    %s238 = sor.u32 %s236, %s237
    %p239 = scmp.eq.s32.totalorder %s238, 0
    %s241 = sadd.s32 %s240, 1
    %s242 = scalar_select %p239, %s240, %s241
    %p245 = pneg %p239
    %p246 = scmp.eq.s32.totalorder %s15, 3
    %p247 = por %p245, %p246
    %p248 = scmp.ne.s32.totalorder %s240, %s243
    %p249 = scmp.eq.s32.totalorder %s15, 0
    %p250 = por %p248, %p249
    %p251 = scmp.ne.s32.totalorder %s240, %s243
    %p252 = scmp.eq.s32.totalorder %s20, 3
    %p253 = por %p251, %p252
    %p254 = scmp.ne.s32.totalorder %s243, %s244
    %p255 = scmp.eq.s32.totalorder %s20, 0
    %p256 = por %p254, %p255
    %p257 = scmp.ne.s32.totalorder %s243, %s244
    %p258 = scmp.eq.s32.totalorder %s21, 3
    %p259 = por %p257, %p258
    %p261 = scmp.ne.s32.totalorder %s244, %s260
    %p262 = scmp.eq.s32.totalorder %s21, 0
    %p263 = por %p261, %p262
    %p264 = scmp.le.s32.totalorder 1, %s15
    %p265 = scmp.lt.s32.totalorder %s15, 5
    %p266 = pnand %p264, %p265
    %p267 = pneg %p266
    // Predicated region
    $region9: #{basic_layer.4} parent=5 // pred_check
      _
    $region10: #{basic_layer.4} parent=5 // pred_check_branch
      %269 = sbr.rel (%p266) target = $region12
    $region11: #{basic_layer.4} parent=5 // pred_region
      %s270 = ssub.s32 %s15, 1
      // Predicated region
      $region13: #{basic_layer.4} parent=11 // pred_check
        %p271 = pneg %p76
      $region14: #{basic_layer.4} parent=11 // pred_check_branch
        %273 = sbr.rel (%p271) target = $region16
      $region15: #{basic_layer.4} parent=11 // pred_region
        _
      $region16: #{basic_layer.4} parent=11 // pred_fallthru
        _
      // Predicated region
      $region17: #{basic_layer.4} parent=11 // pred_check
        %p274 = pneg %p123
      $region18: #{basic_layer.4} parent=11 // pred_check_branch
        %276 = sbr.rel (%p274) target = $region20
      $region19: #{basic_layer.4} parent=11 // pred_region
        _
      $region20: #{basic_layer.4} parent=11 // pred_fallthru
        _
      // Predicated region
      $region21: #{basic_layer.4} parent=11 // pred_check
        %p277 = pneg %p144
      $region22: #{basic_layer.4} parent=11 // pred_check_branch
        %279 = sbr.rel (%p277) target = $region24
      $region23: #{basic_layer.4} parent=11 // pred_region
        _
      $region24: #{basic_layer.4} parent=11 // pred_fallthru
        _
      // Predicated region
      $region25: #{basic_layer.4} parent=11 // pred_check
        %p280 = pneg %p165
      $region26: #{basic_layer.4} parent=11 // pred_check_branch
        %282 = sbr.rel (%p280) target = $region28
      $region27: #{basic_layer.4} parent=11 // pred_region
        _
      $region28: #{basic_layer.4} parent=11 // pred_fallthru
        _
      // Predicated region
      $region29: #{basic_layer.4} parent=11 // pred_check
        %p283 = pneg %p186
      $region30: #{basic_layer.4} parent=11 // pred_check_branch
        %285 = sbr.rel (%p283) target = $region32
      $region31: #{basic_layer.4} parent=11 // pred_region
        _
      $region32: #{basic_layer.4} parent=11 // pred_fallthru
        _
      // Predicated region
      $region33: #{basic_layer.4} parent=11 // pred_check
        %p286 = pneg %p207
      $region34: #{basic_layer.4} parent=11 // pred_check_branch
        %288 = sbr.rel (%p286) target = $region36
      $region35: #{basic_layer.4} parent=11 // pred_region
        _
      $region36: #{basic_layer.4} parent=11 // pred_fallthru
        _
      // Predicated region
      $region37: #{basic_layer.4} parent=11 // pred_check
        %p289 = pneg %p228
      $region38: #{basic_layer.4} parent=11 // pred_check_branch
        %291 = sbr.rel (%p289) target = $region40
      $region39: #{basic_layer.4} parent=11 // pred_region
        _
      $region40: #{basic_layer.4} parent=11 // pred_fallthru
        _
    $region12: #{basic_layer.4} parent=5 // pred_fallthru
      _
    %p292 = scmp.lt.s32.totalorder %s15, 4
    // Predicated region
    $region41: #{basic_layer.4} parent=5 // pred_check
      %p293 = pneg %p292
    $region42: #{basic_layer.4} parent=5 // pred_check_branch
      %295 = sbr.rel (%p293) target = $region44
    $region43: #{basic_layer.4} parent=5 // pred_region
      // Predicated region
      $region45: #{basic_layer.4} parent=43 // pred_check
        %p296 = pneg %p49
      $region46: #{basic_layer.4} parent=43 // pred_check_branch
        %298 = sbr.rel (%p296) target = $region48
      $region47: #{basic_layer.4} parent=43 // pred_region
        %s299 = smul.u32 2, %s23
        %p300 = scmp.lt.s32.totalorder %s22, 1
        %s301 = scalar_select %p300, %s22, 1
        %p302 = scmp.lt.s32.totalorder %s299, 3
        %s303 = scalar_select %p302, %s299, 3
        %s304 = smul.addr %s303, 2
        %s305 = smul.addr %s301, 8
        %s306 = sadd.s32 %s304, %s305
        %s307 = smul.addr %s306, 8
        %s308 = scalar_lea.vmem %s0, %s307
        %s309 = smul.u32 2, %s23
      $region48: #{basic_layer.4} parent=43 // pred_fallthru
        _
      // Predicated region
      $region49: #{basic_layer.4} parent=43 // pred_check
        %p310 = pneg %p96
      $region50: #{basic_layer.4} parent=43 // pred_check_branch
        %312 = sbr.rel (%p310) target = $region52
      $region51: #{basic_layer.4} parent=43 // pred_region
        %s313 = smul.u32 2, %s23
        %p314 = scmp.lt.s32.totalorder %s313, 3
        %s315 = scalar_select %p314, %s313, 3
        %s316 = smul.addr %s315, 2
        %s317 = smul.addr %s316, 8
        %s318 = scalar_lea.vmem %s2, %s317
        %s319 = smul.u32 2, %s23
      $region52: #{basic_layer.4} parent=43 // pred_fallthru
        _
    $region44: #{basic_layer.4} parent=5 // pred_fallthru
      _
    %p320 = scmp.le.s32.totalorder 1, %s15
    %p321 = scmp.lt.s32.totalorder %s15, 5
    %p322 = pnand %p320, %p321
    %p323 = pneg %p322
    // Predicated region
    $region53: #{basic_layer.4} parent=5 // pred_check
      _
    $region54: #{basic_layer.4} parent=5 // pred_check_branch
      %325 = sbr.rel (%p322) target = $region56
    $region55: #{basic_layer.4} parent=5 // pred_region
      %s326 = ssub.s32 %s15, 1
      %s327 = smul.u32 2, %s25
      %p328 = scmp.lt.s32.totalorder %s24, 1
      %s329 = scalar_select %p328, %s24, 1
      %p330 = scmp.lt.s32.totalorder %s327, 3
      %s331 = scalar_select %p330, %s327, 3
      %s332 = smul.addr %s331, 2
      %s333 = smul.addr %s329, 8
      %s334 = sadd.s32 %s332, %s333
      %s335 = smul.addr %s334, 8
      %s336 = scalar_lea.vmem %s0, %s335
      %p337 = pneg %p55
      %p338 = pneg %p52
      %p339 = pneg %p76
      %p340 = pneg %p73
      %s341 = smul.u32 2, %s25
      %p342 = scmp.lt.s32.totalorder %s341, 3
      %s343 = scalar_select %p342, %s341, 3
      %s344 = smul.addr %s343, 2
      %s345 = smul.addr %s344, 8
      %s346 = scalar_lea.vmem %s2, %s345
      %p347 = pneg %p102
      %p348 = pneg %p99
      %p349 = pneg %p123
      %p350 = pneg %p120
      %p351 = pneg %p144
      %p352 = pneg %p141
      %p353 = pneg %p165
      %p354 = pneg %p162
      %p355 = pneg %p186
      %p356 = pneg %p183
      %p357 = pneg %p207
      %p358 = pneg %p204
      %p359 = pneg %p228
      %p360 = pneg %p225
      %p361 = pneg %p256
      %p362 = pneg %p253
      %s363 = smul.u32 2, %s25
      %p364 = scmp.lt.s32.totalorder %s24, 1
      %s365 = scalar_select %p364, %s24, 1
      %p366 = scmp.lt.s32.totalorder %s363, 3
      %s367 = scalar_select %p366, %s363, 3
      %s368 = smul.addr %s367, 2
      %s369 = smul.addr %s365, 8
      %s370 = sadd.s32 %s368, %s369
      %s371 = smul.addr %s370, 8
      %s372 = scalar_lea.vmem %s9, %s371
      %s373 = smul.u32 2, %s25
      %p374 = scmp.lt.s32.totalorder %s24, 1
      %s375 = scalar_select %p374, %s24, 1
      %p376 = scmp.lt.s32.totalorder %s373, 3
      %s377 = scalar_select %p376, %s373, 3
      %s378 = smul.addr %s377, 2
      %s379 = smul.addr %s375, 8
      %s380 = sadd.s32 %s378, %s379
      %s381 = smul.addr %s380, 8
      %s382 = scalar_lea.vmem %s0, %s381
      %s383 = smul.u32 2, %s25
      %s384 = smul.u32 2, %s25
      %p385 = scmp.lt.s32.totalorder %s384, 3
      %s386 = scalar_select %p385, %s384, 3
      %s387 = smul.addr %s386, 2
      %s388 = smul.addr %s387, 8
      %s389 = scalar_lea.vmem %s2, %s388
      %s390 = smul.u32 2, %s25
      %s391 = smul.u32 2, %s25
      %p392 = scmp.lt.s32.totalorder %s24, 1
      %s393 = scalar_select %p392, %s24, 1
      %p394 = scmp.lt.s32.totalorder %s391, 3
      %s395 = scalar_select %p394, %s391, 3
      %s396 = smul.addr %s395, 2
      %s397 = smul.addr %s393, 8
      %s398 = sadd.s32 %s396, %s397
      %s399 = smul.addr %s398, 8
      %s400 = scalar_lea.vmem %s9, %s399
      %s401 = smul.u32 2, %s25
      %v403 = vld [vmem:[%s382] sm:$0xff]
      %v404 = vld [vmem:[%s382 + $0x8] sm:$0xff]
      %v405 = vld [vmem:[%s382 + $0x10] sm:$0xff]
      %v406 = vld [vmem:[%s382 + $0x18] sm:$0xff]
      %vm407 = vcmask 261120
      %v408 = vsel %vm407, %v403, 0.0
      %409 = vadd.xlane.f32.xlu0 %v408
      %v410 = vpop.xlane.xlu0 %409
      %v411 = vsel %vm407, %v404, 0.0
      %412 = vadd.xlane.f32.xlu0 %v411
      %v413 = vpop.xlane.xlu0 %412
      %v414 = vsel %vm407, %v405, 0.0
      %415 = vadd.xlane.f32.xlu0 %v414
      %v416 = vpop.xlane.xlu0 %415
      %v417 = vsel %vm407, %v406, 0.0
      %418 = vadd.xlane.f32.xlu0 %v417
      %v419 = vpop.xlane.xlu0 %418
      %v420 = vrcp.pop 32.0
      %v421 = vmul.f32 %v410, %v420
      %v422 = vmul.f32 %v413, %v420
      %v423 = vmul.f32 %v416, %v420
      %v424 = vmul.f32 %v419, %v420
      %v425 = vsub.f32 %v403, %v421
      %v426 = vsub.f32 %v404, %v422
      %v427 = vsub.f32 %v405, %v423
      %v428 = vsub.f32 %v406, %v424
      %v429 = vmul.f32 %v425, %v425
      %v430 = vmul.f32 %v426, %v426
      %v431 = vmul.f32 %v427, %v427
      %v432 = vmul.f32 %v428, %v428
      %v433 = vsel %vm407, %v429, 0.0
      %434 = vadd.xlane.f32.xlu0 %v433
      %v435 = vpop.xlane.xlu0 %434
      %v436 = vsel %vm407, %v430, 0.0
      %437 = vadd.xlane.f32.xlu0 %v436
      %v438 = vpop.xlane.xlu0 %437
      %v439 = vsel %vm407, %v431, 0.0
      %440 = vadd.xlane.f32.xlu0 %v439
      %v441 = vpop.xlane.xlu0 %440
      %v442 = vsel %vm407, %v432, 0.0
      %443 = vadd.xlane.f32.xlu0 %v442
      %v444 = vpop.xlane.xlu0 %443
      %v445 = vmul.f32 %v435, %v420
      %v446 = vmul.f32 %v438, %v420
      %v447 = vmul.f32 %v441, %v420
      %v448 = vmul.f32 %v444, %v420
      %v449 = vadd.f32 %v445, 1e-05
      %v450 = vadd.f32 %v446, 1e-05
      %v451 = vadd.f32 %v447, 1e-05
      %v452 = vadd.f32 %v448, 1e-05
      %v453 = vrsqrt.pop %v449
      %v454 = vrsqrt.pop %v450
      %v455 = vrsqrt.pop %v451
      %v456 = vrsqrt.pop %v452
      %v457 = vmul.f32 %v425, %v453
      %v458 = vmul.f32 %v426, %v454
      %v459 = vmul.f32 %v427, %v455
      %v460 = vmul.f32 %v428, %v456
      %v461 = vld [vmem:[%s3] sm:$0x1]
      %v463 = vlaneseq
      %v464 = vshrl.u32 %v463, 7
      %v465 = vsub.s32 0, %v464
      %v466 = vrot.slane %v461, %v465
      %v468 = vmul.f32 %v457, %v466
      %v469 = vmul.f32 %v458, %v466
      %v470 = vmul.f32 %v459, %v466
      %v471 = vmul.f32 %v460, %v466
      %v472 = vld [vmem:[%s4] sm:$0x1]
      %v474 = vlaneseq
      %v475 = vshrl.u32 %v474, 7
      %v476 = vsub.s32 0, %v475
      %v477 = vrot.slane %v472, %v476
      %v479 = vadd.f32 %v468, %v477
      %v480 = vadd.f32 %v469, %v477
      %v481 = vadd.f32 %v470, %v477
      %v482 = vadd.f32 %v471, %v477
      %v483 = vpack.c.bf16 %v480, %v479
      %v484 = vpack.c.bf16 %v482, %v481
      %v485 = vld [vmem:[%s5] sm:$0xf]
      %v486 = vld [vmem:[%s5 + $0x4] sm:$0xf]
      %v487 = vld [vmem:[%s5 + $0x8] sm:$0xf]
      %v488 = vld [vmem:[%s5 + $0xc] sm:$0xf]
      %v489 = vld [vmem:[%s6] sm:$0x1]
      %v491 = vlaneseq
      %v492 = vshrl.u32 %v491, 7
      %v493 = vsub.s32 0, %v492
      %v494 = vrot.slane %v489, %v493
      %v500 = vunpack.c.l.b16 %v485
      %v501 = vunpack.c.l.b16 %v486
      %v502 = vunpack.c.l.b16 %v487
      %v503 = vunpack.c.l.b16 %v488
      %v504 = vpack.c.b16 %v501, %v500
      %v505 = vpack.c.b16 %v503, %v502
      %v509 = vsel %vm407, %v483, 0
      %v512 = vsel %vm407, %v484, 0
      %514 = vmatprep.subr.bf16.mxu0 0
      %515 = vmatpush1.bf16.msra.mxu0 0
      %516 = vmatprep.subr.bf16.mxu0 0
      %517 = vmatpush1.bf16.msra.mxu0 0
      %518 = vmatprep.subr.bf16.mxu0 0
      %519 = vmatpush1.bf16.msra.mxu0 0
      %520 = vmatprep.subr.bf16.mxu0 0
      %521 = vmatpush1.bf16.msra.mxu0 0
      %522 = vmatprep.subr.bf16.mxu0 0
      %523 = vmatpush1.bf16.msra.mxu0 0
      %524 = vmatprep.subr.bf16.mxu0 0
      %525 = vmatpush1.bf16.msra.mxu0 0
      %526 = vmatprep.subr.bf16.mxu0 0
      %527 = vmatpush1.bf16.msra.mxu0 %v505
      %528 = vmatprep.subr.bf16.mxu0 0
      %529 = vmatpush1.bf16.msra.mxu0 %v504
      %530 = vmatprep.subr.bf16.mxu0 0
      %531 = vmatpush2.bf16.msra.mxu0 0
      %532 = vmatprep.subr.bf16.mxu0 0
      %533 = vmatpush2.bf16.msra.mxu0 0
      %534 = vmatprep.subr.bf16.mxu0 0
      %535 = vmatpush2.bf16.msra.mxu0 0
      %536 = vmatprep.subr.bf16.mxu0 0
      %537 = vmatpush2.bf16.msra.mxu0 0
      %538 = vmatprep.subr.bf16.mxu0 0
      %539 = vmatpush2.bf16.msra.mxu0 0
      %540 = vmatprep.subr.bf16.mxu0 0
      %541 = vmatpush2.bf16.msra.mxu0 0
      %542 = vmatprep.subr.bf16.mxu0 0
      %543 = vmatpush2.bf16.msra.mxu0 0
      %544 = vmatprep.subr.bf16.mxu0 0
      %545 = vmatpush2.bf16.msra.mxu0 0
      %546 = vmatprep.mubr.bf16.mxu0 0
      %547 = vmatmul.mubr.bf16.gmra.mxu0 %v509
      %v548 = vpop.f32.mrf.mxu0
      %v549 = vadd.f32 %v494, %v548
      %v550 = vpop.f32.mrf.mxu0
      %v551 = vpop.f32.mrf.mxu0
      %v552 = vadd.f32 %v494, %v551
      %v553 = vpop.f32.mrf.mxu0
      %554 = vmatprep.mubr.bf16.mxu0 0
      %555 = vmatmul.mubr.bf16.gmra.mxu0 %v512
      %v556 = vpop.f32.mrf.mxu0
      %v557 = vadd.f32 %v494, %v556
      %v558 = vpop.f32.mrf.mxu0
      %v559 = vpop.f32.mrf.mxu0
      %v560 = vadd.f32 %v494, %v559
      %v561 = vpop.f32.mrf.mxu0
      %562 = vdwg.mxu0
      %567 = vrot.lane.b32.xlu0 %v549, 120
      %v568 = vpop.permute.xlu0 %567
      %569 = vrot.lane.b32.xlu0 %v552, 120
      %v570 = vpop.permute.xlu0 %569
      %571 = vrot.lane.b32.xlu0 %v557, 120
      %v572 = vpop.permute.xlu0 %571
      %573 = vrot.lane.b32.xlu0 %v560, 120
      %v574 = vpop.permute.xlu0 %573
      %579 = vrot.lane.b32.xlu0 %v549, 112
      %v580 = vpop.permute.xlu0 %579
      %581 = vrot.lane.b32.xlu0 %v552, 112
      %v582 = vpop.permute.xlu0 %581
      %583 = vrot.lane.b32.xlu0 %v557, 112
      %v584 = vpop.permute.xlu0 %583
      %585 = vrot.lane.b32.xlu0 %v560, 112
      %v586 = vpop.permute.xlu0 %585
      %591 = vrot.lane.b32.xlu0 %v549, 104
      %v592 = vpop.permute.xlu0 %591
      %593 = vrot.lane.b32.xlu0 %v552, 104
      %v594 = vpop.permute.xlu0 %593
      %595 = vrot.lane.b32.xlu0 %v557, 104
      %v596 = vpop.permute.xlu0 %595
      %597 = vrot.lane.b32.xlu0 %v560, 104
      %v598 = vpop.permute.xlu0 %597
      %603 = vrot.lane.b32.xlu0 %v549, 96
      %v604 = vpop.permute.xlu0 %603
      %605 = vrot.lane.b32.xlu0 %v552, 96
      %v606 = vpop.permute.xlu0 %605
      %607 = vrot.lane.b32.xlu0 %v557, 96
      %v608 = vpop.permute.xlu0 %607
      %609 = vrot.lane.b32.xlu0 %v560, 96
      %v610 = vpop.permute.xlu0 %609
      %615 = vrot.lane.b32.xlu0 %v549, 88
      %v616 = vpop.permute.xlu0 %615
      %617 = vrot.lane.b32.xlu0 %v552, 88
      %v618 = vpop.permute.xlu0 %617
      %619 = vrot.lane.b32.xlu0 %v557, 88
      %v620 = vpop.permute.xlu0 %619
      %621 = vrot.lane.b32.xlu0 %v560, 88
      %v622 = vpop.permute.xlu0 %621
      %627 = vrot.lane.b32.xlu0 %v549, 80
      %v628 = vpop.permute.xlu0 %627
      %629 = vrot.lane.b32.xlu0 %v552, 80
      %v630 = vpop.permute.xlu0 %629
      %631 = vrot.lane.b32.xlu0 %v557, 80
      %v632 = vpop.permute.xlu0 %631
      %633 = vrot.lane.b32.xlu0 %v560, 80
      %v634 = vpop.permute.xlu0 %633
      %639 = vrot.lane.b32.xlu0 %v549, 72
      %v640 = vpop.permute.xlu0 %639
      %641 = vrot.lane.b32.xlu0 %v552, 72
      %v642 = vpop.permute.xlu0 %641
      %643 = vrot.lane.b32.xlu0 %v557, 72
      %v644 = vpop.permute.xlu0 %643
      %645 = vrot.lane.b32.xlu0 %v560, 72
      %v646 = vpop.permute.xlu0 %645
      %651 = vrot.lane.b32.xlu0 %v549, 64
      %v652 = vpop.permute.xlu0 %651
      %653 = vrot.lane.b32.xlu0 %v552, 64
      %v654 = vpop.permute.xlu0 %653
      %655 = vrot.lane.b32.xlu0 %v557, 64
      %v656 = vpop.permute.xlu0 %655
      %657 = vrot.lane.b32.xlu0 %v560, 64
      %v658 = vpop.permute.xlu0 %657
      %663 = vrot.lane.b32.xlu0 %v549, 56
      %v664 = vpop.permute.xlu0 %663
      %665 = vrot.lane.b32.xlu0 %v552, 56
      %v666 = vpop.permute.xlu0 %665
      %667 = vrot.lane.b32.xlu0 %v557, 56
      %v668 = vpop.permute.xlu0 %667
      %669 = vrot.lane.b32.xlu0 %v560, 56
      %v670 = vpop.permute.xlu0 %669
      %675 = vrot.lane.b32.xlu0 %v549, 48
      %v676 = vpop.permute.xlu0 %675
      %677 = vrot.lane.b32.xlu0 %v552, 48
      %v678 = vpop.permute.xlu0 %677
      %679 = vrot.lane.b32.xlu0 %v557, 48
      %v680 = vpop.permute.xlu0 %679
      %681 = vrot.lane.b32.xlu0 %v560, 48
      %v682 = vpop.permute.xlu0 %681
      %687 = vrot.lane.b32.xlu0 %v549, 40
      %v688 = vpop.permute.xlu0 %687
      %689 = vrot.lane.b32.xlu0 %v552, 40
      %v690 = vpop.permute.xlu0 %689
      %691 = vrot.lane.b32.xlu0 %v557, 40
      %v692 = vpop.permute.xlu0 %691
      %693 = vrot.lane.b32.xlu0 %v560, 40
      %v694 = vpop.permute.xlu0 %693
      %v699 = vcombine.low %v549, %v580
      %v700 = vcombine.high %v549, %v580
      %v702 = vunpack.c.l.s4 1983009808
      %v703 = vunpack.c.0.s8 %v702
      %v704 = vlaneseq
      %v705 = vshrl.u32 %v704, 7
      %v706 = vsub.s32 %v703, %v705
      %v707 = vrot.slane %v699, %v706
      %v709 = vunpack.c.l.s4 1983009808
      %v710 = vunpack.c.0.s8 %v709
      %v711 = vlaneseq
      %v712 = vshrl.u32 %v711, 7
      %v713 = vsub.s32 %v710, %v712
      %v714 = vrot.slane %v700, %v713
      %v715 = vcombine.low %v568, %v592
      %v716 = vcombine.high %v568, %v592
      %v718 = vunpack.c.l.s4 1983009808
      %v719 = vunpack.c.0.s8 %v718
      %v720 = vlaneseq
      %v721 = vshrl.u32 %v720, 7
      %v722 = vsub.s32 %v719, %v721
      %v723 = vrot.slane %v715, %v722
      %v725 = vunpack.c.l.s4 1983009808
      %v726 = vunpack.c.0.s8 %v725
      %v727 = vlaneseq
      %v728 = vshrl.u32 %v727, 7
      %v729 = vsub.s32 %v726, %v728
      %v730 = vrot.slane %v716, %v729
      %v731 = vcombine.low %v604, %v628
      %v732 = vcombine.high %v604, %v628
      %v734 = vunpack.c.l.s4 1983009808
      %v735 = vunpack.c.0.s8 %v734
      %v736 = vlaneseq
      %v737 = vshrl.u32 %v736, 7
      %v738 = vsub.s32 %v735, %v737
      %v739 = vrot.slane %v731, %v738
      %v741 = vunpack.c.l.s4 1983009808
      %v742 = vunpack.c.0.s8 %v741
      %v743 = vlaneseq
      %v744 = vshrl.u32 %v743, 7
      %v745 = vsub.s32 %v742, %v744
      %v746 = vrot.slane %v732, %v745
      %v747 = vcombine.low %v616, %v640
      %v748 = vcombine.high %v616, %v640
      %v750 = vunpack.c.l.s4 1983009808
      %v751 = vunpack.c.0.s8 %v750
      %v752 = vlaneseq
      %v753 = vshrl.u32 %v752, 7
      %v754 = vsub.s32 %v751, %v753
      %v755 = vrot.slane %v747, %v754
      %v757 = vunpack.c.l.s4 1983009808
      %v758 = vunpack.c.0.s8 %v757
      %v759 = vlaneseq
      %v760 = vshrl.u32 %v759, 7
      %v761 = vsub.s32 %v758, %v760
      %v762 = vrot.slane %v748, %v761
      %v763 = vcombine.low %v707, %v723
      %v764 = vcombine.high %v707, %v723
      %v766 = vunpack.c.l.s4 1934713408
      %v767 = vunpack.c.0.s8 %v766
      %v768 = vlaneseq
      %v769 = vshrl.u32 %v768, 7
      %v770 = vsub.s32 %v767, %v769
      %v771 = vrot.slane %v763, %v770
      %v773 = vunpack.c.l.s4 1934713408
      %v774 = vunpack.c.0.s8 %v773
      %v775 = vlaneseq
      %v776 = vshrl.u32 %v775, 7
      %v777 = vsub.s32 %v774, %v776
      %v778 = vrot.slane %v764, %v777
      %v779 = vcombine.low %v714, %v730
      %v780 = vcombine.high %v714, %v730
      %v782 = vunpack.c.l.s4 1934713408
      %v783 = vunpack.c.0.s8 %v782
      %v784 = vlaneseq
      %v785 = vshrl.u32 %v784, 7
      %v786 = vsub.s32 %v783, %v785
      %v787 = vrot.slane %v779, %v786
      %v789 = vunpack.c.l.s4 1934713408
      %v790 = vunpack.c.0.s8 %v789
      %v791 = vlaneseq
      %v792 = vshrl.u32 %v791, 7
      %v793 = vsub.s32 %v790, %v792
      %v794 = vrot.slane %v780, %v793
      %v795 = vcombine.low %v739, %v755
      %v796 = vcombine.high %v739, %v755
      %v798 = vunpack.c.l.s4 1934713408
      %v799 = vunpack.c.0.s8 %v798
      %v800 = vlaneseq
      %v801 = vshrl.u32 %v800, 7
      %v802 = vsub.s32 %v799, %v801
      %v803 = vrot.slane %v795, %v802
      %v805 = vunpack.c.l.s4 1934713408
      %v806 = vunpack.c.0.s8 %v805
      %v807 = vlaneseq
      %v808 = vshrl.u32 %v807, 7
      %v809 = vsub.s32 %v806, %v808
      %v810 = vrot.slane %v796, %v809
      %v811 = vcombine.low %v746, %v762
      %v812 = vcombine.high %v746, %v762
      %v814 = vunpack.c.l.s4 1934713408
      %v815 = vunpack.c.0.s8 %v814
      %v816 = vlaneseq
      %v817 = vshrl.u32 %v816, 7
      %v818 = vsub.s32 %v815, %v817
      %v819 = vrot.slane %v811, %v818
      %v821 = vunpack.c.l.s4 1934713408
      %v822 = vunpack.c.0.s8 %v821
      %v823 = vlaneseq
      %v824 = vshrl.u32 %v823, 7
      %v825 = vsub.s32 %v822, %v824
      %v826 = vrot.slane %v812, %v825
      %v827 = vcombine.low %v771, %v803
      %v828 = vcombine.high %v771, %v803
      %v829 = vcombine.low %v778, %v810
      %v830 = vcombine.high %v778, %v810
      %v831 = vcombine.low %v787, %v819
      %v832 = vcombine.high %v787, %v819
      %v833 = vcombine.low %v794, %v826
      %v834 = vcombine.high %v794, %v826
      %v835 = vcombine.low %v652, %v676
      %v836 = vcombine.high %v652, %v676
      %v838 = vunpack.c.l.s4 1983009808
      %v839 = vunpack.c.0.s8 %v838
      %v840 = vlaneseq
      %v841 = vshrl.u32 %v840, 7
      %v842 = vsub.s32 %v839, %v841
      %v843 = vrot.slane %v835, %v842
      %v845 = vunpack.c.l.s4 1983009808
      %v846 = vunpack.c.0.s8 %v845
      %v847 = vlaneseq
      %v848 = vshrl.u32 %v847, 7
      %v849 = vsub.s32 %v846, %v848
      %v850 = vrot.slane %v836, %v849
      %v851 = vcombine.low %v664, %v688
      %v852 = vcombine.high %v664, %v688
      %v854 = vunpack.c.l.s4 1983009808
      %v855 = vunpack.c.0.s8 %v854
      %v856 = vlaneseq
      %v857 = vshrl.u32 %v856, 7
      %v858 = vsub.s32 %v855, %v857
      %v859 = vrot.slane %v851, %v858
      %v861 = vunpack.c.l.s4 1983009808
      %v862 = vunpack.c.0.s8 %v861
      %v863 = vlaneseq
      %v864 = vshrl.u32 %v863, 7
      %v865 = vsub.s32 %v862, %v864
      %v866 = vrot.slane %v852, %v865
      %v867 = vcombine.low %v843, %v859
      %v868 = vcombine.high %v843, %v859
      %v870 = vunpack.c.l.s4 1934713408
      %v871 = vunpack.c.0.s8 %v870
      %v872 = vlaneseq
      %v873 = vshrl.u32 %v872, 7
      %v874 = vsub.s32 %v871, %v873
      %v875 = vrot.slane %v867, %v874
      %v877 = vunpack.c.l.s4 1934713408
      %v878 = vunpack.c.0.s8 %v877
      %v879 = vlaneseq
      %v880 = vshrl.u32 %v879, 7
      %v881 = vsub.s32 %v878, %v880
      %v882 = vrot.slane %v868, %v881
      %v883 = vcombine.low %v850, %v866
      %v884 = vcombine.high %v850, %v866
      %v886 = vunpack.c.l.s4 1934713408
      %v887 = vunpack.c.0.s8 %v886
      %v888 = vlaneseq
      %v889 = vshrl.u32 %v888, 7
      %v890 = vsub.s32 %v887, %v889
      %v891 = vrot.slane %v883, %v890
      %v893 = vunpack.c.l.s4 1934713408
      %v894 = vunpack.c.0.s8 %v893
      %v895 = vlaneseq
      %v896 = vshrl.u32 %v895, 7
      %v897 = vsub.s32 %v894, %v896
      %v898 = vrot.slane %v884, %v897
      %v899 = vcombine.high %v875, 0.0
      %v900 = vcombine.high %v882, 0.0
      %v901 = vcombine.high %v891, 0.0
      %v902 = vcombine.high %v898, 0.0
      %v903 = vcombine.low %v552, %v582
      %v904 = vcombine.high %v552, %v582
      %v906 = vunpack.c.l.s4 1983009808
      %v907 = vunpack.c.0.s8 %v906
      %v908 = vlaneseq
      %v909 = vshrl.u32 %v908, 7
      %v910 = vsub.s32 %v907, %v909
      %v911 = vrot.slane %v903, %v910
      %v913 = vunpack.c.l.s4 1983009808
      %v914 = vunpack.c.0.s8 %v913
      %v915 = vlaneseq
      %v916 = vshrl.u32 %v915, 7
      %v917 = vsub.s32 %v914, %v916
      %v918 = vrot.slane %v904, %v917
      %v919 = vcombine.low %v570, %v594
      %v920 = vcombine.high %v570, %v594
      %v922 = vunpack.c.l.s4 1983009808
      %v923 = vunpack.c.0.s8 %v922
      %v924 = vlaneseq
      %v925 = vshrl.u32 %v924, 7
      %v926 = vsub.s32 %v923, %v925
      %v927 = vrot.slane %v919, %v926
      %v929 = vunpack.c.l.s4 1983009808
      %v930 = vunpack.c.0.s8 %v929
      %v931 = vlaneseq
      %v932 = vshrl.u32 %v931, 7
      %v933 = vsub.s32 %v930, %v932
      %v934 = vrot.slane %v920, %v933
      %v935 = vcombine.low %v606, %v630
      %v936 = vcombine.high %v606, %v630
      %v938 = vunpack.c.l.s4 1983009808
      %v939 = vunpack.c.0.s8 %v938
      %v940 = vlaneseq
      %v941 = vshrl.u32 %v940, 7
      %v942 = vsub.s32 %v939, %v941
      %v943 = vrot.slane %v935, %v942
      %v945 = vunpack.c.l.s4 1983009808
      %v946 = vunpack.c.0.s8 %v945
      %v947 = vlaneseq
      %v948 = vshrl.u32 %v947, 7
      %v949 = vsub.s32 %v946, %v948
      %v950 = vrot.slane %v936, %v949
      %v951 = vcombine.low %v618, %v642
      %v952 = vcombine.high %v618, %v642
      %v954 = vunpack.c.l.s4 1983009808
      %v955 = vunpack.c.0.s8 %v954
      %v956 = vlaneseq
      %v957 = vshrl.u32 %v956, 7
      %v958 = vsub.s32 %v955, %v957
      %v959 = vrot.slane %v951, %v958
      %v961 = vunpack.c.l.s4 1983009808
      %v962 = vunpack.c.0.s8 %v961
      %v963 = vlaneseq
      %v964 = vshrl.u32 %v963, 7
      %v965 = vsub.s32 %v962, %v964
      %v966 = vrot.slane %v952, %v965
      %v967 = vcombine.low %v911, %v927
      %v968 = vcombine.high %v911, %v927
      %v970 = vunpack.c.l.s4 1934713408
      %v971 = vunpack.c.0.s8 %v970
      %v972 = vlaneseq
      %v973 = vshrl.u32 %v972, 7
      %v974 = vsub.s32 %v971, %v973
      %v975 = vrot.slane %v967, %v974
      %v977 = vunpack.c.l.s4 1934713408
      %v978 = vunpack.c.0.s8 %v977
      %v979 = vlaneseq
      %v980 = vshrl.u32 %v979, 7
      %v981 = vsub.s32 %v978, %v980
      %v982 = vrot.slane %v968, %v981
      %v983 = vcombine.low %v918, %v934
      %v984 = vcombine.high %v918, %v934
      %v986 = vunpack.c.l.s4 1934713408
      %v987 = vunpack.c.0.s8 %v986
      %v988 = vlaneseq
      %v989 = vshrl.u32 %v988, 7
      %v990 = vsub.s32 %v987, %v989
      %v991 = vrot.slane %v983, %v990
      %v993 = vunpack.c.l.s4 1934713408
      %v994 = vunpack.c.0.s8 %v993
      %v995 = vlaneseq
      %v996 = vshrl.u32 %v995, 7
      %v997 = vsub.s32 %v994, %v996
      %v998 = vrot.slane %v984, %v997
      %v999 = vcombine.low %v943, %v959
      %v1000 = vcombine.high %v943, %v959
      %v1002 = vunpack.c.l.s4 1934713408
      %v1003 = vunpack.c.0.s8 %v1002
      %v1004 = vlaneseq
      %v1005 = vshrl.u32 %v1004, 7
      %v1006 = vsub.s32 %v1003, %v1005
      %v1007 = vrot.slane %v999, %v1006
      %v1009 = vunpack.c.l.s4 1934713408
      %v1010 = vunpack.c.0.s8 %v1009
      %v1011 = vlaneseq
      %v1012 = vshrl.u32 %v1011, 7
      %v1013 = vsub.s32 %v1010, %v1012
      %v1014 = vrot.slane %v1000, %v1013
      %v1015 = vcombine.low %v950, %v966
      %v1016 = vcombine.high %v950, %v966
      %v1018 = vunpack.c.l.s4 1934713408
      %v1019 = vunpack.c.0.s8 %v1018
      %v1020 = vlaneseq
      %v1021 = vshrl.u32 %v1020, 7
      %v1022 = vsub.s32 %v1019, %v1021
      %v1023 = vrot.slane %v1015, %v1022
      %v1025 = vunpack.c.l.s4 1934713408
      %v1026 = vunpack.c.0.s8 %v1025
      %v1027 = vlaneseq
      %v1028 = vshrl.u32 %v1027, 7
      %v1029 = vsub.s32 %v1026, %v1028
      %v1030 = vrot.slane %v1016, %v1029
      %v1031 = vcombine.low %v975, %v1007
      %v1032 = vcombine.high %v975, %v1007
      %v1033 = vcombine.low %v982, %v1014
      %v1034 = vcombine.high %v982, %v1014
      %v1035 = vcombine.low %v991, %v1023
      %v1036 = vcombine.high %v991, %v1023
      %v1037 = vcombine.low %v998, %v1030
      %v1038 = vcombine.high %v998, %v1030
      %v1039 = vcombine.low %v654, %v678
      %v1040 = vcombine.high %v654, %v678
      %v1042 = vunpack.c.l.s4 1983009808
      %v1043 = vunpack.c.0.s8 %v1042
      %v1044 = vlaneseq
      %v1045 = vshrl.u32 %v1044, 7
      %v1046 = vsub.s32 %v1043, %v1045
      %v1047 = vrot.slane %v1039, %v1046
      %v1049 = vunpack.c.l.s4 1983009808
      %v1050 = vunpack.c.0.s8 %v1049
      %v1051 = vlaneseq
      %v1052 = vshrl.u32 %v1051, 7
      %v1053 = vsub.s32 %v1050, %v1052
      %v1054 = vrot.slane %v1040, %v1053
      %v1055 = vcombine.low %v666, %v690
      %v1056 = vcombine.high %v666, %v690
      %v1058 = vunpack.c.l.s4 1983009808
      %v1059 = vunpack.c.0.s8 %v1058
      %v1060 = vlaneseq
      %v1061 = vshrl.u32 %v1060, 7
      %v1062 = vsub.s32 %v1059, %v1061
      %v1063 = vrot.slane %v1055, %v1062
      %v1065 = vunpack.c.l.s4 1983009808
      %v1066 = vunpack.c.0.s8 %v1065
      %v1067 = vlaneseq
      %v1068 = vshrl.u32 %v1067, 7
      %v1069 = vsub.s32 %v1066, %v1068
      %v1070 = vrot.slane %v1056, %v1069
      %v1071 = vcombine.low %v1047, %v1063
      %v1072 = vcombine.high %v1047, %v1063
      %v1074 = vunpack.c.l.s4 1934713408
      %v1075 = vunpack.c.0.s8 %v1074
      %v1076 = vlaneseq
      %v1077 = vshrl.u32 %v1076, 7
      %v1078 = vsub.s32 %v1075, %v1077
      %v1079 = vrot.slane %v1071, %v1078
      %v1081 = vunpack.c.l.s4 1934713408
      %v1082 = vunpack.c.0.s8 %v1081
      %v1083 = vlaneseq
      %v1084 = vshrl.u32 %v1083, 7
      %v1085 = vsub.s32 %v1082, %v1084
      %v1086 = vrot.slane %v1072, %v1085
      %v1087 = vcombine.low %v1054, %v1070
      %v1088 = vcombine.high %v1054, %v1070
      %v1090 = vunpack.c.l.s4 1934713408
      %v1091 = vunpack.c.0.s8 %v1090
      %v1092 = vlaneseq
      %v1093 = vshrl.u32 %v1092, 7
      %v1094 = vsub.s32 %v1091, %v1093
      %v1095 = vrot.slane %v1087, %v1094
      %v1097 = vunpack.c.l.s4 1934713408
      %v1098 = vunpack.c.0.s8 %v1097
      %v1099 = vlaneseq
      %v1100 = vshrl.u32 %v1099, 7
      %v1101 = vsub.s32 %v1098, %v1100
      %v1102 = vrot.slane %v1088, %v1101
      %v1103 = vcombine.high %v1079, 0.0
      %v1104 = vcombine.high %v1086, 0.0
      %v1105 = vcombine.high %v1095, 0.0
      %v1106 = vcombine.high %v1102, 0.0
      %v1107 = vcombine.low %v557, %v584
      %v1108 = vcombine.high %v557, %v584
      %v1110 = vunpack.c.l.s4 1983009808
      %v1111 = vunpack.c.0.s8 %v1110
      %v1112 = vlaneseq
      %v1113 = vshrl.u32 %v1112, 7
      %v1114 = vsub.s32 %v1111, %v1113
      %v1115 = vrot.slane %v1107, %v1114
      %v1117 = vunpack.c.l.s4 1983009808
      %v1118 = vunpack.c.0.s8 %v1117
      %v1119 = vlaneseq
      %v1120 = vshrl.u32 %v1119, 7
      %v1121 = vsub.s32 %v1118, %v1120
      %v1122 = vrot.slane %v1108, %v1121
      %v1123 = vcombine.low %v572, %v596
      %v1124 = vcombine.high %v572, %v596
      %v1126 = vunpack.c.l.s4 1983009808
      %v1127 = vunpack.c.0.s8 %v1126
      %v1128 = vlaneseq
      %v1129 = vshrl.u32 %v1128, 7
      %v1130 = vsub.s32 %v1127, %v1129
      %v1131 = vrot.slane %v1123, %v1130
      %v1133 = vunpack.c.l.s4 1983009808
      %v1134 = vunpack.c.0.s8 %v1133
      %v1135 = vlaneseq
      %v1136 = vshrl.u32 %v1135, 7
      %v1137 = vsub.s32 %v1134, %v1136
      %v1138 = vrot.slane %v1124, %v1137
      %v1139 = vcombine.low %v608, %v632
      %v1140 = vcombine.high %v608, %v632
      %v1142 = vunpack.c.l.s4 1983009808
      %v1143 = vunpack.c.0.s8 %v1142
      %v1144 = vlaneseq
      %v1145 = vshrl.u32 %v1144, 7
      %v1146 = vsub.s32 %v1143, %v1145
      %v1147 = vrot.slane %v1139, %v1146
      %v1149 = vunpack.c.l.s4 1983009808
      %v1150 = vunpack.c.0.s8 %v1149
      %v1151 = vlaneseq
      %v1152 = vshrl.u32 %v1151, 7
      %v1153 = vsub.s32 %v1150, %v1152
      %v1154 = vrot.slane %v1140, %v1153
      %v1155 = vcombine.low %v620, %v644
      %v1156 = vcombine.high %v620, %v644
      %v1158 = vunpack.c.l.s4 1983009808
      %v1159 = vunpack.c.0.s8 %v1158
      %v1160 = vlaneseq
      %v1161 = vshrl.u32 %v1160, 7
      %v1162 = vsub.s32 %v1159, %v1161
      %v1163 = vrot.slane %v1155, %v1162
      %v1165 = vunpack.c.l.s4 1983009808
      %v1166 = vunpack.c.0.s8 %v1165
      %v1167 = vlaneseq
      %v1168 = vshrl.u32 %v1167, 7
      %v1169 = vsub.s32 %v1166, %v1168
      %v1170 = vrot.slane %v1156, %v1169
      %v1171 = vcombine.low %v1115, %v1131
      %v1172 = vcombine.high %v1115, %v1131
      %v1174 = vunpack.c.l.s4 1934713408
      %v1175 = vunpack.c.0.s8 %v1174
      %v1176 = vlaneseq
      %v1177 = vshrl.u32 %v1176, 7
      %v1178 = vsub.s32 %v1175, %v1177
      %v1179 = vrot.slane %v1171, %v1178
      %v1181 = vunpack.c.l.s4 1934713408
      %v1182 = vunpack.c.0.s8 %v1181
      %v1183 = vlaneseq
      %v1184 = vshrl.u32 %v1183, 7
      %v1185 = vsub.s32 %v1182, %v1184
      %v1186 = vrot.slane %v1172, %v1185
      %v1187 = vcombine.low %v1122, %v1138
      %v1188 = vcombine.high %v1122, %v1138
      %v1190 = vunpack.c.l.s4 1934713408
      %v1191 = vunpack.c.0.s8 %v1190
      %v1192 = vlaneseq
      %v1193 = vshrl.u32 %v1192, 7
      %v1194 = vsub.s32 %v1191, %v1193
      %v1195 = vrot.slane %v1187, %v1194
      %v1197 = vunpack.c.l.s4 1934713408
      %v1198 = vunpack.c.0.s8 %v1197
      %v1199 = vlaneseq
      %v1200 = vshrl.u32 %v1199, 7
      %v1201 = vsub.s32 %v1198, %v1200
      %v1202 = vrot.slane %v1188, %v1201
      %v1203 = vcombine.low %v1147, %v1163
      %v1204 = vcombine.high %v1147, %v1163
      %v1206 = vunpack.c.l.s4 1934713408
      %v1207 = vunpack.c.0.s8 %v1206
      %v1208 = vlaneseq
      %v1209 = vshrl.u32 %v1208, 7
      %v1210 = vsub.s32 %v1207, %v1209
      %v1211 = vrot.slane %v1203, %v1210
      %v1213 = vunpack.c.l.s4 1934713408
      %v1214 = vunpack.c.0.s8 %v1213
      %v1215 = vlaneseq
      %v1216 = vshrl.u32 %v1215, 7
      %v1217 = vsub.s32 %v1214, %v1216
      %v1218 = vrot.slane %v1204, %v1217
      %v1219 = vcombine.low %v1154, %v1170
      %v1220 = vcombine.high %v1154, %v1170
      %v1222 = vunpack.c.l.s4 1934713408
      %v1223 = vunpack.c.0.s8 %v1222
      %v1224 = vlaneseq
      %v1225 = vshrl.u32 %v1224, 7
      %v1226 = vsub.s32 %v1223, %v1225
      %v1227 = vrot.slane %v1219, %v1226
      %v1229 = vunpack.c.l.s4 1934713408
      %v1230 = vunpack.c.0.s8 %v1229
      %v1231 = vlaneseq
      %v1232 = vshrl.u32 %v1231, 7
      %v1233 = vsub.s32 %v1230, %v1232
      %v1234 = vrot.slane %v1220, %v1233
      %v1235 = vcombine.low %v1179, %v1211
      %v1236 = vcombine.high %v1179, %v1211
      %v1237 = vcombine.low %v1186, %v1218
      %v1238 = vcombine.high %v1186, %v1218
      %v1239 = vcombine.low %v1195, %v1227
      %v1240 = vcombine.high %v1195, %v1227
      %v1241 = vcombine.low %v1202, %v1234
      %v1242 = vcombine.high %v1202, %v1234
      %v1243 = vcombine.low %v656, %v680
      %v1244 = vcombine.high %v656, %v680
      %v1246 = vunpack.c.l.s4 1983009808
      %v1247 = vunpack.c.0.s8 %v1246
      %v1248 = vlaneseq
      %v1249 = vshrl.u32 %v1248, 7
      %v1250 = vsub.s32 %v1247, %v1249
      %v1251 = vrot.slane %v1243, %v1250
      %v1253 = vunpack.c.l.s4 1983009808
      %v1254 = vunpack.c.0.s8 %v1253
      %v1255 = vlaneseq
      %v1256 = vshrl.u32 %v1255, 7
      %v1257 = vsub.s32 %v1254, %v1256
      %v1258 = vrot.slane %v1244, %v1257
      %v1259 = vcombine.low %v668, %v692
      %v1260 = vcombine.high %v668, %v692
      %v1262 = vunpack.c.l.s4 1983009808
      %v1263 = vunpack.c.0.s8 %v1262
      %v1264 = vlaneseq
      %v1265 = vshrl.u32 %v1264, 7
      %v1266 = vsub.s32 %v1263, %v1265
      %v1267 = vrot.slane %v1259, %v1266
      %v1269 = vunpack.c.l.s4 1983009808
      %v1270 = vunpack.c.0.s8 %v1269
      %v1271 = vlaneseq
      %v1272 = vshrl.u32 %v1271, 7
      %v1273 = vsub.s32 %v1270, %v1272
      %v1274 = vrot.slane %v1260, %v1273
      %v1275 = vcombine.low %v1251, %v1267
      %v1276 = vcombine.high %v1251, %v1267
      %v1278 = vunpack.c.l.s4 1934713408
      %v1279 = vunpack.c.0.s8 %v1278
      %v1280 = vlaneseq
      %v1281 = vshrl.u32 %v1280, 7
      %v1282 = vsub.s32 %v1279, %v1281
      %v1283 = vrot.slane %v1275, %v1282
      %v1285 = vunpack.c.l.s4 1934713408
      %v1286 = vunpack.c.0.s8 %v1285
      %v1287 = vlaneseq
      %v1288 = vshrl.u32 %v1287, 7
      %v1289 = vsub.s32 %v1286, %v1288
      %v1290 = vrot.slane %v1276, %v1289
      %v1291 = vcombine.low %v1258, %v1274
      %v1292 = vcombine.high %v1258, %v1274
      %v1294 = vunpack.c.l.s4 1934713408
      %v1295 = vunpack.c.0.s8 %v1294
      %v1296 = vlaneseq
      %v1297 = vshrl.u32 %v1296, 7
      %v1298 = vsub.s32 %v1295, %v1297
      %v1299 = vrot.slane %v1291, %v1298
      %v1301 = vunpack.c.l.s4 1934713408
      %v1302 = vunpack.c.0.s8 %v1301
      %v1303 = vlaneseq
      %v1304 = vshrl.u32 %v1303, 7
      %v1305 = vsub.s32 %v1302, %v1304
      %v1306 = vrot.slane %v1292, %v1305
      %v1307 = vcombine.high %v1283, 0.0
      %v1308 = vcombine.high %v1290, 0.0
      %v1309 = vcombine.high %v1299, 0.0
      %v1310 = vcombine.high %v1306, 0.0
      %v1311 = vcombine.low %v560, %v586
      %v1312 = vcombine.high %v560, %v586
      %v1314 = vunpack.c.l.s4 1983009808
      %v1315 = vunpack.c.0.s8 %v1314
      %v1316 = vlaneseq
      %v1317 = vshrl.u32 %v1316, 7
      %v1318 = vsub.s32 %v1315, %v1317
      %v1319 = vrot.slane %v1311, %v1318
      %v1321 = vunpack.c.l.s4 1983009808
      %v1322 = vunpack.c.0.s8 %v1321
      %v1323 = vlaneseq
      %v1324 = vshrl.u32 %v1323, 7
      %v1325 = vsub.s32 %v1322, %v1324
      %v1326 = vrot.slane %v1312, %v1325
      %v1327 = vcombine.low %v574, %v598
      %v1328 = vcombine.high %v574, %v598
      %v1330 = vunpack.c.l.s4 1983009808
      %v1331 = vunpack.c.0.s8 %v1330
      %v1332 = vlaneseq
      %v1333 = vshrl.u32 %v1332, 7
      %v1334 = vsub.s32 %v1331, %v1333
      %v1335 = vrot.slane %v1327, %v1334
      %v1337 = vunpack.c.l.s4 1983009808
      %v1338 = vunpack.c.0.s8 %v1337
      %v1339 = vlaneseq
      %v1340 = vshrl.u32 %v1339, 7
      %v1341 = vsub.s32 %v1338, %v1340
      %v1342 = vrot.slane %v1328, %v1341
      %v1343 = vcombine.low %v610, %v634
      %v1344 = vcombine.high %v610, %v634
      %v1346 = vunpack.c.l.s4 1983009808
      %v1347 = vunpack.c.0.s8 %v1346
      %v1348 = vlaneseq
      %v1349 = vshrl.u32 %v1348, 7
      %v1350 = vsub.s32 %v1347, %v1349
      %v1351 = vrot.slane %v1343, %v1350
      %v1353 = vunpack.c.l.s4 1983009808
      %v1354 = vunpack.c.0.s8 %v1353
      %v1355 = vlaneseq
      %v1356 = vshrl.u32 %v1355, 7
      %v1357 = vsub.s32 %v1354, %v1356
      %v1358 = vrot.slane %v1344, %v1357
      %v1359 = vcombine.low %v622, %v646
      %v1360 = vcombine.high %v622, %v646
      %v1362 = vunpack.c.l.s4 1983009808
      %v1363 = vunpack.c.0.s8 %v1362
      %v1364 = vlaneseq
      %v1365 = vshrl.u32 %v1364, 7
      %v1366 = vsub.s32 %v1363, %v1365
      %v1367 = vrot.slane %v1359, %v1366
      %v1369 = vunpack.c.l.s4 1983009808
      %v1370 = vunpack.c.0.s8 %v1369
      %v1371 = vlaneseq
      %v1372 = vshrl.u32 %v1371, 7
      %v1373 = vsub.s32 %v1370, %v1372
      %v1374 = vrot.slane %v1360, %v1373
      %v1375 = vcombine.low %v1319, %v1335
      %v1376 = vcombine.high %v1319, %v1335
      %v1378 = vunpack.c.l.s4 1934713408
      %v1379 = vunpack.c.0.s8 %v1378
      %v1380 = vlaneseq
      %v1381 = vshrl.u32 %v1380, 7
      %v1382 = vsub.s32 %v1379, %v1381
      %v1383 = vrot.slane %v1375, %v1382
      %v1385 = vunpack.c.l.s4 1934713408
      %v1386 = vunpack.c.0.s8 %v1385
      %v1387 = vlaneseq
      %v1388 = vshrl.u32 %v1387, 7
      %v1389 = vsub.s32 %v1386, %v1388
      %v1390 = vrot.slane %v1376, %v1389
      %v1391 = vcombine.low %v1326, %v1342
      %v1392 = vcombine.high %v1326, %v1342
      %v1394 = vunpack.c.l.s4 1934713408
      %v1395 = vunpack.c.0.s8 %v1394
      %v1396 = vlaneseq
      %v1397 = vshrl.u32 %v1396, 7
      %v1398 = vsub.s32 %v1395, %v1397
      %v1399 = vrot.slane %v1391, %v1398
      %v1401 = vunpack.c.l.s4 1934713408
      %v1402 = vunpack.c.0.s8 %v1401
      %v1403 = vlaneseq
      %v1404 = vshrl.u32 %v1403, 7
      %v1405 = vsub.s32 %v1402, %v1404
      %v1406 = vrot.slane %v1392, %v1405
      %v1407 = vcombine.low %v1351, %v1367
      %v1408 = vcombine.high %v1351, %v1367
      %v1410 = vunpack.c.l.s4 1934713408
      %v1411 = vunpack.c.0.s8 %v1410
      %v1412 = vlaneseq
      %v1413 = vshrl.u32 %v1412, 7
      %v1414 = vsub.s32 %v1411, %v1413
      %v1415 = vrot.slane %v1407, %v1414
      %v1417 = vunpack.c.l.s4 1934713408
      %v1418 = vunpack.c.0.s8 %v1417
      %v1419 = vlaneseq
      %v1420 = vshrl.u32 %v1419, 7
      %v1421 = vsub.s32 %v1418, %v1420
      %v1422 = vrot.slane %v1408, %v1421
      %v1423 = vcombine.low %v1358, %v1374
      %v1424 = vcombine.high %v1358, %v1374
      %v1426 = vunpack.c.l.s4 1934713408
      %v1427 = vunpack.c.0.s8 %v1426
      %v1428 = vlaneseq
      %v1429 = vshrl.u32 %v1428, 7
      %v1430 = vsub.s32 %v1427, %v1429
      %v1431 = vrot.slane %v1423, %v1430
      %v1433 = vunpack.c.l.s4 1934713408
      %v1434 = vunpack.c.0.s8 %v1433
      %v1435 = vlaneseq
      %v1436 = vshrl.u32 %v1435, 7
      %v1437 = vsub.s32 %v1434, %v1436
      %v1438 = vrot.slane %v1424, %v1437
      %v1439 = vcombine.low %v1383, %v1415
      %v1440 = vcombine.high %v1383, %v1415
      %v1441 = vcombine.low %v1390, %v1422
      %v1442 = vcombine.high %v1390, %v1422
      %v1443 = vcombine.low %v1399, %v1431
      %v1444 = vcombine.high %v1399, %v1431
      %v1445 = vcombine.low %v1406, %v1438
      %v1446 = vcombine.high %v1406, %v1438
      %v1447 = vcombine.low %v658, %v682
      %v1448 = vcombine.high %v658, %v682
      %v1450 = vunpack.c.l.s4 1983009808
      %v1451 = vunpack.c.0.s8 %v1450
      %v1452 = vlaneseq
      %v1453 = vshrl.u32 %v1452, 7
      %v1454 = vsub.s32 %v1451, %v1453
      %v1455 = vrot.slane %v1447, %v1454
      %v1457 = vunpack.c.l.s4 1983009808
      %v1458 = vunpack.c.0.s8 %v1457
      %v1459 = vlaneseq
      %v1460 = vshrl.u32 %v1459, 7
      %v1461 = vsub.s32 %v1458, %v1460
      %v1462 = vrot.slane %v1448, %v1461
      %v1463 = vcombine.low %v670, %v694
      %v1464 = vcombine.high %v670, %v694
      %v1466 = vunpack.c.l.s4 1983009808
      %v1467 = vunpack.c.0.s8 %v1466
      %v1468 = vlaneseq
      %v1469 = vshrl.u32 %v1468, 7
      %v1470 = vsub.s32 %v1467, %v1469
      %v1471 = vrot.slane %v1463, %v1470
      %v1473 = vunpack.c.l.s4 1983009808
      %v1474 = vunpack.c.0.s8 %v1473
      %v1475 = vlaneseq
      %v1476 = vshrl.u32 %v1475, 7
      %v1477 = vsub.s32 %v1474, %v1476
      %v1478 = vrot.slane %v1464, %v1477
      %v1479 = vcombine.low %v1455, %v1471
      %v1480 = vcombine.high %v1455, %v1471
      %v1482 = vunpack.c.l.s4 1934713408
      %v1483 = vunpack.c.0.s8 %v1482
      %v1484 = vlaneseq
      %v1485 = vshrl.u32 %v1484, 7
      %v1486 = vsub.s32 %v1483, %v1485
      %v1487 = vrot.slane %v1479, %v1486
      %v1489 = vunpack.c.l.s4 1934713408
      %v1490 = vunpack.c.0.s8 %v1489
      %v1491 = vlaneseq
      %v1492 = vshrl.u32 %v1491, 7
      %v1493 = vsub.s32 %v1490, %v1492
      %v1494 = vrot.slane %v1480, %v1493
      %v1495 = vcombine.low %v1462, %v1478
      %v1496 = vcombine.high %v1462, %v1478
      %v1498 = vunpack.c.l.s4 1934713408
      %v1499 = vunpack.c.0.s8 %v1498
      %v1500 = vlaneseq
      %v1501 = vshrl.u32 %v1500, 7
      %v1502 = vsub.s32 %v1499, %v1501
      %v1503 = vrot.slane %v1495, %v1502
      %v1505 = vunpack.c.l.s4 1934713408
      %v1506 = vunpack.c.0.s8 %v1505
      %v1507 = vlaneseq
      %v1508 = vshrl.u32 %v1507, 7
      %v1509 = vsub.s32 %v1506, %v1508
      %v1510 = vrot.slane %v1496, %v1509
      %v1511 = vcombine.high %v1487, 0.0
      %v1512 = vcombine.high %v1494, 0.0
      %v1513 = vcombine.high %v1503, 0.0
      %v1514 = vcombine.high %v1510, 0.0
      %v1515 = vcombine.low %v827, %v829
      %v1516 = vcombine.high %v827, %v829
      %v1518 = vunpack.c.l.s4 1983009808
      %v1519 = vunpack.c.0.s8 %v1518
      %v1520 = vlaneseq
      %v1521 = vshrl.u32 %v1520, 7
      %v1522 = vsub.s32 %v1519, %v1521
      %v1523 = vrot.slane %v1515, %v1522
      %v1525 = vunpack.c.l.s4 1983009808
      %v1526 = vunpack.c.0.s8 %v1525
      %v1527 = vlaneseq
      %v1528 = vshrl.u32 %v1527, 7
      %v1529 = vsub.s32 %v1526, %v1528
      %v1530 = vrot.slane %v1516, %v1529
      %v1531 = vcombine.low %v828, %v830
      %v1532 = vcombine.high %v828, %v830
      %v1534 = vunpack.c.l.s4 1983009808
      %v1535 = vunpack.c.0.s8 %v1534
      %v1536 = vlaneseq
      %v1537 = vshrl.u32 %v1536, 7
      %v1538 = vsub.s32 %v1535, %v1537
      %v1539 = vrot.slane %v1531, %v1538
      %v1541 = vunpack.c.l.s4 1983009808
      %v1542 = vunpack.c.0.s8 %v1541
      %v1543 = vlaneseq
      %v1544 = vshrl.u32 %v1543, 7
      %v1545 = vsub.s32 %v1542, %v1544
      %v1546 = vrot.slane %v1532, %v1545
      %v1547 = vcombine.low %v831, %v833
      %v1548 = vcombine.high %v831, %v833
      %v1550 = vunpack.c.l.s4 1983009808
      %v1551 = vunpack.c.0.s8 %v1550
      %v1552 = vlaneseq
      %v1553 = vshrl.u32 %v1552, 7
      %v1554 = vsub.s32 %v1551, %v1553
      %v1555 = vrot.slane %v1547, %v1554
      %v1557 = vunpack.c.l.s4 1983009808
      %v1558 = vunpack.c.0.s8 %v1557
      %v1559 = vlaneseq
      %v1560 = vshrl.u32 %v1559, 7
      %v1561 = vsub.s32 %v1558, %v1560
      %v1562 = vrot.slane %v1548, %v1561
      %v1563 = vcombine.low %v832, %v834
      %v1564 = vcombine.high %v832, %v834
      %v1566 = vunpack.c.l.s4 1983009808
      %v1567 = vunpack.c.0.s8 %v1566
      %v1568 = vlaneseq
      %v1569 = vshrl.u32 %v1568, 7
      %v1570 = vsub.s32 %v1567, %v1569
      %v1571 = vrot.slane %v1563, %v1570
      %v1573 = vunpack.c.l.s4 1983009808
      %v1574 = vunpack.c.0.s8 %v1573
      %v1575 = vlaneseq
      %v1576 = vshrl.u32 %v1575, 7
      %v1577 = vsub.s32 %v1574, %v1576
      %v1578 = vrot.slane %v1564, %v1577
      %v1579 = vcombine.low %v1523, %v1539
      %v1580 = vcombine.high %v1523, %v1539
      %v1582 = vunpack.c.l.s4 1934713408
      %v1583 = vunpack.c.0.s8 %v1582
      %v1584 = vlaneseq
      %v1585 = vshrl.u32 %v1584, 7
      %v1586 = vsub.s32 %v1583, %v1585
      %v1587 = vrot.slane %v1579, %v1586
      %v1589 = vunpack.c.l.s4 1934713408
      %v1590 = vunpack.c.0.s8 %v1589
      %v1591 = vlaneseq
      %v1592 = vshrl.u32 %v1591, 7
      %v1593 = vsub.s32 %v1590, %v1592
      %v1594 = vrot.slane %v1580, %v1593
      %v1595 = vcombine.low %v1530, %v1546
      %v1596 = vcombine.high %v1530, %v1546
      %v1598 = vunpack.c.l.s4 1934713408
      %v1599 = vunpack.c.0.s8 %v1598
      %v1600 = vlaneseq
      %v1601 = vshrl.u32 %v1600, 7
      %v1602 = vsub.s32 %v1599, %v1601
      %v1603 = vrot.slane %v1595, %v1602
      %v1605 = vunpack.c.l.s4 1934713408
      %v1606 = vunpack.c.0.s8 %v1605
      %v1607 = vlaneseq
      %v1608 = vshrl.u32 %v1607, 7
      %v1609 = vsub.s32 %v1606, %v1608
      %v1610 = vrot.slane %v1596, %v1609
      %v1611 = vcombine.low %v1555, %v1571
      %v1612 = vcombine.high %v1555, %v1571
      %v1614 = vunpack.c.l.s4 1934713408
      %v1615 = vunpack.c.0.s8 %v1614
      %v1616 = vlaneseq
      %v1617 = vshrl.u32 %v1616, 7
      %v1618 = vsub.s32 %v1615, %v1617
      %v1619 = vrot.slane %v1611, %v1618
      %v1621 = vunpack.c.l.s4 1934713408
      %v1622 = vunpack.c.0.s8 %v1621
      %v1623 = vlaneseq
      %v1624 = vshrl.u32 %v1623, 7
      %v1625 = vsub.s32 %v1622, %v1624
      %v1626 = vrot.slane %v1612, %v1625
      %v1627 = vcombine.low %v1562, %v1578
      %v1628 = vcombine.high %v1562, %v1578
      %v1630 = vunpack.c.l.s4 1934713408
      %v1631 = vunpack.c.0.s8 %v1630
      %v1632 = vlaneseq
      %v1633 = vshrl.u32 %v1632, 7
      %v1634 = vsub.s32 %v1631, %v1633
      %v1635 = vrot.slane %v1627, %v1634
      %v1637 = vunpack.c.l.s4 1934713408
      %v1638 = vunpack.c.0.s8 %v1637
      %v1639 = vlaneseq
      %v1640 = vshrl.u32 %v1639, 7
      %v1641 = vsub.s32 %v1638, %v1640
      %v1642 = vrot.slane %v1628, %v1641
      %v1643 = vcombine.low %v1587, %v1619
      %v1644 = vcombine.high %v1587, %v1619
      %v1645 = vcombine.low %v1594, %v1626
      %v1646 = vcombine.high %v1594, %v1626
      %v1647 = vcombine.low %v1603, %v1635
      %v1648 = vcombine.high %v1603, %v1635
      %v1649 = vcombine.low %v1610, %v1642
      %v1650 = vcombine.high %v1610, %v1642
      %v1651 = vcombine.low %v1031, %v1033
      %v1652 = vcombine.high %v1031, %v1033
      %v1654 = vunpack.c.l.s4 1983009808
      %v1655 = vunpack.c.0.s8 %v1654
      %v1656 = vlaneseq
      %v1657 = vshrl.u32 %v1656, 7
      %v1658 = vsub.s32 %v1655, %v1657
      %v1659 = vrot.slane %v1651, %v1658
      %v1661 = vunpack.c.l.s4 1983009808
      %v1662 = vunpack.c.0.s8 %v1661
      %v1663 = vlaneseq
      %v1664 = vshrl.u32 %v1663, 7
      %v1665 = vsub.s32 %v1662, %v1664
      %v1666 = vrot.slane %v1652, %v1665
      %v1667 = vcombine.low %v1032, %v1034
      %v1668 = vcombine.high %v1032, %v1034
      %v1670 = vunpack.c.l.s4 1983009808
      %v1671 = vunpack.c.0.s8 %v1670
      %v1672 = vlaneseq
      %v1673 = vshrl.u32 %v1672, 7
      %v1674 = vsub.s32 %v1671, %v1673
      %v1675 = vrot.slane %v1667, %v1674
      %v1677 = vunpack.c.l.s4 1983009808
      %v1678 = vunpack.c.0.s8 %v1677
      %v1679 = vlaneseq
      %v1680 = vshrl.u32 %v1679, 7
      %v1681 = vsub.s32 %v1678, %v1680
      %v1682 = vrot.slane %v1668, %v1681
      %v1683 = vcombine.low %v1035, %v1037
      %v1684 = vcombine.high %v1035, %v1037
      %v1686 = vunpack.c.l.s4 1983009808
      %v1687 = vunpack.c.0.s8 %v1686
      %v1688 = vlaneseq
      %v1689 = vshrl.u32 %v1688, 7
      %v1690 = vsub.s32 %v1687, %v1689
      %v1691 = vrot.slane %v1683, %v1690
      %v1693 = vunpack.c.l.s4 1983009808
      %v1694 = vunpack.c.0.s8 %v1693
      %v1695 = vlaneseq
      %v1696 = vshrl.u32 %v1695, 7
      %v1697 = vsub.s32 %v1694, %v1696
      %v1698 = vrot.slane %v1684, %v1697
      %v1699 = vcombine.low %v1036, %v1038
      %v1700 = vcombine.high %v1036, %v1038
      %v1702 = vunpack.c.l.s4 1983009808
      %v1703 = vunpack.c.0.s8 %v1702
      %v1704 = vlaneseq
      %v1705 = vshrl.u32 %v1704, 7
      %v1706 = vsub.s32 %v1703, %v1705
      %v1707 = vrot.slane %v1699, %v1706
      %v1709 = vunpack.c.l.s4 1983009808
      %v1710 = vunpack.c.0.s8 %v1709
      %v1711 = vlaneseq
      %v1712 = vshrl.u32 %v1711, 7
      %v1713 = vsub.s32 %v1710, %v1712
      %v1714 = vrot.slane %v1700, %v1713
      %v1715 = vcombine.low %v1659, %v1675
      %v1716 = vcombine.high %v1659, %v1675
      %v1718 = vunpack.c.l.s4 1934713408
      %v1719 = vunpack.c.0.s8 %v1718
      %v1720 = vlaneseq
      %v1721 = vshrl.u32 %v1720, 7
      %v1722 = vsub.s32 %v1719, %v1721
      %v1723 = vrot.slane %v1715, %v1722
      %v1725 = vunpack.c.l.s4 1934713408
      %v1726 = vunpack.c.0.s8 %v1725
      %v1727 = vlaneseq
      %v1728 = vshrl.u32 %v1727, 7
      %v1729 = vsub.s32 %v1726, %v1728
      %v1730 = vrot.slane %v1716, %v1729
      %v1731 = vcombine.low %v1666, %v1682
      %v1732 = vcombine.high %v1666, %v1682
      %v1734 = vunpack.c.l.s4 1934713408
      %v1735 = vunpack.c.0.s8 %v1734
      %v1736 = vlaneseq
      %v1737 = vshrl.u32 %v1736, 7
      %v1738 = vsub.s32 %v1735, %v1737
      %v1739 = vrot.slane %v1731, %v1738
      %v1741 = vunpack.c.l.s4 1934713408
      %v1742 = vunpack.c.0.s8 %v1741
      %v1743 = vlaneseq
      %v1744 = vshrl.u32 %v1743, 7
      %v1745 = vsub.s32 %v1742, %v1744
      %v1746 = vrot.slane %v1732, %v1745
      %v1747 = vcombine.low %v1691, %v1707
      %v1748 = vcombine.high %v1691, %v1707
      %v1750 = vunpack.c.l.s4 1934713408
      %v1751 = vunpack.c.0.s8 %v1750
      %v1752 = vlaneseq
      %v1753 = vshrl.u32 %v1752, 7
      %v1754 = vsub.s32 %v1751, %v1753
      %v1755 = vrot.slane %v1747, %v1754
      %v1757 = vunpack.c.l.s4 1934713408
      %v1758 = vunpack.c.0.s8 %v1757
      %v1759 = vlaneseq
      %v1760 = vshrl.u32 %v1759, 7
      %v1761 = vsub.s32 %v1758, %v1760
      %v1762 = vrot.slane %v1748, %v1761
      %v1763 = vcombine.low %v1698, %v1714
      %v1764 = vcombine.high %v1698, %v1714
      %v1766 = vunpack.c.l.s4 1934713408
      %v1767 = vunpack.c.0.s8 %v1766
      %v1768 = vlaneseq
      %v1769 = vshrl.u32 %v1768, 7
      %v1770 = vsub.s32 %v1767, %v1769
      %v1771 = vrot.slane %v1763, %v1770
      %v1773 = vunpack.c.l.s4 1934713408
      %v1774 = vunpack.c.0.s8 %v1773
      %v1775 = vlaneseq
      %v1776 = vshrl.u32 %v1775, 7
      %v1777 = vsub.s32 %v1774, %v1776
      %v1778 = vrot.slane %v1764, %v1777
      %v1779 = vcombine.low %v1723, %v1755
      %v1780 = vcombine.high %v1723, %v1755
      %v1781 = vcombine.low %v1730, %v1762
      %v1782 = vcombine.high %v1730, %v1762
      %v1783 = vcombine.low %v1739, %v1771
      %v1784 = vcombine.high %v1739, %v1771
      %v1785 = vcombine.low %v1746, %v1778
      %v1786 = vcombine.high %v1746, %v1778
      %v1787 = vcombine.low %v1235, %v1237
      %v1788 = vcombine.high %v1235, %v1237
      %v1790 = vunpack.c.l.s4 1983009808
      %v1791 = vunpack.c.0.s8 %v1790
      %v1792 = vlaneseq
      %v1793 = vshrl.u32 %v1792, 7
      %v1794 = vsub.s32 %v1791, %v1793
      %v1795 = vrot.slane %v1787, %v1794
      %v1797 = vunpack.c.l.s4 1983009808
      %v1798 = vunpack.c.0.s8 %v1797
      %v1799 = vlaneseq
      %v1800 = vshrl.u32 %v1799, 7
      %v1801 = vsub.s32 %v1798, %v1800
      %v1802 = vrot.slane %v1788, %v1801
      %v1803 = vcombine.low %v1236, %v1238
      %v1804 = vcombine.high %v1236, %v1238
      %v1806 = vunpack.c.l.s4 1983009808
      %v1807 = vunpack.c.0.s8 %v1806
      %v1808 = vlaneseq
      %v1809 = vshrl.u32 %v1808, 7
      %v1810 = vsub.s32 %v1807, %v1809
      %v1811 = vrot.slane %v1803, %v1810
      %v1813 = vunpack.c.l.s4 1983009808
      %v1814 = vunpack.c.0.s8 %v1813
      %v1815 = vlaneseq
      %v1816 = vshrl.u32 %v1815, 7
      %v1817 = vsub.s32 %v1814, %v1816
      %v1818 = vrot.slane %v1804, %v1817
      %v1819 = vcombine.low %v1239, %v1241
      %v1820 = vcombine.high %v1239, %v1241
      %v1822 = vunpack.c.l.s4 1983009808
      %v1823 = vunpack.c.0.s8 %v1822
      %v1824 = vlaneseq
      %v1825 = vshrl.u32 %v1824, 7
      %v1826 = vsub.s32 %v1823, %v1825
      %v1827 = vrot.slane %v1819, %v1826
      %v1829 = vunpack.c.l.s4 1983009808
      %v1830 = vunpack.c.0.s8 %v1829
      %v1831 = vlaneseq
      %v1832 = vshrl.u32 %v1831, 7
      %v1833 = vsub.s32 %v1830, %v1832
      %v1834 = vrot.slane %v1820, %v1833
      %v1835 = vcombine.low %v1240, %v1242
      %v1836 = vcombine.high %v1240, %v1242
      %v1838 = vunpack.c.l.s4 1983009808
      %v1839 = vunpack.c.0.s8 %v1838
      %v1840 = vlaneseq
      %v1841 = vshrl.u32 %v1840, 7
      %v1842 = vsub.s32 %v1839, %v1841
      %v1843 = vrot.slane %v1835, %v1842
      %v1845 = vunpack.c.l.s4 1983009808
      %v1846 = vunpack.c.0.s8 %v1845
      %v1847 = vlaneseq
      %v1848 = vshrl.u32 %v1847, 7
      %v1849 = vsub.s32 %v1846, %v1848
      %v1850 = vrot.slane %v1836, %v1849
      %v1851 = vcombine.low %v1795, %v1811
      %v1852 = vcombine.high %v1795, %v1811
      %v1854 = vunpack.c.l.s4 1934713408
      %v1855 = vunpack.c.0.s8 %v1854
      %v1856 = vlaneseq
      %v1857 = vshrl.u32 %v1856, 7
      %v1858 = vsub.s32 %v1855, %v1857
      %v1859 = vrot.slane %v1851, %v1858
      %v1861 = vunpack.c.l.s4 1934713408
      %v1862 = vunpack.c.0.s8 %v1861
      %v1863 = vlaneseq
      %v1864 = vshrl.u32 %v1863, 7
      %v1865 = vsub.s32 %v1862, %v1864
      %v1866 = vrot.slane %v1852, %v1865
      %v1867 = vcombine.low %v1802, %v1818
      %v1868 = vcombine.high %v1802, %v1818
      %v1870 = vunpack.c.l.s4 1934713408
      %v1871 = vunpack.c.0.s8 %v1870
      %v1872 = vlaneseq
      %v1873 = vshrl.u32 %v1872, 7
      %v1874 = vsub.s32 %v1871, %v1873
      %v1875 = vrot.slane %v1867, %v1874
      %v1877 = vunpack.c.l.s4 1934713408
      %v1878 = vunpack.c.0.s8 %v1877
      %v1879 = vlaneseq
      %v1880 = vshrl.u32 %v1879, 7
      %v1881 = vsub.s32 %v1878, %v1880
      %v1882 = vrot.slane %v1868, %v1881
      %v1883 = vcombine.low %v1827, %v1843
      %v1884 = vcombine.high %v1827, %v1843
      %v1886 = vunpack.c.l.s4 1934713408
      %v1887 = vunpack.c.0.s8 %v1886
      %v1888 = vlaneseq
      %v1889 = vshrl.u32 %v1888, 7
      %v1890 = vsub.s32 %v1887, %v1889
      %v1891 = vrot.slane %v1883, %v1890
      %v1893 = vunpack.c.l.s4 1934713408
      %v1894 = vunpack.c.0.s8 %v1893
      %v1895 = vlaneseq
      %v1896 = vshrl.u32 %v1895, 7
      %v1897 = vsub.s32 %v1894, %v1896
      %v1898 = vrot.slane %v1884, %v1897
      %v1899 = vcombine.low %v1834, %v1850
      %v1900 = vcombine.high %v1834, %v1850
      %v1902 = vunpack.c.l.s4 1934713408
      %v1903 = vunpack.c.0.s8 %v1902
      %v1904 = vlaneseq
      %v1905 = vshrl.u32 %v1904, 7
      %v1906 = vsub.s32 %v1903, %v1905
      %v1907 = vrot.slane %v1899, %v1906
      %v1909 = vunpack.c.l.s4 1934713408
      %v1910 = vunpack.c.0.s8 %v1909
      %v1911 = vlaneseq
      %v1912 = vshrl.u32 %v1911, 7
      %v1913 = vsub.s32 %v1910, %v1912
      %v1914 = vrot.slane %v1900, %v1913
      %v1915 = vcombine.low %v1859, %v1891
      %v1916 = vcombine.high %v1859, %v1891
      %v1917 = vcombine.low %v1866, %v1898
      %v1918 = vcombine.high %v1866, %v1898
      %v1919 = vcombine.low %v1875, %v1907
      %v1920 = vcombine.high %v1875, %v1907
      %v1921 = vcombine.low %v1882, %v1914
      %v1922 = vcombine.high %v1882, %v1914
      %v1923 = vcombine.low %v1439, %v1441
      %v1924 = vcombine.high %v1439, %v1441
      %v1926 = vunpack.c.l.s4 1983009808
      %v1927 = vunpack.c.0.s8 %v1926
      %v1928 = vlaneseq
      %v1929 = vshrl.u32 %v1928, 7
      %v1930 = vsub.s32 %v1927, %v1929
      %v1931 = vrot.slane %v1923, %v1930
      %v1933 = vunpack.c.l.s4 1983009808
      %v1934 = vunpack.c.0.s8 %v1933
      %v1935 = vlaneseq
      %v1936 = vshrl.u32 %v1935, 7
      %v1937 = vsub.s32 %v1934, %v1936
      %v1938 = vrot.slane %v1924, %v1937
      %v1939 = vcombine.low %v1440, %v1442
      %v1940 = vcombine.high %v1440, %v1442
      %v1942 = vunpack.c.l.s4 1983009808
      %v1943 = vunpack.c.0.s8 %v1942
      %v1944 = vlaneseq
      %v1945 = vshrl.u32 %v1944, 7
      %v1946 = vsub.s32 %v1943, %v1945
      %v1947 = vrot.slane %v1939, %v1946
      %v1949 = vunpack.c.l.s4 1983009808
      %v1950 = vunpack.c.0.s8 %v1949
      %v1951 = vlaneseq
      %v1952 = vshrl.u32 %v1951, 7
      %v1953 = vsub.s32 %v1950, %v1952
      %v1954 = vrot.slane %v1940, %v1953
      %v1955 = vcombine.low %v1443, %v1445
      %v1956 = vcombine.high %v1443, %v1445
      %v1958 = vunpack.c.l.s4 1983009808
      %v1959 = vunpack.c.0.s8 %v1958
      %v1960 = vlaneseq
      %v1961 = vshrl.u32 %v1960, 7
      %v1962 = vsub.s32 %v1959, %v1961
      %v1963 = vrot.slane %v1955, %v1962
      %v1965 = vunpack.c.l.s4 1983009808
      %v1966 = vunpack.c.0.s8 %v1965
      %v1967 = vlaneseq
      %v1968 = vshrl.u32 %v1967, 7
      %v1969 = vsub.s32 %v1966, %v1968
      %v1970 = vrot.slane %v1956, %v1969
      %v1971 = vcombine.low %v1444, %v1446
      %v1972 = vcombine.high %v1444, %v1446
      %v1974 = vunpack.c.l.s4 1983009808
      %v1975 = vunpack.c.0.s8 %v1974
      %v1976 = vlaneseq
      %v1977 = vshrl.u32 %v1976, 7
      %v1978 = vsub.s32 %v1975, %v1977
      %v1979 = vrot.slane %v1971, %v1978
      %v1981 = vunpack.c.l.s4 1983009808
      %v1982 = vunpack.c.0.s8 %v1981
      %v1983 = vlaneseq
      %v1984 = vshrl.u32 %v1983, 7
      %v1985 = vsub.s32 %v1982, %v1984
      %v1986 = vrot.slane %v1972, %v1985
      %v1987 = vcombine.low %v1931, %v1947
      %v1988 = vcombine.high %v1931, %v1947
      %v1990 = vunpack.c.l.s4 1934713408
      %v1991 = vunpack.c.0.s8 %v1990
      %v1992 = vlaneseq
      %v1993 = vshrl.u32 %v1992, 7
      %v1994 = vsub.s32 %v1991, %v1993
      %v1995 = vrot.slane %v1987, %v1994
      %v1997 = vunpack.c.l.s4 1934713408
      %v1998 = vunpack.c.0.s8 %v1997
      %v1999 = vlaneseq
      %v2000 = vshrl.u32 %v1999, 7
      %v2001 = vsub.s32 %v1998, %v2000
      %v2002 = vrot.slane %v1988, %v2001
      %v2003 = vcombine.low %v1938, %v1954
      %v2004 = vcombine.high %v1938, %v1954
      %v2006 = vunpack.c.l.s4 1934713408
      %v2007 = vunpack.c.0.s8 %v2006
      %v2008 = vlaneseq
      %v2009 = vshrl.u32 %v2008, 7
      %v2010 = vsub.s32 %v2007, %v2009
      %v2011 = vrot.slane %v2003, %v2010
      %v2013 = vunpack.c.l.s4 1934713408
      %v2014 = vunpack.c.0.s8 %v2013
      %v2015 = vlaneseq
      %v2016 = vshrl.u32 %v2015, 7
      %v2017 = vsub.s32 %v2014, %v2016
      %v2018 = vrot.slane %v2004, %v2017
      %v2019 = vcombine.low %v1963, %v1979
      %v2020 = vcombine.high %v1963, %v1979
      %v2022 = vunpack.c.l.s4 1934713408
      %v2023 = vunpack.c.0.s8 %v2022
      %v2024 = vlaneseq
      %v2025 = vshrl.u32 %v2024, 7
      %v2026 = vsub.s32 %v2023, %v2025
      %v2027 = vrot.slane %v2019, %v2026
      %v2029 = vunpack.c.l.s4 1934713408
      %v2030 = vunpack.c.0.s8 %v2029
      %v2031 = vlaneseq
      %v2032 = vshrl.u32 %v2031, 7
      %v2033 = vsub.s32 %v2030, %v2032
      %v2034 = vrot.slane %v2020, %v2033
      %v2035 = vcombine.low %v1970, %v1986
      %v2036 = vcombine.high %v1970, %v1986
      %v2038 = vunpack.c.l.s4 1934713408
      %v2039 = vunpack.c.0.s8 %v2038
      %v2040 = vlaneseq
      %v2041 = vshrl.u32 %v2040, 7
      %v2042 = vsub.s32 %v2039, %v2041
      %v2043 = vrot.slane %v2035, %v2042
      %v2045 = vunpack.c.l.s4 1934713408
      %v2046 = vunpack.c.0.s8 %v2045
      %v2047 = vlaneseq
      %v2048 = vshrl.u32 %v2047, 7
      %v2049 = vsub.s32 %v2046, %v2048
      %v2050 = vrot.slane %v2036, %v2049
      %v2051 = vcombine.low %v1995, %v2027
      %v2052 = vcombine.high %v1995, %v2027
      %v2053 = vcombine.low %v2002, %v2034
      %v2054 = vcombine.high %v2002, %v2034
      %v2055 = vcombine.low %v2011, %v2043
      %v2056 = vcombine.high %v2011, %v2043
      %v2057 = vcombine.low %v2018, %v2050
      %v2058 = vcombine.high %v2018, %v2050
      %v2059 = vcombine.low %v875, %v882
      %v2061 = vunpack.c.l.s4 1983009808
      %v2062 = vunpack.c.0.s8 %v2061
      %v2063 = vlaneseq
      %v2064 = vshrl.u32 %v2063, 7
      %v2065 = vsub.s32 %v2062, %v2064
      %v2066 = vrot.slane %v2059, %v2065
      %v2067 = vcombine.low %v899, %v900
      %v2069 = vunpack.c.l.s4 1983009808
      %v2070 = vunpack.c.0.s8 %v2069
      %v2071 = vlaneseq
      %v2072 = vshrl.u32 %v2071, 7
      %v2073 = vsub.s32 %v2070, %v2072
      %v2074 = vrot.slane %v2067, %v2073
      %v2075 = vcombine.low %v891, %v898
      %v2077 = vunpack.c.l.s4 1983009808
      %v2078 = vunpack.c.0.s8 %v2077
      %v2079 = vlaneseq
      %v2080 = vshrl.u32 %v2079, 7
      %v2081 = vsub.s32 %v2078, %v2080
      %v2082 = vrot.slane %v2075, %v2081
      %v2083 = vcombine.low %v901, %v902
      %v2085 = vunpack.c.l.s4 1983009808
      %v2086 = vunpack.c.0.s8 %v2085
      %v2087 = vlaneseq
      %v2088 = vshrl.u32 %v2087, 7
      %v2089 = vsub.s32 %v2086, %v2088
      %v2090 = vrot.slane %v2083, %v2089
      %v2091 = vcombine.low %v2066, %v2074
      %v2092 = vcombine.high %v2066, %v2074
      %v2094 = vunpack.c.l.s4 1934713408
      %v2095 = vunpack.c.0.s8 %v2094
      %v2096 = vlaneseq
      %v2097 = vshrl.u32 %v2096, 7
      %v2098 = vsub.s32 %v2095, %v2097
      %v2099 = vrot.slane %v2091, %v2098
      %v2101 = vunpack.c.l.s4 1934713408
      %v2102 = vunpack.c.0.s8 %v2101
      %v2103 = vlaneseq
      %v2104 = vshrl.u32 %v2103, 7
      %v2105 = vsub.s32 %v2102, %v2104
      %v2106 = vrot.slane %v2092, %v2105
      %v2107 = vcombine.low %v2082, %v2090
      %v2108 = vcombine.high %v2082, %v2090
      %v2110 = vunpack.c.l.s4 1934713408
      %v2111 = vunpack.c.0.s8 %v2110
      %v2112 = vlaneseq
      %v2113 = vshrl.u32 %v2112, 7
      %v2114 = vsub.s32 %v2111, %v2113
      %v2115 = vrot.slane %v2107, %v2114
      %v2117 = vunpack.c.l.s4 1934713408
      %v2118 = vunpack.c.0.s8 %v2117
      %v2119 = vlaneseq
      %v2120 = vshrl.u32 %v2119, 7
      %v2121 = vsub.s32 %v2118, %v2120
      %v2122 = vrot.slane %v2108, %v2121
      %v2123 = vcombine.low %v2099, %v2115
      %v2124 = vcombine.high %v2099, %v2115
      %v2125 = vcombine.low %v2106, %v2122
      %v2126 = vcombine.high %v2106, %v2122
      %v2127 = vcombine.low %v1079, %v1086
      %v2129 = vunpack.c.l.s4 1983009808
      %v2130 = vunpack.c.0.s8 %v2129
      %v2131 = vlaneseq
      %v2132 = vshrl.u32 %v2131, 7
      %v2133 = vsub.s32 %v2130, %v2132
      %v2134 = vrot.slane %v2127, %v2133
      %v2135 = vcombine.low %v1103, %v1104
      %v2137 = vunpack.c.l.s4 1983009808
      %v2138 = vunpack.c.0.s8 %v2137
      %v2139 = vlaneseq
      %v2140 = vshrl.u32 %v2139, 7
      %v2141 = vsub.s32 %v2138, %v2140
      %v2142 = vrot.slane %v2135, %v2141
      %v2143 = vcombine.low %v1095, %v1102
      %v2145 = vunpack.c.l.s4 1983009808
      %v2146 = vunpack.c.0.s8 %v2145
      %v2147 = vlaneseq
      %v2148 = vshrl.u32 %v2147, 7
      %v2149 = vsub.s32 %v2146, %v2148
      %v2150 = vrot.slane %v2143, %v2149
      %v2151 = vcombine.low %v1105, %v1106
      %v2153 = vunpack.c.l.s4 1983009808
      %v2154 = vunpack.c.0.s8 %v2153
      %v2155 = vlaneseq
      %v2156 = vshrl.u32 %v2155, 7
      %v2157 = vsub.s32 %v2154, %v2156
      %v2158 = vrot.slane %v2151, %v2157
      %v2159 = vcombine.low %v2134, %v2142
      %v2160 = vcombine.high %v2134, %v2142
      %v2162 = vunpack.c.l.s4 1934713408
      %v2163 = vunpack.c.0.s8 %v2162
      %v2164 = vlaneseq
      %v2165 = vshrl.u32 %v2164, 7
      %v2166 = vsub.s32 %v2163, %v2165
      %v2167 = vrot.slane %v2159, %v2166
      %v2169 = vunpack.c.l.s4 1934713408
      %v2170 = vunpack.c.0.s8 %v2169
      %v2171 = vlaneseq
      %v2172 = vshrl.u32 %v2171, 7
      %v2173 = vsub.s32 %v2170, %v2172
      %v2174 = vrot.slane %v2160, %v2173
      %v2175 = vcombine.low %v2150, %v2158
      %v2176 = vcombine.high %v2150, %v2158
      %v2178 = vunpack.c.l.s4 1934713408
      %v2179 = vunpack.c.0.s8 %v2178
      %v2180 = vlaneseq
      %v2181 = vshrl.u32 %v2180, 7
      %v2182 = vsub.s32 %v2179, %v2181
      %v2183 = vrot.slane %v2175, %v2182
      %v2185 = vunpack.c.l.s4 1934713408
      %v2186 = vunpack.c.0.s8 %v2185
      %v2187 = vlaneseq
      %v2188 = vshrl.u32 %v2187, 7
      %v2189 = vsub.s32 %v2186, %v2188
      %v2190 = vrot.slane %v2176, %v2189
      %v2191 = vcombine.low %v2167, %v2183
      %v2192 = vcombine.high %v2167, %v2183
      %v2193 = vcombine.low %v2174, %v2190
      %v2194 = vcombine.high %v2174, %v2190
      %v2195 = vcombine.low %v1283, %v1290
      %v2197 = vunpack.c.l.s4 1983009808
      %v2198 = vunpack.c.0.s8 %v2197
      %v2199 = vlaneseq
      %v2200 = vshrl.u32 %v2199, 7
      %v2201 = vsub.s32 %v2198, %v2200
      %v2202 = vrot.slane %v2195, %v2201
      %v2203 = vcombine.low %v1307, %v1308
      %v2205 = vunpack.c.l.s4 1983009808
      %v2206 = vunpack.c.0.s8 %v2205
      %v2207 = vlaneseq
      %v2208 = vshrl.u32 %v2207, 7
      %v2209 = vsub.s32 %v2206, %v2208
      %v2210 = vrot.slane %v2203, %v2209
      %v2211 = vcombine.low %v1299, %v1306
      %v2213 = vunpack.c.l.s4 1983009808
      %v2214 = vunpack.c.0.s8 %v2213
      %v2215 = vlaneseq
      %v2216 = vshrl.u32 %v2215, 7
      %v2217 = vsub.s32 %v2214, %v2216
      %v2218 = vrot.slane %v2211, %v2217
      %v2219 = vcombine.low %v1309, %v1310
      %v2221 = vunpack.c.l.s4 1983009808
      %v2222 = vunpack.c.0.s8 %v2221
      %v2223 = vlaneseq
      %v2224 = vshrl.u32 %v2223, 7
      %v2225 = vsub.s32 %v2222, %v2224
      %v2226 = vrot.slane %v2219, %v2225
      %v2227 = vcombine.low %v2202, %v2210
      %v2228 = vcombine.high %v2202, %v2210
      %v2230 = vunpack.c.l.s4 1934713408
      %v2231 = vunpack.c.0.s8 %v2230
      %v2232 = vlaneseq
      %v2233 = vshrl.u32 %v2232, 7
      %v2234 = vsub.s32 %v2231, %v2233
      %v2235 = vrot.slane %v2227, %v2234
      %v2237 = vunpack.c.l.s4 1934713408
      %v2238 = vunpack.c.0.s8 %v2237
      %v2239 = vlaneseq
      %v2240 = vshrl.u32 %v2239, 7
      %v2241 = vsub.s32 %v2238, %v2240
      %v2242 = vrot.slane %v2228, %v2241
      %v2243 = vcombine.low %v2218, %v2226
      %v2244 = vcombine.high %v2218, %v2226
      %v2246 = vunpack.c.l.s4 1934713408
      %v2247 = vunpack.c.0.s8 %v2246
      %v2248 = vlaneseq
      %v2249 = vshrl.u32 %v2248, 7
      %v2250 = vsub.s32 %v2247, %v2249
      %v2251 = vrot.slane %v2243, %v2250
      %v2253 = vunpack.c.l.s4 1934713408
      %v2254 = vunpack.c.0.s8 %v2253
      %v2255 = vlaneseq
      %v2256 = vshrl.u32 %v2255, 7
      %v2257 = vsub.s32 %v2254, %v2256
      %v2258 = vrot.slane %v2244, %v2257
      %v2259 = vcombine.low %v2235, %v2251
      %v2260 = vcombine.high %v2235, %v2251
      %v2261 = vcombine.low %v2242, %v2258
      %v2262 = vcombine.high %v2242, %v2258
      %v2263 = vcombine.low %v1487, %v1494
      %v2265 = vunpack.c.l.s4 1983009808
      %v2266 = vunpack.c.0.s8 %v2265
      %v2267 = vlaneseq
      %v2268 = vshrl.u32 %v2267, 7
      %v2269 = vsub.s32 %v2266, %v2268
      %v2270 = vrot.slane %v2263, %v2269
      %v2271 = vcombine.low %v1511, %v1512
      %v2273 = vunpack.c.l.s4 1983009808
      %v2274 = vunpack.c.0.s8 %v2273
      %v2275 = vlaneseq
      %v2276 = vshrl.u32 %v2275, 7
      %v2277 = vsub.s32 %v2274, %v2276
      %v2278 = vrot.slane %v2271, %v2277
      %v2279 = vcombine.low %v1503, %v1510
      %v2281 = vunpack.c.l.s4 1983009808
      %v2282 = vunpack.c.0.s8 %v2281
      %v2283 = vlaneseq
      %v2284 = vshrl.u32 %v2283, 7
      %v2285 = vsub.s32 %v2282, %v2284
      %v2286 = vrot.slane %v2279, %v2285
      %v2287 = vcombine.low %v1513, %v1514
      %v2289 = vunpack.c.l.s4 1983009808
      %v2290 = vunpack.c.0.s8 %v2289
      %v2291 = vlaneseq
      %v2292 = vshrl.u32 %v2291, 7
      %v2293 = vsub.s32 %v2290, %v2292
      %v2294 = vrot.slane %v2287, %v2293
      %v2295 = vcombine.low %v2270, %v2278
      %v2296 = vcombine.high %v2270, %v2278
      %v2298 = vunpack.c.l.s4 1934713408
      %v2299 = vunpack.c.0.s8 %v2298
      %v2300 = vlaneseq
      %v2301 = vshrl.u32 %v2300, 7
      %v2302 = vsub.s32 %v2299, %v2301
      %v2303 = vrot.slane %v2295, %v2302
      %v2305 = vunpack.c.l.s4 1934713408
      %v2306 = vunpack.c.0.s8 %v2305
      %v2307 = vlaneseq
      %v2308 = vshrl.u32 %v2307, 7
      %v2309 = vsub.s32 %v2306, %v2308
      %v2310 = vrot.slane %v2296, %v2309
      %v2311 = vcombine.low %v2286, %v2294
      %v2312 = vcombine.high %v2286, %v2294
      %v2314 = vunpack.c.l.s4 1934713408
      %v2315 = vunpack.c.0.s8 %v2314
      %v2316 = vlaneseq
      %v2317 = vshrl.u32 %v2316, 7
      %v2318 = vsub.s32 %v2315, %v2317
      %v2319 = vrot.slane %v2311, %v2318
      %v2321 = vunpack.c.l.s4 1934713408
      %v2322 = vunpack.c.0.s8 %v2321
      %v2323 = vlaneseq
      %v2324 = vshrl.u32 %v2323, 7
      %v2325 = vsub.s32 %v2322, %v2324
      %v2326 = vrot.slane %v2312, %v2325
      %v2327 = vcombine.low %v2303, %v2319
      %v2328 = vcombine.high %v2303, %v2319
      %v2329 = vcombine.low %v2310, %v2326
      %v2330 = vcombine.high %v2310, %v2326
      %v2331 = vpack.c.bf16 %v1779, %v1643
      %v2332 = vpack.c.bf16 %v2051, %v1915
      %v2333 = vpack.c.bf16 %v1780, %v1644
      %v2334 = vpack.c.bf16 %v2052, %v1916
      %v2335 = vpack.c.bf16 %v1781, %v1645
      %v2336 = vpack.c.bf16 %v2053, %v1917
      %v2337 = vpack.c.bf16 %v1782, %v1646
      %v2338 = vpack.c.bf16 %v2054, %v1918
      %v2339 = vpack.c.bf16 %v1783, %v1647
      %v2340 = vpack.c.bf16 %v2055, %v1919
      %v2341 = vpack.c.bf16 %v1784, %v1648
      %v2342 = vpack.c.bf16 %v2056, %v1920
      %v2343 = vpack.c.bf16 %v1785, %v1649
      %v2344 = vpack.c.bf16 %v2057, %v1921
      %v2345 = vpack.c.bf16 %v1786, %v1650
      %v2346 = vpack.c.bf16 %v2058, %v1922
      %v2347 = vpack.c.bf16 %v2191, %v2123
      %v2348 = vpack.c.bf16 %v2327, %v2259
      %v2349 = vpack.c.bf16 %v2192, %v2124
      %v2350 = vpack.c.bf16 %v2328, %v2260
      %v2351 = vpack.c.bf16 %v2193, %v2125
      %v2352 = vpack.c.bf16 %v2329, %v2261
      %v2353 = vpack.c.bf16 %v2194, %v2126
      %v2354 = vpack.c.bf16 %v2330, %v2262
      %vm2355 = vcmask 64512
      %v2357 = vsel %vm2355, %v2331, 0
      %v2360 = vsel %vm2355, %v2339, 0
      %2362 = vmatprep.subr.bf16.mxu0 0
      %2363 = vmatpush1.bf16.xpose.msra.mxu0 0
      %2364 = vmatprep.subr.bf16.mxu0 0
      %2365 = vmatpush1.bf16.xpose.msra.mxu0 0
      %2366 = vmatprep.subr.bf16.mxu0 0
      %2367 = vmatpush1.bf16.xpose.msra.mxu0 0
      %2368 = vmatprep.subr.bf16.mxu0 0
      %2369 = vmatpush1.bf16.xpose.msra.mxu0 0
      %2370 = vmatprep.subr.bf16.mxu0 0
      %2371 = vmatpush1.bf16.xpose.msra.mxu0 0
      %2372 = vmatprep.subr.bf16.mxu0 0
      %2373 = vmatpush1.bf16.xpose.msra.mxu0 0
      %2374 = vmatprep.subr.bf16.mxu0 0
      %2375 = vmatpush1.bf16.xpose.msra.mxu0 0
      %2376 = vmatprep.subr.bf16.mxu0 0
      %2377 = vmatpush1.bf16.xpose.msra.mxu0 %v2360
      %2378 = vmatprep.subr.bf16.mxu0 0
      %2379 = vmatpush2.bf16.xpose.msra.mxu0 0
      %2380 = vmatprep.subr.bf16.mxu0 0
      %2381 = vmatpush2.bf16.xpose.msra.mxu0 0
      %2382 = vmatprep.subr.bf16.mxu0 0
      %2383 = vmatpush2.bf16.xpose.msra.mxu0 0
      %2384 = vmatprep.subr.bf16.mxu0 0
      %2385 = vmatpush2.bf16.xpose.msra.mxu0 0
      %2386 = vmatprep.subr.bf16.mxu0 0
      %2387 = vmatpush2.bf16.xpose.msra.mxu0 0
      %2388 = vmatprep.subr.bf16.mxu0 0
      %2389 = vmatpush2.bf16.xpose.msra.mxu0 0
      %2390 = vmatprep.subr.bf16.mxu0 0
      %2391 = vmatpush2.bf16.xpose.msra.mxu0 0
      %2392 = vmatprep.subr.bf16.mxu0 0
      %2393 = vmatpush2.bf16.xpose.msra.mxu0 0
      %2394 = vmatprep.mubr.bf16.mxu0 0
      %2395 = vmatmul.mubr.bf16.gmra.mxu0 %v2357
      %v2396 = vpop.f32.mrf.mxu0
      %v2397 = vadd.f32 0.0, %v2396
      %v2398 = vpop.f32.mrf.mxu0
      %v2399 = vpop.f32.mrf.mxu0
      %v2400 = vadd.f32 0.0, %v2399
      %v2401 = vpop.f32.mrf.mxu0
      %2402 = vdwg.mxu0
      %v2404 = vsel %vm2355, %v2332, 0
      %v2407 = vsel %vm2355, %v2340, 0
      %2409 = vmatprep.subr.bf16.mxu0 0
      %2410 = vmatpush1.bf16.xpose.msra.mxu0 0
      %2411 = vmatprep.subr.bf16.mxu0 0
      %2412 = vmatpush1.bf16.xpose.msra.mxu0 0
      %2413 = vmatprep.subr.bf16.mxu0 0
      %2414 = vmatpush1.bf16.xpose.msra.mxu0 0
      %2415 = vmatprep.subr.bf16.mxu0 0
      %2416 = vmatpush1.bf16.xpose.msra.mxu0 0
      %2417 = vmatprep.subr.bf16.mxu0 0
      %2418 = vmatpush1.bf16.xpose.msra.mxu0 0
      %2419 = vmatprep.subr.bf16.mxu0 0
      %2420 = vmatpush1.bf16.xpose.msra.mxu0 0
      %2421 = vmatprep.subr.bf16.mxu0 0
      %2422 = vmatpush1.bf16.xpose.msra.mxu0 0
      %2423 = vmatprep.subr.bf16.mxu0 0
      %2424 = vmatpush1.bf16.xpose.msra.mxu0 %v2407
      %2425 = vmatprep.subr.bf16.mxu0 0
      %2426 = vmatpush2.bf16.xpose.msra.mxu0 0
      %2427 = vmatprep.subr.bf16.mxu0 0
      %2428 = vmatpush2.bf16.xpose.msra.mxu0 0
      %2429 = vmatprep.subr.bf16.mxu0 0
      %2430 = vmatpush2.bf16.xpose.msra.mxu0 0
      %2431 = vmatprep.subr.bf16.mxu0 0
      %2432 = vmatpush2.bf16.xpose.msra.mxu0 0
      %2433 = vmatprep.subr.bf16.mxu0 0
      %2434 = vmatpush2.bf16.xpose.msra.mxu0 0
      %2435 = vmatprep.subr.bf16.mxu0 0
      %2436 = vmatpush2.bf16.xpose.msra.mxu0 0
      %2437 = vmatprep.subr.bf16.mxu0 0
      %2438 = vmatpush2.bf16.xpose.msra.mxu0 0
      %2439 = vmatprep.subr.bf16.mxu0 0
      %2440 = vmatpush2.bf16.xpose.msra.mxu0 0
      %2441 = vmatprep.mubr.bf16.mxu0 0
      %2442 = vmatmul.mubr.bf16.gmra.mxu0 %v2404
      %v2443 = vpop.f32.mrf.mxu0
      %v2444 = vadd.f32 0.0, %v2443
      %v2445 = vpop.f32.mrf.mxu0
      %v2446 = vpop.f32.mrf.mxu0
      %v2447 = vadd.f32 0.0, %v2446
      %v2448 = vpop.f32.mrf.mxu0
      %2449 = vdwg.mxu0
      %v2451 = vsel %vm2355, %v2333, 0
      %v2454 = vsel %vm2355, %v2341, 0
      %2456 = vmatprep.subr.bf16.mxu0 0
      %2457 = vmatpush1.bf16.xpose.msra.mxu0 0
      %2458 = vmatprep.subr.bf16.mxu0 0
      %2459 = vmatpush1.bf16.xpose.msra.mxu0 0
      %2460 = vmatprep.subr.bf16.mxu0 0
      %2461 = vmatpush1.bf16.xpose.msra.mxu0 0
      %2462 = vmatprep.subr.bf16.mxu0 0
      %2463 = vmatpush1.bf16.xpose.msra.mxu0 0
      %2464 = vmatprep.subr.bf16.mxu0 0
      %2465 = vmatpush1.bf16.xpose.msra.mxu0 0
      %2466 = vmatprep.subr.bf16.mxu0 0
      %2467 = vmatpush1.bf16.xpose.msra.mxu0 0
      %2468 = vmatprep.subr.bf16.mxu0 0
      %2469 = vmatpush1.bf16.xpose.msra.mxu0 0
      %2470 = vmatprep.subr.bf16.mxu0 0
      %2471 = vmatpush1.bf16.xpose.msra.mxu0 %v2454
      %2472 = vmatprep.subr.bf16.mxu0 0
      %2473 = vmatpush2.bf16.xpose.msra.mxu0 0
      %2474 = vmatprep.subr.bf16.mxu0 0
      %2475 = vmatpush2.bf16.xpose.msra.mxu0 0
      %2476 = vmatprep.subr.bf16.mxu0 0
      %2477 = vmatpush2.bf16.xpose.msra.mxu0 0
      %2478 = vmatprep.subr.bf16.mxu0 0
      %2479 = vmatpush2.bf16.xpose.msra.mxu0 0
      %2480 = vmatprep.subr.bf16.mxu0 0
      %2481 = vmatpush2.bf16.xpose.msra.mxu0 0
      %2482 = vmatprep.subr.bf16.mxu0 0
      %2483 = vmatpush2.bf16.xpose.msra.mxu0 0
      %2484 = vmatprep.subr.bf16.mxu0 0
      %2485 = vmatpush2.bf16.xpose.msra.mxu0 0
      %2486 = vmatprep.subr.bf16.mxu0 0
      %2487 = vmatpush2.bf16.xpose.msra.mxu0 0
      %2488 = vmatprep.mubr.bf16.mxu0 0
      %2489 = vmatmul.mubr.bf16.gmra.mxu0 %v2451
      %v2490 = vpop.f32.mrf.mxu0
      %v2491 = vadd.f32 0.0, %v2490
      %v2492 = vpop.f32.mrf.mxu0
      %v2493 = vpop.f32.mrf.mxu0
      %v2494 = vadd.f32 0.0, %v2493
      %v2495 = vpop.f32.mrf.mxu0
      %2496 = vdwg.mxu0
      %v2498 = vsel %vm2355, %v2334, 0
      %v2501 = vsel %vm2355, %v2342, 0
      %2503 = vmatprep.subr.bf16.mxu0 0
      %2504 = vmatpush1.bf16.xpose.msra.mxu0 0
      %2505 = vmatprep.subr.bf16.mxu0 0
      %2506 = vmatpush1.bf16.xpose.msra.mxu0 0
      %2507 = vmatprep.subr.bf16.mxu0 0
      %2508 = vmatpush1.bf16.xpose.msra.mxu0 0
      %2509 = vmatprep.subr.bf16.mxu0 0
      %2510 = vmatpush1.bf16.xpose.msra.mxu0 0
      %2511 = vmatprep.subr.bf16.mxu0 0
      %2512 = vmatpush1.bf16.xpose.msra.mxu0 0
      %2513 = vmatprep.subr.bf16.mxu0 0
      %2514 = vmatpush1.bf16.xpose.msra.mxu0 0
      %2515 = vmatprep.subr.bf16.mxu0 0
      %2516 = vmatpush1.bf16.xpose.msra.mxu0 0
      %2517 = vmatprep.subr.bf16.mxu0 0
      %2518 = vmatpush1.bf16.xpose.msra.mxu0 %v2501
      %2519 = vmatprep.subr.bf16.mxu0 0
      %2520 = vmatpush2.bf16.xpose.msra.mxu0 0
      %2521 = vmatprep.subr.bf16.mxu0 0
      %2522 = vmatpush2.bf16.xpose.msra.mxu0 0
      %2523 = vmatprep.subr.bf16.mxu0 0
      %2524 = vmatpush2.bf16.xpose.msra.mxu0 0
      %2525 = vmatprep.subr.bf16.mxu0 0
      %2526 = vmatpush2.bf16.xpose.msra.mxu0 0
      %2527 = vmatprep.subr.bf16.mxu0 0
      %2528 = vmatpush2.bf16.xpose.msra.mxu0 0
      %2529 = vmatprep.subr.bf16.mxu0 0
      %2530 = vmatpush2.bf16.xpose.msra.mxu0 0
      %2531 = vmatprep.subr.bf16.mxu0 0
      %2532 = vmatpush2.bf16.xpose.msra.mxu0 0
      %2533 = vmatprep.subr.bf16.mxu0 0
      %2534 = vmatpush2.bf16.xpose.msra.mxu0 0
      %2535 = vmatprep.mubr.bf16.mxu0 0
      %2536 = vmatmul.mubr.bf16.gmra.mxu0 %v2498
      %v2537 = vpop.f32.mrf.mxu0
      %v2538 = vadd.f32 0.0, %v2537
      %v2539 = vpop.f32.mrf.mxu0
      %v2540 = vpop.f32.mrf.mxu0
      %v2541 = vadd.f32 0.0, %v2540
      %v2542 = vpop.f32.mrf.mxu0
      %2543 = vdwg.mxu0
      %v2545 = vsel %vm2355, %v2335, 0
      %v2548 = vsel %vm2355, %v2343, 0
      %2550 = vmatprep.subr.bf16.mxu0 0
      %2551 = vmatpush1.bf16.xpose.msra.mxu0 0
      %2552 = vmatprep.subr.bf16.mxu0 0
      %2553 = vmatpush1.bf16.xpose.msra.mxu0 0
      %2554 = vmatprep.subr.bf16.mxu0 0
      %2555 = vmatpush1.bf16.xpose.msra.mxu0 0
      %2556 = vmatprep.subr.bf16.mxu0 0
      %2557 = vmatpush1.bf16.xpose.msra.mxu0 0
      %2558 = vmatprep.subr.bf16.mxu0 0
      %2559 = vmatpush1.bf16.xpose.msra.mxu0 0
      %2560 = vmatprep.subr.bf16.mxu0 0
      %2561 = vmatpush1.bf16.xpose.msra.mxu0 0
      %2562 = vmatprep.subr.bf16.mxu0 0
      %2563 = vmatpush1.bf16.xpose.msra.mxu0 0
      %2564 = vmatprep.subr.bf16.mxu0 0
      %2565 = vmatpush1.bf16.xpose.msra.mxu0 %v2548
      %2566 = vmatprep.subr.bf16.mxu0 0
      %2567 = vmatpush2.bf16.xpose.msra.mxu0 0
      %2568 = vmatprep.subr.bf16.mxu0 0
      %2569 = vmatpush2.bf16.xpose.msra.mxu0 0
      %2570 = vmatprep.subr.bf16.mxu0 0
      %2571 = vmatpush2.bf16.xpose.msra.mxu0 0
      %2572 = vmatprep.subr.bf16.mxu0 0
      %2573 = vmatpush2.bf16.xpose.msra.mxu0 0
      %2574 = vmatprep.subr.bf16.mxu0 0
      %2575 = vmatpush2.bf16.xpose.msra.mxu0 0
      %2576 = vmatprep.subr.bf16.mxu0 0
      %2577 = vmatpush2.bf16.xpose.msra.mxu0 0
      %2578 = vmatprep.subr.bf16.mxu0 0
      %2579 = vmatpush2.bf16.xpose.msra.mxu0 0
      %2580 = vmatprep.subr.bf16.mxu0 0
      %2581 = vmatpush2.bf16.xpose.msra.mxu0 0
      %2582 = vmatprep.mubr.bf16.mxu0 0
      %2583 = vmatmul.mubr.bf16.gmra.mxu0 %v2545
      %v2584 = vpop.f32.mrf.mxu0
      %v2585 = vadd.f32 0.0, %v2584
      %v2586 = vpop.f32.mrf.mxu0
      %v2587 = vpop.f32.mrf.mxu0
      %v2588 = vadd.f32 0.0, %v2587
      %v2589 = vpop.f32.mrf.mxu0
      %2590 = vdwg.mxu0
      %v2592 = vsel %vm2355, %v2336, 0
      %v2595 = vsel %vm2355, %v2344, 0
      %2597 = vmatprep.subr.bf16.mxu0 0
      %2598 = vmatpush1.bf16.xpose.msra.mxu0 0
      %2599 = vmatprep.subr.bf16.mxu0 0
      %2600 = vmatpush1.bf16.xpose.msra.mxu0 0
      %2601 = vmatprep.subr.bf16.mxu0 0
      %2602 = vmatpush1.bf16.xpose.msra.mxu0 0
      %2603 = vmatprep.subr.bf16.mxu0 0
      %2604 = vmatpush1.bf16.xpose.msra.mxu0 0
      %2605 = vmatprep.subr.bf16.mxu0 0
      %2606 = vmatpush1.bf16.xpose.msra.mxu0 0
      %2607 = vmatprep.subr.bf16.mxu0 0
      %2608 = vmatpush1.bf16.xpose.msra.mxu0 0
      %2609 = vmatprep.subr.bf16.mxu0 0
      %2610 = vmatpush1.bf16.xpose.msra.mxu0 0
      %2611 = vmatprep.subr.bf16.mxu0 0
      %2612 = vmatpush1.bf16.xpose.msra.mxu0 %v2595
      %2613 = vmatprep.subr.bf16.mxu0 0
      %2614 = vmatpush2.bf16.xpose.msra.mxu0 0
      %2615 = vmatprep.subr.bf16.mxu0 0
      %2616 = vmatpush2.bf16.xpose.msra.mxu0 0
      %2617 = vmatprep.subr.bf16.mxu0 0
      %2618 = vmatpush2.bf16.xpose.msra.mxu0 0
      %2619 = vmatprep.subr.bf16.mxu0 0
      %2620 = vmatpush2.bf16.xpose.msra.mxu0 0
      %2621 = vmatprep.subr.bf16.mxu0 0
      %2622 = vmatpush2.bf16.xpose.msra.mxu0 0
      %2623 = vmatprep.subr.bf16.mxu0 0
      %2624 = vmatpush2.bf16.xpose.msra.mxu0 0
      %2625 = vmatprep.subr.bf16.mxu0 0
      %2626 = vmatpush2.bf16.xpose.msra.mxu0 0
      %2627 = vmatprep.subr.bf16.mxu0 0
      %2628 = vmatpush2.bf16.xpose.msra.mxu0 0
      %2629 = vmatprep.mubr.bf16.mxu0 0
      %2630 = vmatmul.mubr.bf16.gmra.mxu0 %v2592
      %v2631 = vpop.f32.mrf.mxu0
      %v2632 = vadd.f32 0.0, %v2631
      %v2633 = vpop.f32.mrf.mxu0
      %v2634 = vpop.f32.mrf.mxu0
      %v2635 = vadd.f32 0.0, %v2634
      %v2636 = vpop.f32.mrf.mxu0
      %2637 = vdwg.mxu0
      %v2639 = vsel %vm2355, %v2337, 0
      %v2642 = vsel %vm2355, %v2345, 0
      %2644 = vmatprep.subr.bf16.mxu0 0
      %2645 = vmatpush1.bf16.xpose.msra.mxu0 0
      %2646 = vmatprep.subr.bf16.mxu0 0
      %2647 = vmatpush1.bf16.xpose.msra.mxu0 0
      %2648 = vmatprep.subr.bf16.mxu0 0
      %2649 = vmatpush1.bf16.xpose.msra.mxu0 0
      %2650 = vmatprep.subr.bf16.mxu0 0
      %2651 = vmatpush1.bf16.xpose.msra.mxu0 0
      %2652 = vmatprep.subr.bf16.mxu0 0
      %2653 = vmatpush1.bf16.xpose.msra.mxu0 0
      %2654 = vmatprep.subr.bf16.mxu0 0
      %2655 = vmatpush1.bf16.xpose.msra.mxu0 0
      %2656 = vmatprep.subr.bf16.mxu0 0
      %2657 = vmatpush1.bf16.xpose.msra.mxu0 0
      %2658 = vmatprep.subr.bf16.mxu0 0
      %2659 = vmatpush1.bf16.xpose.msra.mxu0 %v2642
      %2660 = vmatprep.subr.bf16.mxu0 0
      %2661 = vmatpush2.bf16.xpose.msra.mxu0 0
      %2662 = vmatprep.subr.bf16.mxu0 0
      %2663 = vmatpush2.bf16.xpose.msra.mxu0 0
      %2664 = vmatprep.subr.bf16.mxu0 0
      %2665 = vmatpush2.bf16.xpose.msra.mxu0 0
      %2666 = vmatprep.subr.bf16.mxu0 0
      %2667 = vmatpush2.bf16.xpose.msra.mxu0 0
      %2668 = vmatprep.subr.bf16.mxu0 0
      %2669 = vmatpush2.bf16.xpose.msra.mxu0 0
      %2670 = vmatprep.subr.bf16.mxu0 0
      %2671 = vmatpush2.bf16.xpose.msra.mxu0 0
      %2672 = vmatprep.subr.bf16.mxu0 0
      %2673 = vmatpush2.bf16.xpose.msra.mxu0 0
      %2674 = vmatprep.subr.bf16.mxu0 0
      %2675 = vmatpush2.bf16.xpose.msra.mxu0 0
      %2676 = vmatprep.mubr.bf16.mxu0 0
      %2677 = vmatmul.mubr.bf16.gmra.mxu0 %v2639
      %v2678 = vpop.f32.mrf.mxu0
      %v2679 = vadd.f32 0.0, %v2678
      %v2680 = vpop.f32.mrf.mxu0
      %v2681 = vpop.f32.mrf.mxu0
      %v2682 = vadd.f32 0.0, %v2681
      %v2683 = vpop.f32.mrf.mxu0
      %2684 = vdwg.mxu0
      %v2686 = vsel %vm2355, %v2338, 0
      %v2689 = vsel %vm2355, %v2346, 0
      %2691 = vmatprep.subr.bf16.mxu0 0
      %2692 = vmatpush1.bf16.xpose.msra.mxu0 0
      %2693 = vmatprep.subr.bf16.mxu0 0
      %2694 = vmatpush1.bf16.xpose.msra.mxu0 0
      %2695 = vmatprep.subr.bf16.mxu0 0
      %2696 = vmatpush1.bf16.xpose.msra.mxu0 0
      %2697 = vmatprep.subr.bf16.mxu0 0
      %2698 = vmatpush1.bf16.xpose.msra.mxu0 0
      %2699 = vmatprep.subr.bf16.mxu0 0
      %2700 = vmatpush1.bf16.xpose.msra.mxu0 0
      %2701 = vmatprep.subr.bf16.mxu0 0
      %2702 = vmatpush1.bf16.xpose.msra.mxu0 0
      %2703 = vmatprep.subr.bf16.mxu0 0
      %2704 = vmatpush1.bf16.xpose.msra.mxu0 0
      %2705 = vmatprep.subr.bf16.mxu0 0
      %2706 = vmatpush1.bf16.xpose.msra.mxu0 %v2689
      %2707 = vmatprep.subr.bf16.mxu0 0
      %2708 = vmatpush2.bf16.xpose.msra.mxu0 0
      %2709 = vmatprep.subr.bf16.mxu0 0
      %2710 = vmatpush2.bf16.xpose.msra.mxu0 0
      %2711 = vmatprep.subr.bf16.mxu0 0
      %2712 = vmatpush2.bf16.xpose.msra.mxu0 0
      %2713 = vmatprep.subr.bf16.mxu0 0
      %2714 = vmatpush2.bf16.xpose.msra.mxu0 0
      %2715 = vmatprep.subr.bf16.mxu0 0
      %2716 = vmatpush2.bf16.xpose.msra.mxu0 0
      %2717 = vmatprep.subr.bf16.mxu0 0
      %2718 = vmatpush2.bf16.xpose.msra.mxu0 0
      %2719 = vmatprep.subr.bf16.mxu0 0
      %2720 = vmatpush2.bf16.xpose.msra.mxu0 0
      %2721 = vmatprep.subr.bf16.mxu0 0
      %2722 = vmatpush2.bf16.xpose.msra.mxu0 0
      %2723 = vmatprep.mubr.bf16.mxu0 0
      %2724 = vmatmul.mubr.bf16.gmra.mxu0 %v2686
      %v2725 = vpop.f32.mrf.mxu0
      %v2726 = vadd.f32 0.0, %v2725
      %v2727 = vpop.f32.mrf.mxu0
      %v2728 = vpop.f32.mrf.mxu0
      %v2729 = vadd.f32 0.0, %v2728
      %v2730 = vpop.f32.mrf.mxu0
      %2731 = vdwg.mxu0
      %v2732 = vld [vmem:[%s1] sm:$0xff]
      %v2733 = vld [vmem:[%s1 + $0x8] sm:$0xff]
      %v2734 = vld [vmem:[%s1 + $0x10] sm:$0xff]
      %v2735 = vld [vmem:[%s1 + $0x18] sm:$0xff]
      %v2736 = vld [vmem:[%s1 + $0x20] sm:$0xff]
      %v2737 = vld [vmem:[%s1 + $0x28] sm:$0xff]
      %v2738 = vld [vmem:[%s1 + $0x30] sm:$0xff]
      %v2739 = vld [vmem:[%s1 + $0x38] sm:$0xff]
      %v2740 = vadd.f32 %v2397, %v2732
      %v2741 = vadd.f32 %v2400, %v2733
      %v2742 = vadd.f32 %v2444, %v2732
      %v2743 = vadd.f32 %v2447, %v2733
      %v2744 = vadd.f32 %v2491, %v2734
      %v2745 = vadd.f32 %v2494, %v2735
      %v2746 = vadd.f32 %v2538, %v2734
      %v2747 = vadd.f32 %v2541, %v2735
      %v2748 = vadd.f32 %v2585, %v2736
      %v2749 = vadd.f32 %v2588, %v2737
      %v2750 = vadd.f32 %v2632, %v2736
      %v2751 = vadd.f32 %v2635, %v2737
      %v2752 = vadd.f32 %v2679, %v2738
      %v2753 = vadd.f32 %v2682, %v2739
      %v2754 = vadd.f32 %v2726, %v2738
      %v2755 = vadd.f32 %v2729, %v2739
      %v2756 = vld [vmem:[%s389] sm:$0xff]
      %v2757 = vld [vmem:[%s389 + $0x8] sm:$0xff]
      %v2758 = vld [vmem:[%s389 + $0x10] sm:$0xff]
      %v2759 = vld [vmem:[%s389 + $0x18] sm:$0xff]
      %v2760 = vadd.f32 %v2740, %v2756
      %v2761 = vadd.f32 %v2741, %v2757
      %v2762 = vadd.f32 %v2742, %v2758
      %v2763 = vadd.f32 %v2743, %v2759
      %v2764 = vadd.f32 %v2744, %v2756
      %v2765 = vadd.f32 %v2745, %v2757
      %v2766 = vadd.f32 %v2746, %v2758
      %v2767 = vadd.f32 %v2747, %v2759
      %v2768 = vadd.f32 %v2748, %v2756
      %v2769 = vadd.f32 %v2749, %v2757
      %v2770 = vadd.f32 %v2750, %v2758
      %v2771 = vadd.f32 %v2751, %v2759
      %v2772 = vadd.f32 %v2752, %v2756
      %v2773 = vadd.f32 %v2753, %v2757
      %v2774 = vadd.f32 %v2754, %v2758
      %v2775 = vadd.f32 %v2755, %v2759
      %vm2776 = vcmask 130048
      %v2777 = vsel %vm2776, %v2760, -inf
      %2778 = vmax.xlane.f32.xlu0 %v2777
      %v2779 = vpop.xlane.xlu0 %2778
      %v2780 = vsel %vm2776, %v2761, -inf
      %2781 = vmax.xlane.f32.xlu0 %v2780
      %v2782 = vpop.xlane.xlu0 %2781
      %v2783 = vsel %vm2776, %v2762, -inf
      %2784 = vmax.xlane.f32.xlu0 %v2783
      %v2785 = vpop.xlane.xlu0 %2784
      %v2786 = vsel %vm2776, %v2763, -inf
      %2787 = vmax.xlane.f32.xlu0 %v2786
      %v2788 = vpop.xlane.xlu0 %2787
      %v2789 = vsel %vm2776, %v2764, -inf
      %2790 = vmax.xlane.f32.xlu0 %v2789
      %v2791 = vpop.xlane.xlu0 %2790
      %v2792 = vsel %vm2776, %v2765, -inf
      %2793 = vmax.xlane.f32.xlu0 %v2792
      %v2794 = vpop.xlane.xlu0 %2793
      %v2795 = vsel %vm2776, %v2766, -inf
      %2796 = vmax.xlane.f32.xlu0 %v2795
      %v2797 = vpop.xlane.xlu0 %2796
      %v2798 = vsel %vm2776, %v2767, -inf
      %2799 = vmax.xlane.f32.xlu0 %v2798
      %v2800 = vpop.xlane.xlu0 %2799
      %v2801 = vsel %vm2776, %v2768, -inf
      %2802 = vmax.xlane.f32.xlu0 %v2801
      %v2803 = vpop.xlane.xlu0 %2802
      %v2804 = vsel %vm2776, %v2769, -inf
      %2805 = vmax.xlane.f32.xlu0 %v2804
      %v2806 = vpop.xlane.xlu0 %2805
      %v2807 = vsel %vm2776, %v2770, -inf
      %2808 = vmax.xlane.f32.xlu0 %v2807
      %v2809 = vpop.xlane.xlu0 %2808
      %v2810 = vsel %vm2776, %v2771, -inf
      %2811 = vmax.xlane.f32.xlu0 %v2810
      %v2812 = vpop.xlane.xlu0 %2811
      %v2813 = vsel %vm2776, %v2772, -inf
      %2814 = vmax.xlane.f32.xlu0 %v2813
      %v2815 = vpop.xlane.xlu0 %2814
      %v2816 = vsel %vm2776, %v2773, -inf
      %2817 = vmax.xlane.f32.xlu0 %v2816
      %v2818 = vpop.xlane.xlu0 %2817
      %v2819 = vsel %vm2776, %v2774, -inf
      %2820 = vmax.xlane.f32.xlu0 %v2819
      %v2821 = vpop.xlane.xlu0 %2820
      %v2822 = vsel %vm2776, %v2775, -inf
      %2823 = vmax.xlane.f32.xlu0 %v2822
      %v2824 = vpop.xlane.xlu0 %2823
      %v2825 = vsub.f32 %v2760, %v2779
      %v2826 = vsub.f32 %v2761, %v2782
      %v2827 = vsub.f32 %v2762, %v2785
      %v2828 = vsub.f32 %v2763, %v2788
      %v2829 = vsub.f32 %v2764, %v2791
      %v2830 = vsub.f32 %v2765, %v2794
      %v2831 = vsub.f32 %v2766, %v2797
      %v2832 = vsub.f32 %v2767, %v2800
      %v2833 = vsub.f32 %v2768, %v2803
      %v2834 = vsub.f32 %v2769, %v2806
      %v2835 = vsub.f32 %v2770, %v2809
      %v2836 = vsub.f32 %v2771, %v2812
      %v2837 = vsub.f32 %v2772, %v2815
      %v2838 = vsub.f32 %v2773, %v2818
      %v2839 = vsub.f32 %v2774, %v2821
      %v2840 = vsub.f32 %v2775, %v2824
      %v2841 = vmul.f32 %v2825, 1.442695
      %v2842 = vpow.pop %v2841
      %v2843 = vmul.f32 %v2826, 1.442695
      %v2844 = vpow.pop %v2843
      %v2845 = vmul.f32 %v2827, 1.442695
      %v2846 = vpow.pop %v2845
      %v2847 = vmul.f32 %v2828, 1.442695
      %v2848 = vpow.pop %v2847
      %v2849 = vmul.f32 %v2829, 1.442695
      %v2850 = vpow.pop %v2849
      %v2851 = vmul.f32 %v2830, 1.442695
      %v2852 = vpow.pop %v2851
      %v2853 = vmul.f32 %v2831, 1.442695
      %v2854 = vpow.pop %v2853
      %v2855 = vmul.f32 %v2832, 1.442695
      %v2856 = vpow.pop %v2855
      %v2857 = vmul.f32 %v2833, 1.442695
      %v2858 = vpow.pop %v2857
      %v2859 = vmul.f32 %v2834, 1.442695
      %v2860 = vpow.pop %v2859
      %v2861 = vmul.f32 %v2835, 1.442695
      %v2862 = vpow.pop %v2861
      %v2863 = vmul.f32 %v2836, 1.442695
      %v2864 = vpow.pop %v2863
      %v2865 = vmul.f32 %v2837, 1.442695
      %v2866 = vpow.pop %v2865
      %v2867 = vmul.f32 %v2838, 1.442695
      %v2868 = vpow.pop %v2867
      %v2869 = vmul.f32 %v2839, 1.442695
      %v2870 = vpow.pop %v2869
      %v2871 = vmul.f32 %v2840, 1.442695
      %v2872 = vpow.pop %v2871
      %v2873 = vsel %vm2776, %v2842, 0.0
      %2874 = vadd.xlane.f32.xlu0 %v2873
      %v2875 = vpop.xlane.xlu0 %2874
      %v2876 = vsel %vm2776, %v2844, 0.0
      %2877 = vadd.xlane.f32.xlu0 %v2876
      %v2878 = vpop.xlane.xlu0 %2877
      %v2879 = vsel %vm2776, %v2846, 0.0
      %2880 = vadd.xlane.f32.xlu0 %v2879
      %v2881 = vpop.xlane.xlu0 %2880
      %v2882 = vsel %vm2776, %v2848, 0.0
      %2883 = vadd.xlane.f32.xlu0 %v2882
      %v2884 = vpop.xlane.xlu0 %2883
      %v2885 = vsel %vm2776, %v2850, 0.0
      %2886 = vadd.xlane.f32.xlu0 %v2885
      %v2887 = vpop.xlane.xlu0 %2886
      %v2888 = vsel %vm2776, %v2852, 0.0
      %2889 = vadd.xlane.f32.xlu0 %v2888
      %v2890 = vpop.xlane.xlu0 %2889
      %v2891 = vsel %vm2776, %v2854, 0.0
      %2892 = vadd.xlane.f32.xlu0 %v2891
      %v2893 = vpop.xlane.xlu0 %2892
      %v2894 = vsel %vm2776, %v2856, 0.0
      %2895 = vadd.xlane.f32.xlu0 %v2894
      %v2896 = vpop.xlane.xlu0 %2895
      %v2897 = vsel %vm2776, %v2858, 0.0
      %2898 = vadd.xlane.f32.xlu0 %v2897
      %v2899 = vpop.xlane.xlu0 %2898
      %v2900 = vsel %vm2776, %v2860, 0.0
      %2901 = vadd.xlane.f32.xlu0 %v2900
      %v2902 = vpop.xlane.xlu0 %2901
      %v2903 = vsel %vm2776, %v2862, 0.0
      %2904 = vadd.xlane.f32.xlu0 %v2903
      %v2905 = vpop.xlane.xlu0 %2904
      %v2906 = vsel %vm2776, %v2864, 0.0
      %2907 = vadd.xlane.f32.xlu0 %v2906
      %v2908 = vpop.xlane.xlu0 %2907
      %v2909 = vsel %vm2776, %v2866, 0.0
      %2910 = vadd.xlane.f32.xlu0 %v2909
      %v2911 = vpop.xlane.xlu0 %2910
      %v2912 = vsel %vm2776, %v2868, 0.0
      %2913 = vadd.xlane.f32.xlu0 %v2912
      %v2914 = vpop.xlane.xlu0 %2913
      %v2915 = vsel %vm2776, %v2870, 0.0
      %2916 = vadd.xlane.f32.xlu0 %v2915
      %v2917 = vpop.xlane.xlu0 %2916
      %v2918 = vsel %vm2776, %v2872, 0.0
      %2919 = vadd.xlane.f32.xlu0 %v2918
      %v2920 = vpop.xlane.xlu0 %2919
      %v2921 = vrcp.pop %v2875
      %v2922 = vrcp.pop %v2878
      %v2923 = vrcp.pop %v2881
      %v2924 = vrcp.pop %v2884
      %v2925 = vrcp.pop %v2887
      %v2926 = vrcp.pop %v2890
      %v2927 = vrcp.pop %v2893
      %v2928 = vrcp.pop %v2896
      %v2929 = vrcp.pop %v2899
      %v2930 = vrcp.pop %v2902
      %v2931 = vrcp.pop %v2905
      %v2932 = vrcp.pop %v2908
      %v2933 = vrcp.pop %v2911
      %v2934 = vrcp.pop %v2914
      %v2935 = vrcp.pop %v2917
      %v2936 = vrcp.pop %v2920
      %v2937 = vmul.f32 %v2842, %v2921
      %v2938 = vmul.f32 %v2844, %v2922
      %v2939 = vmul.f32 %v2846, %v2923
      %v2940 = vmul.f32 %v2848, %v2924
      %v2941 = vmul.f32 %v2850, %v2925
      %v2942 = vmul.f32 %v2852, %v2926
      %v2943 = vmul.f32 %v2854, %v2927
      %v2944 = vmul.f32 %v2856, %v2928
      %v2945 = vmul.f32 %v2858, %v2929
      %v2946 = vmul.f32 %v2860, %v2930
      %v2947 = vmul.f32 %v2862, %v2931
      %v2948 = vmul.f32 %v2864, %v2932
      %v2949 = vmul.f32 %v2866, %v2933
      %v2950 = vmul.f32 %v2868, %v2934
      %v2951 = vmul.f32 %v2870, %v2935
      %v2952 = vmul.f32 %v2872, %v2936
      %v2953 = vpack.c.bf16 %v2938, %v2937
      %v2954 = vpack.c.bf16 %v2940, %v2939
      %v2955 = vpack.c.bf16 %v2942, %v2941
      %v2956 = vpack.c.bf16 %v2944, %v2943
      %v2957 = vpack.c.bf16 %v2946, %v2945
      %v2958 = vpack.c.bf16 %v2948, %v2947
      %v2959 = vpack.c.bf16 %v2950, %v2949
      %v2960 = vpack.c.bf16 %v2952, %v2951
      %v2962 = vsel %vm2776, %v2953, 0
      %2964 = vmatprep.subr.bf16.mxu0 0
      %2965 = vmatpush1.bf16.msra.mxu0 0
      %2966 = vmatprep.subr.bf16.mxu0 0
      %2967 = vmatpush1.bf16.msra.mxu0 0
      %2968 = vmatprep.subr.bf16.mxu0 0
      %2969 = vmatpush1.bf16.msra.mxu0 0
      %2970 = vmatprep.subr.bf16.mxu0 0
      %2971 = vmatpush1.bf16.msra.mxu0 0
      %2972 = vmatprep.subr.bf16.mxu0 0
      %2973 = vmatpush1.bf16.msra.mxu0 0
      %2974 = vmatprep.subr.bf16.mxu0 0
      %2975 = vmatpush1.bf16.msra.mxu0 0
      %2976 = vmatprep.subr.bf16.mxu0 0
      %2977 = vmatpush1.bf16.msra.mxu0 0
      %2978 = vmatprep.subr.bf16.mxu0 0
      %2979 = vmatpush1.bf16.msra.mxu0 %v2347
      %2980 = vmatprep.subr.bf16.mxu0 0
      %2981 = vmatpush2.bf16.msra.mxu0 0
      %2982 = vmatprep.subr.bf16.mxu0 0
      %2983 = vmatpush2.bf16.msra.mxu0 0
      %2984 = vmatprep.subr.bf16.mxu0 0
      %2985 = vmatpush2.bf16.msra.mxu0 0
      %2986 = vmatprep.subr.bf16.mxu0 0
      %2987 = vmatpush2.bf16.msra.mxu0 0
      %2988 = vmatprep.subr.bf16.mxu0 0
      %2989 = vmatpush2.bf16.msra.mxu0 0
      %2990 = vmatprep.subr.bf16.mxu0 0
      %2991 = vmatpush2.bf16.msra.mxu0 0
      %2992 = vmatprep.subr.bf16.mxu0 0
      %2993 = vmatpush2.bf16.msra.mxu0 0
      %2994 = vmatprep.subr.bf16.mxu0 0
      %2995 = vmatpush2.bf16.msra.mxu0 0
      %2996 = vmatprep.mubr.bf16.mxu0 0
      %2997 = vmatmul.mubr.bf16.gmra.mxu0 %v2962
      %v2998 = vpop.f32.mrf.mxu0
      %v2999 = vadd.f32 0.0, %v2998
      %v3000 = vpop.f32.mrf.mxu0
      %v3001 = vpop.f32.mrf.mxu0
      %v3002 = vadd.f32 0.0, %v3001
      %v3003 = vpop.f32.mrf.mxu0
      %3004 = vdwg.mxu0
      %v3006 = vsel %vm2776, %v2954, 0
      %3008 = vmatprep.subr.bf16.mxu0 0
      %3009 = vmatpush1.bf16.msra.mxu0 0
      %3010 = vmatprep.subr.bf16.mxu0 0
      %3011 = vmatpush1.bf16.msra.mxu0 0
      %3012 = vmatprep.subr.bf16.mxu0 0
      %3013 = vmatpush1.bf16.msra.mxu0 0
      %3014 = vmatprep.subr.bf16.mxu0 0
      %3015 = vmatpush1.bf16.msra.mxu0 0
      %3016 = vmatprep.subr.bf16.mxu0 0
      %3017 = vmatpush1.bf16.msra.mxu0 0
      %3018 = vmatprep.subr.bf16.mxu0 0
      %3019 = vmatpush1.bf16.msra.mxu0 0
      %3020 = vmatprep.subr.bf16.mxu0 0
      %3021 = vmatpush1.bf16.msra.mxu0 0
      %3022 = vmatprep.subr.bf16.mxu0 0
      %3023 = vmatpush1.bf16.msra.mxu0 %v2348
      %3024 = vmatprep.subr.bf16.mxu0 0
      %3025 = vmatpush2.bf16.msra.mxu0 0
      %3026 = vmatprep.subr.bf16.mxu0 0
      %3027 = vmatpush2.bf16.msra.mxu0 0
      %3028 = vmatprep.subr.bf16.mxu0 0
      %3029 = vmatpush2.bf16.msra.mxu0 0
      %3030 = vmatprep.subr.bf16.mxu0 0
      %3031 = vmatpush2.bf16.msra.mxu0 0
      %3032 = vmatprep.subr.bf16.mxu0 0
      %3033 = vmatpush2.bf16.msra.mxu0 0
      %3034 = vmatprep.subr.bf16.mxu0 0
      %3035 = vmatpush2.bf16.msra.mxu0 0
      %3036 = vmatprep.subr.bf16.mxu0 0
      %3037 = vmatpush2.bf16.msra.mxu0 0
      %3038 = vmatprep.subr.bf16.mxu0 0
      %3039 = vmatpush2.bf16.msra.mxu0 0
      %3040 = vmatprep.mubr.bf16.mxu0 0
      %3041 = vmatmul.mubr.bf16.gmra.mxu0 %v3006
      %v3042 = vpop.f32.mrf.mxu0
      %v3043 = vadd.f32 0.0, %v3042
      %v3044 = vpop.f32.mrf.mxu0
      %v3045 = vpop.f32.mrf.mxu0
      %v3046 = vadd.f32 0.0, %v3045
      %v3047 = vpop.f32.mrf.mxu0
      %3048 = vdwg.mxu0
      %v3050 = vsel %vm2776, %v2955, 0
      %3052 = vmatprep.subr.bf16.mxu0 0
      %3053 = vmatpush1.bf16.msra.mxu0 0
      %3054 = vmatprep.subr.bf16.mxu0 0
      %3055 = vmatpush1.bf16.msra.mxu0 0
      %3056 = vmatprep.subr.bf16.mxu0 0
      %3057 = vmatpush1.bf16.msra.mxu0 0
      %3058 = vmatprep.subr.bf16.mxu0 0
      %3059 = vmatpush1.bf16.msra.mxu0 0
      %3060 = vmatprep.subr.bf16.mxu0 0
      %3061 = vmatpush1.bf16.msra.mxu0 0
      %3062 = vmatprep.subr.bf16.mxu0 0
      %3063 = vmatpush1.bf16.msra.mxu0 0
      %3064 = vmatprep.subr.bf16.mxu0 0
      %3065 = vmatpush1.bf16.msra.mxu0 0
      %3066 = vmatprep.subr.bf16.mxu0 0
      %3067 = vmatpush1.bf16.msra.mxu0 %v2349
      %3068 = vmatprep.subr.bf16.mxu0 0
      %3069 = vmatpush2.bf16.msra.mxu0 0
      %3070 = vmatprep.subr.bf16.mxu0 0
      %3071 = vmatpush2.bf16.msra.mxu0 0
      %3072 = vmatprep.subr.bf16.mxu0 0
      %3073 = vmatpush2.bf16.msra.mxu0 0
      %3074 = vmatprep.subr.bf16.mxu0 0
      %3075 = vmatpush2.bf16.msra.mxu0 0
      %3076 = vmatprep.subr.bf16.mxu0 0
      %3077 = vmatpush2.bf16.msra.mxu0 0
      %3078 = vmatprep.subr.bf16.mxu0 0
      %3079 = vmatpush2.bf16.msra.mxu0 0
      %3080 = vmatprep.subr.bf16.mxu0 0
      %3081 = vmatpush2.bf16.msra.mxu0 0
      %3082 = vmatprep.subr.bf16.mxu0 0
      %3083 = vmatpush2.bf16.msra.mxu0 0
      %3084 = vmatprep.mubr.bf16.mxu0 0
      %3085 = vmatmul.mubr.bf16.gmra.mxu0 %v3050
      %v3086 = vpop.f32.mrf.mxu0
      %v3087 = vadd.f32 0.0, %v3086
      %v3088 = vpop.f32.mrf.mxu0
      %v3089 = vpop.f32.mrf.mxu0
      %v3090 = vadd.f32 0.0, %v3089
      %v3091 = vpop.f32.mrf.mxu0
      %3092 = vdwg.mxu0
      %v3094 = vsel %vm2776, %v2956, 0
      %3096 = vmatprep.subr.bf16.mxu0 0
      %3097 = vmatpush1.bf16.msra.mxu0 0
      %3098 = vmatprep.subr.bf16.mxu0 0
      %3099 = vmatpush1.bf16.msra.mxu0 0
      %3100 = vmatprep.subr.bf16.mxu0 0
      %3101 = vmatpush1.bf16.msra.mxu0 0
      %3102 = vmatprep.subr.bf16.mxu0 0
      %3103 = vmatpush1.bf16.msra.mxu0 0
      %3104 = vmatprep.subr.bf16.mxu0 0
      %3105 = vmatpush1.bf16.msra.mxu0 0
      %3106 = vmatprep.subr.bf16.mxu0 0
      %3107 = vmatpush1.bf16.msra.mxu0 0
      %3108 = vmatprep.subr.bf16.mxu0 0
      %3109 = vmatpush1.bf16.msra.mxu0 0
      %3110 = vmatprep.subr.bf16.mxu0 0
      %3111 = vmatpush1.bf16.msra.mxu0 %v2350
      %3112 = vmatprep.subr.bf16.mxu0 0
      %3113 = vmatpush2.bf16.msra.mxu0 0
      %3114 = vmatprep.subr.bf16.mxu0 0
      %3115 = vmatpush2.bf16.msra.mxu0 0
      %3116 = vmatprep.subr.bf16.mxu0 0
      %3117 = vmatpush2.bf16.msra.mxu0 0
      %3118 = vmatprep.subr.bf16.mxu0 0
      %3119 = vmatpush2.bf16.msra.mxu0 0
      %3120 = vmatprep.subr.bf16.mxu0 0
      %3121 = vmatpush2.bf16.msra.mxu0 0
      %3122 = vmatprep.subr.bf16.mxu0 0
      %3123 = vmatpush2.bf16.msra.mxu0 0
      %3124 = vmatprep.subr.bf16.mxu0 0
      %3125 = vmatpush2.bf16.msra.mxu0 0
      %3126 = vmatprep.subr.bf16.mxu0 0
      %3127 = vmatpush2.bf16.msra.mxu0 0
      %3128 = vmatprep.mubr.bf16.mxu0 0
      %3129 = vmatmul.mubr.bf16.gmra.mxu0 %v3094
      %v3130 = vpop.f32.mrf.mxu0
      %v3131 = vadd.f32 0.0, %v3130
      %v3132 = vpop.f32.mrf.mxu0
      %v3133 = vpop.f32.mrf.mxu0
      %v3134 = vadd.f32 0.0, %v3133
      %v3135 = vpop.f32.mrf.mxu0
      %3136 = vdwg.mxu0
      %v3138 = vsel %vm2776, %v2957, 0
      %3140 = vmatprep.subr.bf16.mxu0 0
      %3141 = vmatpush1.bf16.msra.mxu0 0
      %3142 = vmatprep.subr.bf16.mxu0 0
      %3143 = vmatpush1.bf16.msra.mxu0 0
      %3144 = vmatprep.subr.bf16.mxu0 0
      %3145 = vmatpush1.bf16.msra.mxu0 0
      %3146 = vmatprep.subr.bf16.mxu0 0
      %3147 = vmatpush1.bf16.msra.mxu0 0
      %3148 = vmatprep.subr.bf16.mxu0 0
      %3149 = vmatpush1.bf16.msra.mxu0 0
      %3150 = vmatprep.subr.bf16.mxu0 0
      %3151 = vmatpush1.bf16.msra.mxu0 0
      %3152 = vmatprep.subr.bf16.mxu0 0
      %3153 = vmatpush1.bf16.msra.mxu0 0
      %3154 = vmatprep.subr.bf16.mxu0 0
      %3155 = vmatpush1.bf16.msra.mxu0 %v2351
      %3156 = vmatprep.subr.bf16.mxu0 0
      %3157 = vmatpush2.bf16.msra.mxu0 0
      %3158 = vmatprep.subr.bf16.mxu0 0
      %3159 = vmatpush2.bf16.msra.mxu0 0
      %3160 = vmatprep.subr.bf16.mxu0 0
      %3161 = vmatpush2.bf16.msra.mxu0 0
      %3162 = vmatprep.subr.bf16.mxu0 0
      %3163 = vmatpush2.bf16.msra.mxu0 0
      %3164 = vmatprep.subr.bf16.mxu0 0
      %3165 = vmatpush2.bf16.msra.mxu0 0
      %3166 = vmatprep.subr.bf16.mxu0 0
      %3167 = vmatpush2.bf16.msra.mxu0 0
      %3168 = vmatprep.subr.bf16.mxu0 0
      %3169 = vmatpush2.bf16.msra.mxu0 0
      %3170 = vmatprep.subr.bf16.mxu0 0
      %3171 = vmatpush2.bf16.msra.mxu0 0
      %3172 = vmatprep.mubr.bf16.mxu0 0
      %3173 = vmatmul.mubr.bf16.gmra.mxu0 %v3138
      %v3174 = vpop.f32.mrf.mxu0
      %v3175 = vadd.f32 0.0, %v3174
      %v3176 = vpop.f32.mrf.mxu0
      %v3177 = vpop.f32.mrf.mxu0
      %v3178 = vadd.f32 0.0, %v3177
      %v3179 = vpop.f32.mrf.mxu0
      %3180 = vdwg.mxu0
      %v3182 = vsel %vm2776, %v2958, 0
      %3184 = vmatprep.subr.bf16.mxu0 0
      %3185 = vmatpush1.bf16.msra.mxu0 0
      %3186 = vmatprep.subr.bf16.mxu0 0
      %3187 = vmatpush1.bf16.msra.mxu0 0
      %3188 = vmatprep.subr.bf16.mxu0 0
      %3189 = vmatpush1.bf16.msra.mxu0 0
      %3190 = vmatprep.subr.bf16.mxu0 0
      %3191 = vmatpush1.bf16.msra.mxu0 0
      %3192 = vmatprep.subr.bf16.mxu0 0
      %3193 = vmatpush1.bf16.msra.mxu0 0
      %3194 = vmatprep.subr.bf16.mxu0 0
      %3195 = vmatpush1.bf16.msra.mxu0 0
      %3196 = vmatprep.subr.bf16.mxu0 0
      %3197 = vmatpush1.bf16.msra.mxu0 0
      %3198 = vmatprep.subr.bf16.mxu0 0
      %3199 = vmatpush1.bf16.msra.mxu0 %v2352
      %3200 = vmatprep.subr.bf16.mxu0 0
      %3201 = vmatpush2.bf16.msra.mxu0 0
      %3202 = vmatprep.subr.bf16.mxu0 0
      %3203 = vmatpush2.bf16.msra.mxu0 0
      %3204 = vmatprep.subr.bf16.mxu0 0
      %3205 = vmatpush2.bf16.msra.mxu0 0
      %3206 = vmatprep.subr.bf16.mxu0 0
      %3207 = vmatpush2.bf16.msra.mxu0 0
      %3208 = vmatprep.subr.bf16.mxu0 0
      %3209 = vmatpush2.bf16.msra.mxu0 0
      %3210 = vmatprep.subr.bf16.mxu0 0
      %3211 = vmatpush2.bf16.msra.mxu0 0
      %3212 = vmatprep.subr.bf16.mxu0 0
      %3213 = vmatpush2.bf16.msra.mxu0 0
      %3214 = vmatprep.subr.bf16.mxu0 0
      %3215 = vmatpush2.bf16.msra.mxu0 0
      %3216 = vmatprep.mubr.bf16.mxu0 0
      %3217 = vmatmul.mubr.bf16.gmra.mxu0 %v3182
      %v3218 = vpop.f32.mrf.mxu0
      %v3219 = vadd.f32 0.0, %v3218
      %v3220 = vpop.f32.mrf.mxu0
      %v3221 = vpop.f32.mrf.mxu0
      %v3222 = vadd.f32 0.0, %v3221
      %v3223 = vpop.f32.mrf.mxu0
      %3224 = vdwg.mxu0
      %v3226 = vsel %vm2776, %v2959, 0
      %3228 = vmatprep.subr.bf16.mxu0 0
      %3229 = vmatpush1.bf16.msra.mxu0 0
      %3230 = vmatprep.subr.bf16.mxu0 0
      %3231 = vmatpush1.bf16.msra.mxu0 0
      %3232 = vmatprep.subr.bf16.mxu0 0
      %3233 = vmatpush1.bf16.msra.mxu0 0
      %3234 = vmatprep.subr.bf16.mxu0 0
      %3235 = vmatpush1.bf16.msra.mxu0 0
      %3236 = vmatprep.subr.bf16.mxu0 0
      %3237 = vmatpush1.bf16.msra.mxu0 0
      %3238 = vmatprep.subr.bf16.mxu0 0
      %3239 = vmatpush1.bf16.msra.mxu0 0
      %3240 = vmatprep.subr.bf16.mxu0 0
      %3241 = vmatpush1.bf16.msra.mxu0 0
      %3242 = vmatprep.subr.bf16.mxu0 0
      %3243 = vmatpush1.bf16.msra.mxu0 %v2353
      %3244 = vmatprep.subr.bf16.mxu0 0
      %3245 = vmatpush2.bf16.msra.mxu0 0
      %3246 = vmatprep.subr.bf16.mxu0 0
      %3247 = vmatpush2.bf16.msra.mxu0 0
      %3248 = vmatprep.subr.bf16.mxu0 0
      %3249 = vmatpush2.bf16.msra.mxu0 0
      %3250 = vmatprep.subr.bf16.mxu0 0
      %3251 = vmatpush2.bf16.msra.mxu0 0
      %3252 = vmatprep.subr.bf16.mxu0 0
      %3253 = vmatpush2.bf16.msra.mxu0 0
      %3254 = vmatprep.subr.bf16.mxu0 0
      %3255 = vmatpush2.bf16.msra.mxu0 0
      %3256 = vmatprep.subr.bf16.mxu0 0
      %3257 = vmatpush2.bf16.msra.mxu0 0
      %3258 = vmatprep.subr.bf16.mxu0 0
      %3259 = vmatpush2.bf16.msra.mxu0 0
      %3260 = vmatprep.mubr.bf16.mxu0 0
      %3261 = vmatmul.mubr.bf16.gmra.mxu0 %v3226
      %v3262 = vpop.f32.mrf.mxu0
      %v3263 = vadd.f32 0.0, %v3262
      %v3264 = vpop.f32.mrf.mxu0
      %v3265 = vpop.f32.mrf.mxu0
      %v3266 = vadd.f32 0.0, %v3265
      %v3267 = vpop.f32.mrf.mxu0
      %3268 = vdwg.mxu0
      %v3270 = vsel %vm2776, %v2960, 0
      %3272 = vmatprep.subr.bf16.mxu0 0
      %3273 = vmatpush1.bf16.msra.mxu0 0
      %3274 = vmatprep.subr.bf16.mxu0 0
      %3275 = vmatpush1.bf16.msra.mxu0 0
      %3276 = vmatprep.subr.bf16.mxu0 0
      %3277 = vmatpush1.bf16.msra.mxu0 0
      %3278 = vmatprep.subr.bf16.mxu0 0
      %3279 = vmatpush1.bf16.msra.mxu0 0
      %3280 = vmatprep.subr.bf16.mxu0 0
      %3281 = vmatpush1.bf16.msra.mxu0 0
      %3282 = vmatprep.subr.bf16.mxu0 0
      %3283 = vmatpush1.bf16.msra.mxu0 0
      %3284 = vmatprep.subr.bf16.mxu0 0
      %3285 = vmatpush1.bf16.msra.mxu0 0
      %3286 = vmatprep.subr.bf16.mxu0 0
      %3287 = vmatpush1.bf16.msra.mxu0 %v2354
      %3288 = vmatprep.subr.bf16.mxu0 0
      %3289 = vmatpush2.bf16.msra.mxu0 0
      %3290 = vmatprep.subr.bf16.mxu0 0
      %3291 = vmatpush2.bf16.msra.mxu0 0
      %3292 = vmatprep.subr.bf16.mxu0 0
      %3293 = vmatpush2.bf16.msra.mxu0 0
      %3294 = vmatprep.subr.bf16.mxu0 0
      %3295 = vmatpush2.bf16.msra.mxu0 0
      %3296 = vmatprep.subr.bf16.mxu0 0
      %3297 = vmatpush2.bf16.msra.mxu0 0
      %3298 = vmatprep.subr.bf16.mxu0 0
      %3299 = vmatpush2.bf16.msra.mxu0 0
      %3300 = vmatprep.subr.bf16.mxu0 0
      %3301 = vmatpush2.bf16.msra.mxu0 0
      %3302 = vmatprep.subr.bf16.mxu0 0
      %3303 = vmatpush2.bf16.msra.mxu0 0
      %3304 = vmatprep.mubr.bf16.mxu0 0
      %3305 = vmatmul.mubr.bf16.gmra.mxu0 %v3270
      %v3306 = vpop.f32.mrf.mxu0
      %v3307 = vadd.f32 0.0, %v3306
      %v3308 = vpop.f32.mrf.mxu0
      %v3309 = vpop.f32.mrf.mxu0
      %v3310 = vadd.f32 0.0, %v3309
      %v3311 = vpop.f32.mrf.mxu0
      %3312 = vdwg.mxu0
      %v3313 = vcombine.low %v2999, %v3175
      %v3314 = vcombine.high %v2999, %v3175
      %v3316 = vunpack.c.l.s4 1983009808
      %v3317 = vunpack.c.0.s8 %v3316
      %v3318 = vlaneseq
      %v3319 = vshrl.u32 %v3318, 7
      %v3320 = vsub.s32 %v3317, %v3319
      %v3321 = vrot.slane %v3313, %v3320
      %v3323 = vunpack.c.l.s4 1983009808
      %v3324 = vunpack.c.0.s8 %v3323
      %v3325 = vlaneseq
      %v3326 = vshrl.u32 %v3325, 7
      %v3327 = vsub.s32 %v3324, %v3326
      %v3328 = vrot.slane %v3314, %v3327
      %v3329 = vcombine.low %v3087, %v3263
      %v3330 = vcombine.high %v3087, %v3263
      %v3332 = vunpack.c.l.s4 1983009808
      %v3333 = vunpack.c.0.s8 %v3332
      %v3334 = vlaneseq
      %v3335 = vshrl.u32 %v3334, 7
      %v3336 = vsub.s32 %v3333, %v3335
      %v3337 = vrot.slane %v3329, %v3336
      %v3339 = vunpack.c.l.s4 1983009808
      %v3340 = vunpack.c.0.s8 %v3339
      %v3341 = vlaneseq
      %v3342 = vshrl.u32 %v3341, 7
      %v3343 = vsub.s32 %v3340, %v3342
      %v3344 = vrot.slane %v3330, %v3343
      %v3345 = vcombine.low %v3321, %v3337
      %v3346 = vcombine.high %v3321, %v3337
      %v3348 = vunpack.c.l.s4 1934713408
      %v3349 = vunpack.c.0.s8 %v3348
      %v3350 = vlaneseq
      %v3351 = vshrl.u32 %v3350, 7
      %v3352 = vsub.s32 %v3349, %v3351
      %v3353 = vrot.slane %v3345, %v3352
      %v3355 = vunpack.c.l.s4 1934713408
      %v3356 = vunpack.c.0.s8 %v3355
      %v3357 = vlaneseq
      %v3358 = vshrl.u32 %v3357, 7
      %v3359 = vsub.s32 %v3356, %v3358
      %v3360 = vrot.slane %v3346, %v3359
      %v3361 = vcombine.low %v3328, %v3344
      %v3362 = vcombine.high %v3328, %v3344
      %v3364 = vunpack.c.l.s4 1934713408
      %v3365 = vunpack.c.0.s8 %v3364
      %v3366 = vlaneseq
      %v3367 = vshrl.u32 %v3366, 7
      %v3368 = vsub.s32 %v3365, %v3367
      %v3369 = vrot.slane %v3361, %v3368
      %v3371 = vunpack.c.l.s4 1934713408
      %v3372 = vunpack.c.0.s8 %v3371
      %v3373 = vlaneseq
      %v3374 = vshrl.u32 %v3373, 7
      %v3375 = vsub.s32 %v3372, %v3374
      %v3376 = vrot.slane %v3362, %v3375
      %v3377 = vcombine.high %v3353, 0.0
      %v3378 = vcombine.high %v3360, 0.0
      %v3379 = vcombine.high %v3369, 0.0
      %v3380 = vcombine.high %v3376, 0.0
      %v3381 = vcombine.low %v3002, %v3178
      %v3382 = vcombine.high %v3002, %v3178
      %v3384 = vunpack.c.l.s4 1983009808
      %v3385 = vunpack.c.0.s8 %v3384
      %v3386 = vlaneseq
      %v3387 = vshrl.u32 %v3386, 7
      %v3388 = vsub.s32 %v3385, %v3387
      %v3389 = vrot.slane %v3381, %v3388
      %v3391 = vunpack.c.l.s4 1983009808
      %v3392 = vunpack.c.0.s8 %v3391
      %v3393 = vlaneseq
      %v3394 = vshrl.u32 %v3393, 7
      %v3395 = vsub.s32 %v3392, %v3394
      %v3396 = vrot.slane %v3382, %v3395
      %v3397 = vcombine.low %v3090, %v3266
      %v3398 = vcombine.high %v3090, %v3266
      %v3400 = vunpack.c.l.s4 1983009808
      %v3401 = vunpack.c.0.s8 %v3400
      %v3402 = vlaneseq
      %v3403 = vshrl.u32 %v3402, 7
      %v3404 = vsub.s32 %v3401, %v3403
      %v3405 = vrot.slane %v3397, %v3404
      %v3407 = vunpack.c.l.s4 1983009808
      %v3408 = vunpack.c.0.s8 %v3407
      %v3409 = vlaneseq
      %v3410 = vshrl.u32 %v3409, 7
      %v3411 = vsub.s32 %v3408, %v3410
      %v3412 = vrot.slane %v3398, %v3411
      %v3413 = vcombine.low %v3389, %v3405
      %v3414 = vcombine.high %v3389, %v3405
      %v3416 = vunpack.c.l.s4 1934713408
      %v3417 = vunpack.c.0.s8 %v3416
      %v3418 = vlaneseq
      %v3419 = vshrl.u32 %v3418, 7
      %v3420 = vsub.s32 %v3417, %v3419
      %v3421 = vrot.slane %v3413, %v3420
      %v3423 = vunpack.c.l.s4 1934713408
      %v3424 = vunpack.c.0.s8 %v3423
      %v3425 = vlaneseq
      %v3426 = vshrl.u32 %v3425, 7
      %v3427 = vsub.s32 %v3424, %v3426
      %v3428 = vrot.slane %v3414, %v3427
      %v3429 = vcombine.low %v3396, %v3412
      %v3430 = vcombine.high %v3396, %v3412
      %v3432 = vunpack.c.l.s4 1934713408
      %v3433 = vunpack.c.0.s8 %v3432
      %v3434 = vlaneseq
      %v3435 = vshrl.u32 %v3434, 7
      %v3436 = vsub.s32 %v3433, %v3435
      %v3437 = vrot.slane %v3429, %v3436
      %v3439 = vunpack.c.l.s4 1934713408
      %v3440 = vunpack.c.0.s8 %v3439
      %v3441 = vlaneseq
      %v3442 = vshrl.u32 %v3441, 7
      %v3443 = vsub.s32 %v3440, %v3442
      %v3444 = vrot.slane %v3430, %v3443
      %v3445 = vcombine.high %v3421, 0.0
      %v3446 = vcombine.high %v3428, 0.0
      %v3447 = vcombine.high %v3437, 0.0
      %v3448 = vcombine.high %v3444, 0.0
      %v3449 = vcombine.low %v3043, %v3219
      %v3450 = vcombine.high %v3043, %v3219
      %v3452 = vunpack.c.l.s4 1983009808
      %v3453 = vunpack.c.0.s8 %v3452
      %v3454 = vlaneseq
      %v3455 = vshrl.u32 %v3454, 7
      %v3456 = vsub.s32 %v3453, %v3455
      %v3457 = vrot.slane %v3449, %v3456
      %v3459 = vunpack.c.l.s4 1983009808
      %v3460 = vunpack.c.0.s8 %v3459
      %v3461 = vlaneseq
      %v3462 = vshrl.u32 %v3461, 7
      %v3463 = vsub.s32 %v3460, %v3462
      %v3464 = vrot.slane %v3450, %v3463
      %v3465 = vcombine.low %v3131, %v3307
      %v3466 = vcombine.high %v3131, %v3307
      %v3468 = vunpack.c.l.s4 1983009808
      %v3469 = vunpack.c.0.s8 %v3468
      %v3470 = vlaneseq
      %v3471 = vshrl.u32 %v3470, 7
      %v3472 = vsub.s32 %v3469, %v3471
      %v3473 = vrot.slane %v3465, %v3472
      %v3475 = vunpack.c.l.s4 1983009808
      %v3476 = vunpack.c.0.s8 %v3475
      %v3477 = vlaneseq
      %v3478 = vshrl.u32 %v3477, 7
      %v3479 = vsub.s32 %v3476, %v3478
      %v3480 = vrot.slane %v3466, %v3479
      %v3481 = vcombine.low %v3457, %v3473
      %v3482 = vcombine.high %v3457, %v3473
      %v3484 = vunpack.c.l.s4 1934713408
      %v3485 = vunpack.c.0.s8 %v3484
      %v3486 = vlaneseq
      %v3487 = vshrl.u32 %v3486, 7
      %v3488 = vsub.s32 %v3485, %v3487
      %v3489 = vrot.slane %v3481, %v3488
      %v3491 = vunpack.c.l.s4 1934713408
      %v3492 = vunpack.c.0.s8 %v3491
      %v3493 = vlaneseq
      %v3494 = vshrl.u32 %v3493, 7
      %v3495 = vsub.s32 %v3492, %v3494
      %v3496 = vrot.slane %v3482, %v3495
      %v3497 = vcombine.low %v3464, %v3480
      %v3498 = vcombine.high %v3464, %v3480
      %v3500 = vunpack.c.l.s4 1934713408
      %v3501 = vunpack.c.0.s8 %v3500
      %v3502 = vlaneseq
      %v3503 = vshrl.u32 %v3502, 7
      %v3504 = vsub.s32 %v3501, %v3503
      %v3505 = vrot.slane %v3497, %v3504
      %v3507 = vunpack.c.l.s4 1934713408
      %v3508 = vunpack.c.0.s8 %v3507
      %v3509 = vlaneseq
      %v3510 = vshrl.u32 %v3509, 7
      %v3511 = vsub.s32 %v3508, %v3510
      %v3512 = vrot.slane %v3498, %v3511
      %v3513 = vcombine.high %v3489, 0.0
      %v3514 = vcombine.high %v3496, 0.0
      %v3515 = vcombine.high %v3505, 0.0
      %v3516 = vcombine.high %v3512, 0.0
      %v3517 = vcombine.low %v3046, %v3222
      %v3518 = vcombine.high %v3046, %v3222
      %v3520 = vunpack.c.l.s4 1983009808
      %v3521 = vunpack.c.0.s8 %v3520
      %v3522 = vlaneseq
      %v3523 = vshrl.u32 %v3522, 7
      %v3524 = vsub.s32 %v3521, %v3523
      %v3525 = vrot.slane %v3517, %v3524
      %v3527 = vunpack.c.l.s4 1983009808
      %v3528 = vunpack.c.0.s8 %v3527
      %v3529 = vlaneseq
      %v3530 = vshrl.u32 %v3529, 7
      %v3531 = vsub.s32 %v3528, %v3530
      %v3532 = vrot.slane %v3518, %v3531
      %v3533 = vcombine.low %v3134, %v3310
      %v3534 = vcombine.high %v3134, %v3310
      %v3536 = vunpack.c.l.s4 1983009808
      %v3537 = vunpack.c.0.s8 %v3536
      %v3538 = vlaneseq
      %v3539 = vshrl.u32 %v3538, 7
      %v3540 = vsub.s32 %v3537, %v3539
      %v3541 = vrot.slane %v3533, %v3540
      %v3543 = vunpack.c.l.s4 1983009808
      %v3544 = vunpack.c.0.s8 %v3543
      %v3545 = vlaneseq
      %v3546 = vshrl.u32 %v3545, 7
      %v3547 = vsub.s32 %v3544, %v3546
      %v3548 = vrot.slane %v3534, %v3547
      %v3549 = vcombine.low %v3525, %v3541
      %v3550 = vcombine.high %v3525, %v3541
      %v3552 = vunpack.c.l.s4 1934713408
      %v3553 = vunpack.c.0.s8 %v3552
      %v3554 = vlaneseq
      %v3555 = vshrl.u32 %v3554, 7
      %v3556 = vsub.s32 %v3553, %v3555
      %v3557 = vrot.slane %v3549, %v3556
      %v3559 = vunpack.c.l.s4 1934713408
      %v3560 = vunpack.c.0.s8 %v3559
      %v3561 = vlaneseq
      %v3562 = vshrl.u32 %v3561, 7
      %v3563 = vsub.s32 %v3560, %v3562
      %v3564 = vrot.slane %v3550, %v3563
      %v3565 = vcombine.low %v3532, %v3548
      %v3566 = vcombine.high %v3532, %v3548
      %v3568 = vunpack.c.l.s4 1934713408
      %v3569 = vunpack.c.0.s8 %v3568
      %v3570 = vlaneseq
      %v3571 = vshrl.u32 %v3570, 7
      %v3572 = vsub.s32 %v3569, %v3571
      %v3573 = vrot.slane %v3565, %v3572
      %v3575 = vunpack.c.l.s4 1934713408
      %v3576 = vunpack.c.0.s8 %v3575
      %v3577 = vlaneseq
      %v3578 = vshrl.u32 %v3577, 7
      %v3579 = vsub.s32 %v3576, %v3578
      %v3580 = vrot.slane %v3566, %v3579
      %v3581 = vcombine.high %v3557, 0.0
      %v3582 = vcombine.high %v3564, 0.0
      %v3583 = vcombine.high %v3573, 0.0
      %v3584 = vcombine.high %v3580, 0.0
      %v3585 = vcombine.low %v3353, %v3360
      %v3587 = vunpack.c.l.s4 1983009808
      %v3588 = vunpack.c.0.s8 %v3587
      %v3589 = vlaneseq
      %v3590 = vshrl.u32 %v3589, 7
      %v3591 = vsub.s32 %v3588, %v3590
      %v3592 = vrot.slane %v3585, %v3591
      %v3593 = vcombine.low %v3377, %v3378
      %v3595 = vunpack.c.l.s4 1983009808
      %v3596 = vunpack.c.0.s8 %v3595
      %v3597 = vlaneseq
      %v3598 = vshrl.u32 %v3597, 7
      %v3599 = vsub.s32 %v3596, %v3598
      %v3600 = vrot.slane %v3593, %v3599
      %v3601 = vcombine.low %v3369, %v3376
      %v3603 = vunpack.c.l.s4 1983009808
      %v3604 = vunpack.c.0.s8 %v3603
      %v3605 = vlaneseq
      %v3606 = vshrl.u32 %v3605, 7
      %v3607 = vsub.s32 %v3604, %v3606
      %v3608 = vrot.slane %v3601, %v3607
      %v3609 = vcombine.low %v3379, %v3380
      %v3611 = vunpack.c.l.s4 1983009808
      %v3612 = vunpack.c.0.s8 %v3611
      %v3613 = vlaneseq
      %v3614 = vshrl.u32 %v3613, 7
      %v3615 = vsub.s32 %v3612, %v3614
      %v3616 = vrot.slane %v3609, %v3615
      %v3617 = vcombine.low %v3592, %v3600
      %v3618 = vcombine.high %v3592, %v3600
      %v3620 = vunpack.c.l.s4 1934713408
      %v3621 = vunpack.c.0.s8 %v3620
      %v3622 = vlaneseq
      %v3623 = vshrl.u32 %v3622, 7
      %v3624 = vsub.s32 %v3621, %v3623
      %v3625 = vrot.slane %v3617, %v3624
      %v3627 = vunpack.c.l.s4 1934713408
      %v3628 = vunpack.c.0.s8 %v3627
      %v3629 = vlaneseq
      %v3630 = vshrl.u32 %v3629, 7
      %v3631 = vsub.s32 %v3628, %v3630
      %v3632 = vrot.slane %v3618, %v3631
      %v3633 = vcombine.low %v3608, %v3616
      %v3634 = vcombine.high %v3608, %v3616
      %v3636 = vunpack.c.l.s4 1934713408
      %v3637 = vunpack.c.0.s8 %v3636
      %v3638 = vlaneseq
      %v3639 = vshrl.u32 %v3638, 7
      %v3640 = vsub.s32 %v3637, %v3639
      %v3641 = vrot.slane %v3633, %v3640
      %v3643 = vunpack.c.l.s4 1934713408
      %v3644 = vunpack.c.0.s8 %v3643
      %v3645 = vlaneseq
      %v3646 = vshrl.u32 %v3645, 7
      %v3647 = vsub.s32 %v3644, %v3646
      %v3648 = vrot.slane %v3634, %v3647
      %v3649 = vcombine.low %v3625, %v3641
      %v3650 = vcombine.high %v3625, %v3641
      %v3651 = vcombine.low %v3632, %v3648
      %v3652 = vcombine.high %v3632, %v3648
      %v3653 = vcombine.low %v3421, %v3428
      %v3655 = vunpack.c.l.s4 1983009808
      %v3656 = vunpack.c.0.s8 %v3655
      %v3657 = vlaneseq
      %v3658 = vshrl.u32 %v3657, 7
      %v3659 = vsub.s32 %v3656, %v3658
      %v3660 = vrot.slane %v3653, %v3659
      %v3661 = vcombine.low %v3445, %v3446
      %v3663 = vunpack.c.l.s4 1983009808
      %v3664 = vunpack.c.0.s8 %v3663
      %v3665 = vlaneseq
      %v3666 = vshrl.u32 %v3665, 7
      %v3667 = vsub.s32 %v3664, %v3666
      %v3668 = vrot.slane %v3661, %v3667
      %v3669 = vcombine.low %v3437, %v3444
      %v3671 = vunpack.c.l.s4 1983009808
      %v3672 = vunpack.c.0.s8 %v3671
      %v3673 = vlaneseq
      %v3674 = vshrl.u32 %v3673, 7
      %v3675 = vsub.s32 %v3672, %v3674
      %v3676 = vrot.slane %v3669, %v3675
      %v3677 = vcombine.low %v3447, %v3448
      %v3679 = vunpack.c.l.s4 1983009808
      %v3680 = vunpack.c.0.s8 %v3679
      %v3681 = vlaneseq
      %v3682 = vshrl.u32 %v3681, 7
      %v3683 = vsub.s32 %v3680, %v3682
      %v3684 = vrot.slane %v3677, %v3683
      %v3685 = vcombine.low %v3660, %v3668
      %v3686 = vcombine.high %v3660, %v3668
      %v3688 = vunpack.c.l.s4 1934713408
      %v3689 = vunpack.c.0.s8 %v3688
      %v3690 = vlaneseq
      %v3691 = vshrl.u32 %v3690, 7
      %v3692 = vsub.s32 %v3689, %v3691
      %v3693 = vrot.slane %v3685, %v3692
      %v3695 = vunpack.c.l.s4 1934713408
      %v3696 = vunpack.c.0.s8 %v3695
      %v3697 = vlaneseq
      %v3698 = vshrl.u32 %v3697, 7
      %v3699 = vsub.s32 %v3696, %v3698
      %v3700 = vrot.slane %v3686, %v3699
      %v3701 = vcombine.low %v3676, %v3684
      %v3702 = vcombine.high %v3676, %v3684
      %v3704 = vunpack.c.l.s4 1934713408
      %v3705 = vunpack.c.0.s8 %v3704
      %v3706 = vlaneseq
      %v3707 = vshrl.u32 %v3706, 7
      %v3708 = vsub.s32 %v3705, %v3707
      %v3709 = vrot.slane %v3701, %v3708
      %v3711 = vunpack.c.l.s4 1934713408
      %v3712 = vunpack.c.0.s8 %v3711
      %v3713 = vlaneseq
      %v3714 = vshrl.u32 %v3713, 7
      %v3715 = vsub.s32 %v3712, %v3714
      %v3716 = vrot.slane %v3702, %v3715
      %v3717 = vcombine.low %v3693, %v3709
      %v3718 = vcombine.high %v3693, %v3709
      %v3719 = vcombine.low %v3700, %v3716
      %v3720 = vcombine.high %v3700, %v3716
      %v3721 = vcombine.low %v3489, %v3496
      %v3723 = vunpack.c.l.s4 1983009808
      %v3724 = vunpack.c.0.s8 %v3723
      %v3725 = vlaneseq
      %v3726 = vshrl.u32 %v3725, 7
      %v3727 = vsub.s32 %v3724, %v3726
      %v3728 = vrot.slane %v3721, %v3727
      %v3729 = vcombine.low %v3513, %v3514
      %v3731 = vunpack.c.l.s4 1983009808
      %v3732 = vunpack.c.0.s8 %v3731
      %v3733 = vlaneseq
      %v3734 = vshrl.u32 %v3733, 7
      %v3735 = vsub.s32 %v3732, %v3734
      %v3736 = vrot.slane %v3729, %v3735
      %v3737 = vcombine.low %v3505, %v3512
      %v3739 = vunpack.c.l.s4 1983009808
      %v3740 = vunpack.c.0.s8 %v3739
      %v3741 = vlaneseq
      %v3742 = vshrl.u32 %v3741, 7
      %v3743 = vsub.s32 %v3740, %v3742
      %v3744 = vrot.slane %v3737, %v3743
      %v3745 = vcombine.low %v3515, %v3516
      %v3747 = vunpack.c.l.s4 1983009808
      %v3748 = vunpack.c.0.s8 %v3747
      %v3749 = vlaneseq
      %v3750 = vshrl.u32 %v3749, 7
      %v3751 = vsub.s32 %v3748, %v3750
      %v3752 = vrot.slane %v3745, %v3751
      %v3753 = vcombine.low %v3728, %v3736
      %v3754 = vcombine.high %v3728, %v3736
      %v3756 = vunpack.c.l.s4 1934713408
      %v3757 = vunpack.c.0.s8 %v3756
      %v3758 = vlaneseq
      %v3759 = vshrl.u32 %v3758, 7
      %v3760 = vsub.s32 %v3757, %v3759
      %v3761 = vrot.slane %v3753, %v3760
      %v3763 = vunpack.c.l.s4 1934713408
      %v3764 = vunpack.c.0.s8 %v3763
      %v3765 = vlaneseq
      %v3766 = vshrl.u32 %v3765, 7
      %v3767 = vsub.s32 %v3764, %v3766
      %v3768 = vrot.slane %v3754, %v3767
      %v3769 = vcombine.low %v3744, %v3752
      %v3770 = vcombine.high %v3744, %v3752
      %v3772 = vunpack.c.l.s4 1934713408
      %v3773 = vunpack.c.0.s8 %v3772
      %v3774 = vlaneseq
      %v3775 = vshrl.u32 %v3774, 7
      %v3776 = vsub.s32 %v3773, %v3775
      %v3777 = vrot.slane %v3769, %v3776
      %v3779 = vunpack.c.l.s4 1934713408
      %v3780 = vunpack.c.0.s8 %v3779
      %v3781 = vlaneseq
      %v3782 = vshrl.u32 %v3781, 7
      %v3783 = vsub.s32 %v3780, %v3782
      %v3784 = vrot.slane %v3770, %v3783
      %v3785 = vcombine.low %v3761, %v3777
      %v3786 = vcombine.high %v3761, %v3777
      %v3787 = vcombine.low %v3768, %v3784
      %v3788 = vcombine.high %v3768, %v3784
      %v3789 = vcombine.low %v3557, %v3564
      %v3791 = vunpack.c.l.s4 1983009808
      %v3792 = vunpack.c.0.s8 %v3791
      %v3793 = vlaneseq
      %v3794 = vshrl.u32 %v3793, 7
      %v3795 = vsub.s32 %v3792, %v3794
      %v3796 = vrot.slane %v3789, %v3795
      %v3797 = vcombine.low %v3581, %v3582
      %v3799 = vunpack.c.l.s4 1983009808
      %v3800 = vunpack.c.0.s8 %v3799
      %v3801 = vlaneseq
      %v3802 = vshrl.u32 %v3801, 7
      %v3803 = vsub.s32 %v3800, %v3802
      %v3804 = vrot.slane %v3797, %v3803
      %v3805 = vcombine.low %v3573, %v3580
      %v3807 = vunpack.c.l.s4 1983009808
      %v3808 = vunpack.c.0.s8 %v3807
      %v3809 = vlaneseq
      %v3810 = vshrl.u32 %v3809, 7
      %v3811 = vsub.s32 %v3808, %v3810
      %v3812 = vrot.slane %v3805, %v3811
      %v3813 = vcombine.low %v3583, %v3584
      %v3815 = vunpack.c.l.s4 1983009808
      %v3816 = vunpack.c.0.s8 %v3815
      %v3817 = vlaneseq
      %v3818 = vshrl.u32 %v3817, 7
      %v3819 = vsub.s32 %v3816, %v3818
      %v3820 = vrot.slane %v3813, %v3819
      %v3821 = vcombine.low %v3796, %v3804
      %v3822 = vcombine.high %v3796, %v3804
      %v3824 = vunpack.c.l.s4 1934713408
      %v3825 = vunpack.c.0.s8 %v3824
      %v3826 = vlaneseq
      %v3827 = vshrl.u32 %v3826, 7
      %v3828 = vsub.s32 %v3825, %v3827
      %v3829 = vrot.slane %v3821, %v3828
      %v3831 = vunpack.c.l.s4 1934713408
      %v3832 = vunpack.c.0.s8 %v3831
      %v3833 = vlaneseq
      %v3834 = vshrl.u32 %v3833, 7
      %v3835 = vsub.s32 %v3832, %v3834
      %v3836 = vrot.slane %v3822, %v3835
      %v3837 = vcombine.low %v3812, %v3820
      %v3838 = vcombine.high %v3812, %v3820
      %v3840 = vunpack.c.l.s4 1934713408
      %v3841 = vunpack.c.0.s8 %v3840
      %v3842 = vlaneseq
      %v3843 = vshrl.u32 %v3842, 7
      %v3844 = vsub.s32 %v3841, %v3843
      %v3845 = vrot.slane %v3837, %v3844
      %v3847 = vunpack.c.l.s4 1934713408
      %v3848 = vunpack.c.0.s8 %v3847
      %v3849 = vlaneseq
      %v3850 = vshrl.u32 %v3849, 7
      %v3851 = vsub.s32 %v3848, %v3850
      %v3852 = vrot.slane %v3838, %v3851
      %v3853 = vcombine.low %v3829, %v3845
      %v3854 = vcombine.high %v3829, %v3845
      %v3855 = vcombine.low %v3836, %v3852
      %v3856 = vcombine.high %v3836, %v3852
      %3861 = vrot.lane.b32.xlu0 %v3650, 8
      %v3862 = vpop.permute.xlu0 %3861
      %3863 = vrot.lane.b32.xlu0 %v3718, 8
      %v3864 = vpop.permute.xlu0 %3863
      %3865 = vrot.lane.b32.xlu0 %v3786, 8
      %v3866 = vpop.permute.xlu0 %3865
      %3867 = vrot.lane.b32.xlu0 %v3854, 8
      %v3868 = vpop.permute.xlu0 %3867
      %3877 = vrot.lane.b32.xlu0 %v3651, 16
      %v3878 = vpop.permute.xlu0 %3877
      %3879 = vrot.lane.b32.xlu0 %v3719, 16
      %v3880 = vpop.permute.xlu0 %3879
      %3881 = vrot.lane.b32.xlu0 %v3787, 16
      %v3882 = vpop.permute.xlu0 %3881
      %3883 = vrot.lane.b32.xlu0 %v3855, 16
      %v3884 = vpop.permute.xlu0 %3883
      %3893 = vrot.lane.b32.xlu0 %v3652, 24
      %v3894 = vpop.permute.xlu0 %3893
      %3895 = vrot.lane.b32.xlu0 %v3720, 24
      %v3896 = vpop.permute.xlu0 %3895
      %3897 = vrot.lane.b32.xlu0 %v3788, 24
      %v3898 = vpop.permute.xlu0 %3897
      %3899 = vrot.lane.b32.xlu0 %v3856, 24
      %v3900 = vpop.permute.xlu0 %3899
      %v3905 = vsel %vm2355, %v3649, %v3862
      %v3906 = vsel %vm2355, %v3717, %v3864
      %v3907 = vsel %vm2355, %v3785, %v3866
      %v3908 = vsel %vm2355, %v3853, %v3868
      %v3909 = vsel %vm2776, %v3905, %v3878
      %v3910 = vsel %vm2776, %v3906, %v3880
      %v3911 = vsel %vm2776, %v3907, %v3882
      %v3912 = vsel %vm2776, %v3908, %v3884
      %vm3913 = vcmask 195584
      %v3914 = vsel %vm3913, %v3909, %v3894
      %v3915 = vsel %vm3913, %v3910, %v3896
      %v3916 = vsel %vm3913, %v3911, %v3898
      %v3917 = vsel %vm3913, %v3912, %v3900
      %v3918 = vpack.c.bf16 %v3915, %v3914
      %v3919 = vpack.c.bf16 %v3917, %v3916
      %v3920 = vld [vmem:[%s7] sm:$0xf]
      %v3921 = vld [vmem:[%s7 + $0x4] sm:$0xf]
      %v3922 = vld [vmem:[%s7 + $0x8] sm:$0xf]
      %v3923 = vld [vmem:[%s7 + $0xc] sm:$0xf]
      %v3924 = vld [vmem:[%s8] sm:$0x1]
      %v3926 = vlaneseq
      %v3927 = vshrl.u32 %v3926, 7
      %v3928 = vsub.s32 0, %v3927
      %v3929 = vrot.slane %v3924, %v3928
      %v3935 = vunpack.c.l.b16 %v3920
      %v3936 = vunpack.c.l.b16 %v3921
      %v3937 = vunpack.c.l.b16 %v3922
      %v3938 = vunpack.c.l.b16 %v3923
      %v3939 = vpack.c.b16 %v3936, %v3935
      %v3940 = vpack.c.b16 %v3938, %v3937
      %v3944 = vsel %vm407, %v3918, 0
      %v3947 = vsel %vm407, %v3919, 0
      %3949 = vmatprep.subr.bf16.mxu0 0
      %3950 = vmatpush1.bf16.msra.mxu0 0
      %3951 = vmatprep.subr.bf16.mxu0 0
      %3952 = vmatpush1.bf16.msra.mxu0 0
      %3953 = vmatprep.subr.bf16.mxu0 0
      %3954 = vmatpush1.bf16.msra.mxu0 0
      %3955 = vmatprep.subr.bf16.mxu0 0
      %3956 = vmatpush1.bf16.msra.mxu0 0
      %3957 = vmatprep.subr.bf16.mxu0 0
      %3958 = vmatpush1.bf16.msra.mxu0 0
      %3959 = vmatprep.subr.bf16.mxu0 0
      %3960 = vmatpush1.bf16.msra.mxu0 0
      %3961 = vmatprep.subr.bf16.mxu0 0
      %3962 = vmatpush1.bf16.msra.mxu0 %v3940
      %3963 = vmatprep.subr.bf16.mxu0 0
      %3964 = vmatpush1.bf16.msra.mxu0 %v3939
      %3965 = vmatprep.subr.bf16.mxu0 0
      %3966 = vmatpush2.bf16.msra.mxu0 0
      %3967 = vmatprep.subr.bf16.mxu0 0
      %3968 = vmatpush2.bf16.msra.mxu0 0
      %3969 = vmatprep.subr.bf16.mxu0 0
      %3970 = vmatpush2.bf16.msra.mxu0 0
      %3971 = vmatprep.subr.bf16.mxu0 0
      %3972 = vmatpush2.bf16.msra.mxu0 0
      %3973 = vmatprep.subr.bf16.mxu0 0
      %3974 = vmatpush2.bf16.msra.mxu0 0
      %3975 = vmatprep.subr.bf16.mxu0 0
      %3976 = vmatpush2.bf16.msra.mxu0 0
      %3977 = vmatprep.subr.bf16.mxu0 0
      %3978 = vmatpush2.bf16.msra.mxu0 0
      %3979 = vmatprep.subr.bf16.mxu0 0
      %3980 = vmatpush2.bf16.msra.mxu0 0
      %3981 = vmatprep.mubr.bf16.mxu0 0
      %3982 = vmatmul.mubr.bf16.gmra.mxu0 %v3944
      %v3983 = vpop.f32.mrf.mxu0
      %v3984 = vadd.f32 %v3929, %v3983
      %v3985 = vpop.f32.mrf.mxu0
      %v3986 = vpop.f32.mrf.mxu0
      %v3987 = vadd.f32 %v3929, %v3986
      %v3988 = vpop.f32.mrf.mxu0
      %3989 = vmatprep.mubr.bf16.mxu0 0
      %3990 = vmatmul.mubr.bf16.gmra.mxu0 %v3947
      %v3991 = vpop.f32.mrf.mxu0
      %v3992 = vadd.f32 %v3929, %v3991
      %v3993 = vpop.f32.mrf.mxu0
      %v3994 = vpop.f32.mrf.mxu0
      %v3995 = vadd.f32 %v3929, %v3994
      %v3996 = vpop.f32.mrf.mxu0
      %3997 = vdwg.mxu0
      %v3998 = vadd.f32 %v403, %v3984
      %v3999 = vadd.f32 %v404, %v3987
      %v4000 = vadd.f32 %v405, %v3992
      %v4001 = vadd.f32 %v406, %v3995
      %4002 = vst.msk [vmem:[%s400] sm:$0xff] %vm407, %v3998
      %4003 = vst.msk [vmem:[%s400 + $0x8] sm:$0xff] %vm407, %v3999
      %4004 = vst.msk [vmem:[%s400 + $0x10] sm:$0xff] %vm407, %v4000
      %4005 = vst.msk [vmem:[%s400 + $0x18] sm:$0xff] %vm407, %v4001
      %s4006 = smul.u32 2, %s25
      %p4007 = scmp.lt.s32.totalorder %s24, 1
      %s4008 = scalar_select %p4007, %s24, 1
      %p4009 = scmp.lt.s32.totalorder %s4006, 3
      %s4010 = scalar_select %p4009, %s4006, 3
      %s4011 = smul.addr %s4010, 2
      %s4012 = smul.addr %s4008, 8
      %s4013 = sadd.s32 %s4011, %s4012
      %s4014 = smul.addr %s4013, 8
      %s4015 = scalar_lea.vmem %s9, %s4014
      // Predicated region
      $region57: #{basic_layer.4} parent=55 // pred_check
        %p4016 = pneg %p253
      $region58: #{basic_layer.4} parent=55 // pred_check_branch
        %4018 = sbr.rel (%p4016) target = $region60
      $region59: #{basic_layer.4} parent=55 // pred_region
        %s4019 = smul.u32 2, %s25
      $region60: #{basic_layer.4} parent=55 // pred_fallthru
        _
    $region56: #{basic_layer.4} parent=5 // pred_fallthru
      _
    %p4020 = scmp.le.s32.totalorder 2, %s15
    // Predicated region
    $region61: #{basic_layer.4} parent=5 // pred_check
      %p4021 = pneg %p4020
    $region62: #{basic_layer.4} parent=5 // pred_check_branch
      %4023 = sbr.rel (%p4021) target = $region64
    $region63: #{basic_layer.4} parent=5 // pred_region
      %s4024 = ssub.s32 %s15, 2
      // Predicated region
      $region65: #{basic_layer.4} parent=63 // pred_check
        %p4025 = pneg %p259
      $region66: #{basic_layer.4} parent=63 // pred_check_branch
        %4027 = sbr.rel (%p4025) target = $region68
      $region67: #{basic_layer.4} parent=63 // pred_region
        %s4028 = smul.u32 2, %s27
        %p4029 = scmp.lt.s32.totalorder %s26, 1
        %s4030 = scalar_select %p4029, %s26, 1
        %p4031 = scmp.lt.s32.totalorder %s4028, 3
        %s4032 = scalar_select %p4031, %s4028, 3
        %s4033 = smul.addr %s4032, 2
        %s4034 = smul.addr %s4030, 8
        %s4035 = sadd.s32 %s4033, %s4034
        %s4036 = smul.addr %s4035, 8
        %s4037 = scalar_lea.vmem %s9, %s4036
      $region68: #{basic_layer.4} parent=63 // pred_fallthru
        _
    $region64: #{basic_layer.4} parent=5 // pred_fallthru
      _
  $region6: #{basic_layer.4} parent=0 // loop_footer
    %s19 = sadd.s32 1, %s15
  $region7: #{basic_layer.4} parent=0 // loop_footer_branch
    %14 = sbr.rel target = $region3
  $region8: #{basic_layer.4} parent=0 // loop_exit
    _

</llo_original>
